<compile_context>
chip_gen: v7x
topology: tpu7x:2x2x1
jax: 0.10.0
libtpu: 0.0.40
codegen_flags: <defaults>
</compile_context>

<pallas_src>
import functools
import math

import jax
import jax.numpy as jnp
from jax.experimental import pallas as pl
from jax.experimental.pallas import tpu as pltpu


# ----------------------------------------------------------------------------
# tiling helpers
# ----------------------------------------------------------------------------

_TM_CAP = 256
_TN_CAP = 1024
_TK_CAP = 1024
_VMEM_LIMIT = 32 * 1024 * 1024   # <= 1/2 of v7x's 64 MiB physical VMEM


def _pick_tile(dim, cap, mults=(256, 128)):
    """Largest tile <= cap that divides `dim` and is a multiple of one of
    `mults` (tried in order). Falls back to the full dim (always legal)."""
    if dim <= cap:
        return dim
    for mult in mults:
        t = (cap // mult) * mult
        while t >= mult:
            if dim % t == 0:
                return t
            t -= mult
    return dim


def _pick_tn(n):
    """Lane-dense N tile; when possible keep N//tn >= 2 so both v7x
    TensorCores get a parallel block along N."""
    cap = _TN_CAP
    if n >= 256:
        cap = min(cap, max(128, n // 2))
    return _pick_tile(n, cap, (256, 128))


def _weight_spec(block_shape, index_map, n_weight_blocks):
    """Weight-stream BlockSpec. With tiny M the kernels are weight-bandwidth
    bound, so triple-buffer the weight stream when there is actually a stream
    to hide (guarded for older jax versions without pipeline_mode)."""
    if n_weight_blocks >= 4:
        try:
            return pl.BlockSpec(block_shape, index_map,
                                pipeline_mode=pl.Buffered(3))
        except Exception:  # pipeline_mode unsupported -> default double buffer
            pass
    return pl.BlockSpec(block_shape, index_map)


# ----------------------------------------------------------------------------
# Pallas kernels
# ----------------------------------------------------------------------------

def _linear_kernel(x_ref, w_ref, b_ref, *rest, relu, has_res):
    """Tiled matmul with f32 VMEM accumulator; epilogue fuses bias, optional
    ReLU and optional residual add."""
    if has_res:
        res_ref, o_ref, acc_ref = rest
    else:
        o_ref, acc_ref = rest
    k = pl.program_id(2)

    @pl.when(k == 0)
    def _():
        acc_ref[...] = jnp.zeros_like(acc_ref)

    acc_ref[...] += jnp.dot(x_ref[...], w_ref[...],
                            preferred_element_type=jnp.float32)

    @pl.when(k == pl.num_programs(2) - 1)
    def _():
        y = acc_ref[...] + b_ref[...].astype(jnp.float32)
        if relu:
            y = jnp.maximum(y, 0.0)
        if has_res:
            y = y + res_ref[...].astype(jnp.float32)
        o_ref[...] = y.astype(o_ref.dtype)


def _ln_linear_kernel(x_ref, g_ref, bln_ref, w_ref, b_ref, o_ref, acc_ref, *,
                      eps):
    """LayerNorm fused into the matmul prologue: x is streamed as (tm, tl, E)
    tiles (tk = tl*E), per-token LN stats are computed one-pass in f32, the
    normalized bf16 tile feeds the MXU. LN math is VPU/XLU filler under the
    matmul."""
    k = pl.program_id(2)

    @pl.when(k == 0)
    def _():
        acc_ref[...] = jnp.zeros_like(acc_ref)

    x = x_ref[...].astype(jnp.float32)                    # (tm, tl, E)
    mean = jnp.mean(x, axis=-1, keepdims=True)
    var = jnp.mean(x * x, axis=-1, keepdims=True) - mean * mean   # one pass
    inv = jax.lax.rsqrt(var + eps)
    normed = (x - mean) * inv * g_ref[...] + bln_ref[...]          # (tm, tl, E)
    tm, tl, e = normed.shape
    a = normed.reshape(tm, tl * e).astype(jnp.bfloat16)

    acc_ref[...] += jnp.dot(a, w_ref[...], preferred_element_type=jnp.float32)

    @pl.when(k == pl.num_programs(2) - 1)
    def _():
        y = acc_ref[...] + b_ref[...].astype(jnp.float32)
        o_ref[...] = y.astype(o_ref.dtype)


def _attention_ln_kernel(qkv_ref, x_ref, g_ref, b_ref, ffn_ref, n2_ref, *,
                         scale, eps):
    """All-heads attention for one batch element, with residual-1 and
    LayerNorm-2 fused into the epilogue. Emits:
       ffn_ref  : f32 (L, E)   attn_out + x          (residual for W2)
       n2_ref   : bf16 (L, E)  LayerNorm2(ffn_in)    (input to W1)
    """
    q = qkv_ref[0, 0]                         # (H, L, d) bf16
    k = qkv_ref[0, 1]
    v = qkv_ref[0, 2]

    # scores = Q K^T (reference does NOT scale before softmax)
    s = jnp.einsum('hqd,hkd->hqk', q, k, preferred_element_type=jnp.float32)
    s = s - jnp.max(s, axis=-1, keepdims=True)
    p = jnp.exp(s)
    # exact reciprocal (EUP); fold the post-(attn@V) 1/sqrt(d) into it.
    inv = pl.reciprocal(jnp.sum(p, axis=-1, keepdims=True), approx=False) * scale
    p = (p * inv).astype(v.dtype)

    # PV product emitted directly in q-major order; single reshape gives the
    # 'h l d -> l (h d)' merge (no per-head concat / masked stores).
    z = jnp.einsum('hqk,hkd->qhd', p, v, preferred_element_type=jnp.float32)
    L, H, d = z.shape
    attn = z.reshape(L, H * d)                               # (L, E) f32

    # residual 1
    ffn_in = attn + x_ref[0].astype(jnp.float32)             # (L, E) f32
    ffn_ref[0] = ffn_in

    # fused LayerNorm 2 (one-pass stats); bf16 output feeds the FFN matmul.
    mean = jnp.mean(ffn_in, axis=-1, keepdims=True)
    var = jnp.mean(ffn_in * ffn_in, axis=-1, keepdims=True) - mean * mean
    inv_std = jax.lax.rsqrt(var + eps)
    n2_ref[0] = ((ffn_in - mean) * inv_std * g_ref[...]
                 + b_ref[...]).astype(n2_ref.dtype)


# ----------------------------------------------------------------------------
# pallas_call wrappers
# ----------------------------------------------------------------------------

def linear(x, w_t, b, *, relu=False, residual=None, out_dtype=jnp.float32):
    """y = x @ w_t + b [ + relu ] [ + residual ]; bf16 MXU, f32 accumulate."""
    M, K = x.shape
    Kw, N = w_t.shape
    assert Kw == K
    tm = _pick_tile(M, _TM_CAP, (8,))
    tn = _pick_tn(N)
    tk = _pick_tile(K, _TK_CAP, (256, 128))
    grid = (M // tm, N // tn, K // tk)

    in_specs = [pl.BlockSpec((tm, tk), lambda i, j, k: (i, k)),
                _weight_spec((tk, tn), lambda i, j, k: (k, j),
                             (N // tn) * (K // tk)),
                pl.BlockSpec((1, tn), lambda i, j, k: (0, j))]
    args = [x.astype(jnp.bfloat16), w_t.astype(jnp.bfloat16), b.reshape(1, N)]
    if residual is not None:
        in_specs.append(pl.BlockSpec((tm, tn), lambda i, j, k: (i, j)))
        args.append(residual)

    return pl.pallas_call(
        functools.partial(_linear_kernel, relu=relu,
                          has_res=residual is not None),
        out_shape=jax.ShapeDtypeStruct((M, N), out_dtype),
        grid=grid,
        in_specs=in_specs,
        out_specs=pl.BlockSpec((tm, tn), lambda i, j, k: (i, j)),
        scratch_shapes=[pltpu.VMEM((tm, tn), jnp.float32)],
        compiler_params=pltpu.CompilerParams(
            dimension_semantics=("parallel", "parallel", "arbitrary"),
            vmem_limit_bytes=_VMEM_LIMIT),
    )(*args)


def ln_linear(x3d, gamma, beta, w_t, b, *, eps=1e-5, out_dtype=jnp.bfloat16):
    """y = LayerNorm(x3d) flattened to (B, L*E) @ w_t + b, with the LayerNorm
    fused into the matmul prologue (x streamed as (tm, tl, E) tiles)."""
    M, L, E = x3d.shape
    K, N = w_t.shape
    assert K == L * E
    tm = _pick_tile(M, _TM_CAP, (8,))
    tl = _pick_tile(L, max(1, _TK_CAP // E), (8, 1))
    if tl != L and tl % 8 != 0:      # keep the (8,128) block rule satisfied
        tl = L
    tn = _pick_tn(N)
    grid = (M // tm, N // tn, L // tl)

    in_specs = [pl.BlockSpec((tm, tl, E), lambda i, j, k: (i, k, 0)),
                pl.BlockSpec((1, E), lambda i, j, k: (0, 0)),
                pl.BlockSpec((1, E), lambda i, j, k: (0, 0)),
                _weight_spec((tl * E, tn), lambda i, j, k: (k, j),
                             (N // tn) * (L // tl)),
                pl.BlockSpec((1, tn), lambda i, j, k: (0, j))]

    return pl.pallas_call(
        functools.partial(_ln_linear_kernel, eps=eps),
        out_shape=jax.ShapeDtypeStruct((M, N), out_dtype),
        grid=grid,
        in_specs=in_specs,
        out_specs=pl.BlockSpec((tm, tn), lambda i, j, k: (i, j)),
        scratch_shapes=[pltpu.VMEM((tm, tn), jnp.float32)],
        compiler_params=pltpu.CompilerParams(
            dimension_semantics=("parallel", "parallel", "arbitrary"),
            vmem_limit_bytes=_VMEM_LIMIT),
    )(x3d, gamma.reshape(1, E), beta.reshape(1, E), w_t, b.reshape(1, N))


def attention_ln(qkv, x, gamma2, beta2, *, eps=1e-5):
    """Fused multi-head attention + residual-1 + LayerNorm-2.
    qkv: (B, 3, H, L, d) bf16 head-major; x: (B, L, E) f32 residual.
    Returns (ffn_in f32 (B,L,E), normed2 bf16 (B,L,E))."""
    B, three, H, L, d = qkv.shape
    assert three == 3
    E = H * d
    scale = 1.0 / math.sqrt(d)
    return pl.pallas_call(
        functools.partial(_attention_ln_kernel, scale=scale, eps=eps),
        out_shape=(jax.ShapeDtypeStruct((B, L, E), jnp.float32),
                   jax.ShapeDtypeStruct((B, L, E), jnp.bfloat16)),
        grid=(B,),
        in_specs=[pl.BlockSpec((1, 3, H, L, d), lambda b: (b, 0, 0, 0, 0)),
                  pl.BlockSpec((1, L, E), lambda b: (b, 0, 0)),
                  pl.BlockSpec((1, E), lambda b: (0, 0)),
                  pl.BlockSpec((1, E), lambda b: (0, 0))],
        out_specs=(pl.BlockSpec((1, L, E), lambda b: (b, 0, 0)),
                   pl.BlockSpec((1, L, E), lambda b: (b, 0, 0))),
        compiler_params=pltpu.CompilerParams(
            dimension_semantics=("parallel",),
            vmem_limit_bytes=_VMEM_LIMIT),
    )(qkv, x, gamma2.reshape(1, E), beta2.reshape(1, E))


# ----------------------------------------------------------------------------
# parameters (nn.Linear / nn.LayerNorm defaults), kernel-ready layout
# ----------------------------------------------------------------------------

def init_layer_params(key, L, E, H):
    d = E // H

    def lin(k, fan_in, fan_out):
        kw, kb = jax.random.split(k)
        bound = 1.0 / math.sqrt(fan_in)
        W = jax.random.uniform(kw, (fan_out, fan_in), jnp.float32, -bound, bound)
        b = jax.random.uniform(kb, (fan_out,), jnp.float32, -bound, bound)
        return W, b

    k0, k1, k2 = jax.random.split(key, 3)
    Wqkv, bqkv = lin(k0, L * E, 3 * L * E)     # to_qvk
    W1, b1 = lin(k1, L * E, 2 * L * E)         # FFN up
    W2, b2 = lin(k2, 2 * L * E, L * E)         # FFN down

    # Permute QKV output features from the reference layout '(k l d h)' to
    # '(k h l d)' so the linear emits head-major QKV directly (no 5-D einops
    # transpose in the hot path). One-time host-side preprocessing.
    Wqkv_p = Wqkv.reshape(3, L, d, H, L * E).transpose(0, 3, 1, 2, 4)
    Wqkv_p = Wqkv_p.reshape(3 * L * E, L * E)
    bqkv_p = bqkv.reshape(3, L, d, H).transpose(0, 3, 1, 2).reshape(3 * L * E)

    kernel_params = dict(
        Wqkv_T=Wqkv_p.T.astype(jnp.bfloat16), bqkv=bqkv_p,
        W1_T=W1.T.astype(jnp.bfloat16), b1=b1,
        W2_T=W2.T.astype(jnp.bfloat16), b2=b2,
        ln1_g=jnp.ones((E,), jnp.float32), ln1_b=jnp.zeros((E,), jnp.float32),
        ln2_g=jnp.ones((E,), jnp.float32), ln2_b=jnp.zeros((E,), jnp.float32),
    )
    ref_params = dict(Wqkv=Wqkv, bqkv=bqkv, W1=W1, b1=b1, W2=W2, b2=b2,
                      ln1_g=kernel_params["ln1_g"], ln1_b=kernel_params["ln1_b"],
                      ln2_g=kernel_params["ln2_g"], ln2_b=kernel_params["ln2_b"])
    return kernel_params, ref_params


# ----------------------------------------------------------------------------
# forward pass (4 pallas_calls per encoder layer)
# ----------------------------------------------------------------------------

def basic_encoder_forward(x, p, num_heads):
    B, L, E = x.shape
    H = num_heads
    d = E // H

    # LN1 fused into the QKV projection; head-major weight columns make the
    # reshape to (B, 3, H, L, d) a free, contiguous view.
    qkv = ln_linear(x, p["ln1_g"], p["ln1_b"], p["Wqkv_T"], p["bqkv"],
                    out_dtype=jnp.bfloat16).reshape(B, 3, H, L, d)

    # fused self-attention + residual 1 + LayerNorm 2
    ffn_in, normed2 = attention_ln(qkv, x, p["ln2_g"], p["ln2_b"])

    # FFN: W1 + ReLU, then W2 with residual 2 fused into its epilogue.
    h1 = linear(normed2.reshape(B, L * E), p["W1_T"], p["b1"],
                relu=True, out_dtype=jnp.bfloat16)
    out = linear(h1, p["W2_T"], p["b2"],
                 residual=ffn_in.reshape(B, L * E),
                 out_dtype=jnp.float32)
    return out.reshape(B, L, E)


@functools.partial(jax.jit, static_argnames=("num_heads",))
def master_encoder_forward(x, layers, num_heads):
    out = x.astype(jnp.float32)
    for p in layers:
        out = basic_encoder_forward(out, p, num_heads)
    return out


# ----------------------------------------------------------------------------
# pure-JAX reference (mirrors the PyTorch module exactly, f32)
# ----------------------------------------------------------------------------

def _reference_basic_encoder(x, rp, H):
    B, L, E = x.shape
    d = E // H

    def ln(v, g, b, eps=1e-5):
        m = jnp.mean(v, -1, keepdims=True)
        var = jnp.mean((v - m) ** 2, -1, keepdims=True)
        return (v - m) / jnp.sqrt(var + eps) * g + b

    n1 = ln(x, rp["ln1_g"], rp["ln1_b"])
    qkv = n1.reshape(B, -1) @ rp["Wqkv"].T + rp["bqkv"]
    qkv = qkv.reshape(B, 3, L, d, H).transpose(1, 0, 4, 2, 3)   # 'b (k l d h) -> k b h l d'
    Q, K, V = qkv[0], qkv[1], qkv[2]
    s = jnp.einsum('bhid,bhjd->bhij', Q, K)
    a = jax.nn.softmax(s, axis=-1)
    Z = jnp.einsum('bhij,bhjd->bhid', a, V) / jnp.sqrt(jnp.float32(d))
    attn_out = Z.transpose(0, 2, 1, 3).reshape(B, L, E)          # 'b h l d -> b l (h d)'
    ffn_in = attn_out + x
    n2 = ln(ffn_in, rp["ln2_g"], rp["ln2_b"])
    h = jax.nn.relu(n2.reshape(B, -1) @ rp["W1"].T + rp["b1"])
    out = (h @ rp["W2"].T + rp["b2"]).reshape(B, L, E) + ffn_in
    return out


def _reference_master_encoder(x, ref_layers, H):
    out = x.astype(jnp.float32)
    for rp in ref_layers:
        out = _reference_basic_encoder(out, rp, H)
    return out


# ----------------------------------------------------------------------------
# demo
# ----------------------------------------------------------------------------

if __name__ == "__main__":
    # small shapes consistent with the module
    B, L, E, H = 2, 8, 32, 4          # batch, max_seq_length, embedding, heads
    NUM_ENCODERS = 2                  # how_many_basic_encoders

    key = jax.random.PRNGKey(0)
    kx, kp = jax.random.split(key)
    x = jax.random.normal(kx, (B, L, E), dtype=jnp.float32)

    layer_keys = jax.random.split(kp, NUM_ENCODERS)
    kernel_layers, ref_layers = [], []
    for lk in layer_keys:
        kparams, rparams = init_layer_params(lk, L, E, H)
        kernel_layers.append(kparams)
        ref_layers.append(rparams)

    out = master_encoder_forward(x, tuple(kernel_layers), num_heads=H)
    out = jax.block_until_ready(out)

    assert out.shape == (B, L, E) and out.dtype == jnp.float32
    assert bool(jnp.all(jnp.isfinite(out)))

    # correctness vs f32 reference (loose tolerance: bf16 MXU operands).
    ref = _reference_master_encoder(x, ref_layers, H)
    max_err = float(jnp.max(jnp.abs(out - ref)))
    assert max_err < 0.2, f"max abs error {max_err} too large"

    print("KERNEL_OK")
</pallas_src>

<mosaic_0001>
module attributes {stable_mosaic.version = 11 : i64} {
  func.func @_attention_ln_kernel(%arg0: i32, %arg1: memref<1x3x4x8x8xbf16, #tpu.memory_space<vmem>>, %arg2: memref<1x8x32xf32, #tpu.memory_space<vmem>>, %arg3: memref<1x32xf32, #tpu.memory_space<vmem>>, %arg4: memref<1x32xf32, #tpu.memory_space<vmem>>, %arg5: memref<1x8x32xf32, #tpu.memory_space<vmem>>, %arg6: memref<1x8x32xbf16, #tpu.memory_space<vmem>>) attributes {dimension_semantics = [#tpu.dimension_semantics<parallel>], iteration_bounds = array<i64: 2>, scalar_prefetch = 0 : i64, scratch_operands = 0 : i64, tpu.core_type = #tpu.core_type<tc>, window_params = [{transform_indices = @transform_0, window_bounds = array<i64: 1, 3, 4, 8, 8>}, {transform_indices = @transform_1, window_bounds = array<i64: 1, 8, 32>}, {pipeline_mode = #tpu.pipeline_mode<synchronous>, transform_indices = @transform_2, window_bounds = array<i64: 1, 32>}, {pipeline_mode = #tpu.pipeline_mode<synchronous>, transform_indices = @transform_3, window_bounds = array<i64: 1, 32>}, {transform_indices = @transform_4, window_bounds = array<i64: 1, 8, 32>}, {transform_indices = @transform_5, window_bounds = array<i64: 1, 8, 32>}]} {
    %c0 = arith.constant 0 : index
    %c0_0 = arith.constant 0 : index
    %c0_1 = arith.constant 0 : index
    %c0_2 = arith.constant 0 : index
    %c0_3 = arith.constant 0 : index
    %0 = vector.load %arg1[%c0, %c0_0, %c0_1, %c0_2, %c0_3] : memref<1x3x4x8x8xbf16, #tpu.memory_space<vmem>>, vector<1x1x4x8x8xbf16>
    %1 = vector.shape_cast %0 : vector<1x1x4x8x8xbf16> to vector<4x8x8xbf16>
    %c0_4 = arith.constant 0 : index
    %c1 = arith.constant 1 : index
    %c0_5 = arith.constant 0 : index
    %c0_6 = arith.constant 0 : index
    %c0_7 = arith.constant 0 : index
    %2 = vector.load %arg1[%c0_4, %c1, %c0_5, %c0_6, %c0_7] : memref<1x3x4x8x8xbf16, #tpu.memory_space<vmem>>, vector<1x1x4x8x8xbf16>
    %3 = vector.shape_cast %2 : vector<1x1x4x8x8xbf16> to vector<4x8x8xbf16>
    %c0_8 = arith.constant 0 : index
    %c2 = arith.constant 2 : index
    %c0_9 = arith.constant 0 : index
    %c0_10 = arith.constant 0 : index
    %c0_11 = arith.constant 0 : index
    %4 = vector.load %arg1[%c0_8, %c2, %c0_9, %c0_10, %c0_11] : memref<1x3x4x8x8xbf16, #tpu.memory_space<vmem>>, vector<1x1x4x8x8xbf16>
    %5 = vector.shape_cast %4 : vector<1x1x4x8x8xbf16> to vector<4x8x8xbf16>
    "tpu.trace_start"() <{level = 10 : i32, message = "hqd,hkd->hqk"}> : () -> ()
    %cst = arith.constant dense<0.000000e+00> : vector<4x8x8xf32>
    %6 = tpu.matmul %1, %3, %cst {dimension_numbers = #tpu.dot_dimension_numbers<[2], [2], [1], [1], [0, 0, 0, 1, 1, 1], [0], [0]>} : vector<4x8x8xbf16>, vector<4x8x8xbf16>, vector<4x8x8xf32> -> vector<4x8x8xf32>
    "tpu.trace_stop"() : () -> ()
    %cst_12 = arith.constant dense<0xFF800000> : vector<4x8xf32>
    %7 = vector.multi_reduction <maximumf>, %6, %cst_12 [2] : vector<4x8x8xf32> to vector<4x8xf32>
    %8 = vector.shape_cast %7 : vector<4x8xf32> to vector<4x8x1xf32>
    %9 = vector.broadcast %8 : vector<4x8x1xf32> to vector<4x8x8xf32>
    %10 = arith.subf %6, %9 : vector<4x8x8xf32>
    %11 = math.exp %10 : vector<4x8x8xf32>
    %cst_13 = arith.constant dense<0.000000e+00> : vector<4x8xf32>
    %12 = vector.multi_reduction <add>, %11, %cst_13 [2] : vector<4x8x8xf32> to vector<4x8xf32>
    %13 = vector.shape_cast %12 : vector<4x8xf32> to vector<4x8x1xf32>
    %14 = tpu.reciprocal %13 : vector<4x8x1xf32> -> vector<4x8x1xf32>
    %cst_14 = arith.constant 0.353553385 : f32
    %15 = vector.broadcast %cst_14 : f32 to vector<4x8x1xf32>
    %16 = arith.mulf %14, %15 : vector<4x8x1xf32>
    %17 = vector.broadcast %16 : vector<4x8x1xf32> to vector<4x8x8xf32>
    %18 = arith.mulf %11, %17 : vector<4x8x8xf32>
    %19 = arith.truncf %18 : vector<4x8x8xf32> to vector<4x8x8xbf16>
    "tpu.trace_start"() <{level = 10 : i32, message = "hqk,hkd->qhd"}> : () -> ()
    %cst_15 = arith.constant dense<0.000000e+00> : vector<4x8x8xf32>
    %20 = tpu.matmul %5, %19, %cst_15 {dimension_numbers = #tpu.dot_dimension_numbers<[1], [2], [2], [1], [0, 0, 0, 2, 1, 1], [0], [0]>} : vector<4x8x8xbf16>, vector<4x8x8xbf16>, vector<4x8x8xf32> -> vector<4x8x8xf32>
    %21 = tpu.transpose %20, [2, 0, 1] : vector<4x8x8xf32> -> vector<8x4x8xf32>
    "tpu.trace_stop"() : () -> ()
    %22 = vector.shape_cast %21 : vector<8x4x8xf32> to vector<8x32xf32>
    %c0_16 = arith.constant 0 : index
    %c0_17 = arith.constant 0 : index
    %c0_18 = arith.constant 0 : index
    %23 = vector.load %arg2[%c0_16, %c0_17, %c0_18] : memref<1x8x32xf32, #tpu.memory_space<vmem>>, vector<1x8x32xf32>
    %24 = vector.shape_cast %23 : vector<1x8x32xf32> to vector<8x32xf32>
    %25 = arith.addf %22, %24 : vector<8x32xf32>
    %c0_19 = arith.constant 0 : index
    %c0_20 = arith.constant 0 : index
    %c0_21 = arith.constant 0 : index
    %26 = vector.load %arg5[%c0_19, %c0_20, %c0_21] : memref<1x8x32xf32, #tpu.memory_space<vmem>>, vector<1x8x32xf32>
    %27 = vector.shape_cast %26 : vector<1x8x32xf32> to vector<8x32xf32>
    %28 = vector.shape_cast %25 : vector<8x32xf32> to vector<1x8x32xf32>
    tpu.vector_store %arg5[%c0_19, %c0_20, %c0_21], %28 {strides = array<i32>} : memref<1x8x32xf32, #tpu.memory_space<vmem>>, vector<1x8x32xf32>,
    %cst_22 = arith.constant dense<0.000000e+00> : vector<8xf32>
    %29 = vector.multi_reduction <add>, %25, %cst_22 [1] : vector<8x32xf32> to vector<8xf32>
    %30 = vector.shape_cast %29 : vector<8xf32> to vector<8x1xf32>
    %cst_23 = arith.constant 3.200000e+01 : f32
    %31 = vector.broadcast %cst_23 : f32 to vector<8x1xf32>
    %32 = arith.divf %30, %31 : vector<8x1xf32>
    %33 = arith.mulf %25, %25 : vector<8x32xf32>
    %cst_24 = arith.constant dense<0.000000e+00> : vector<8xf32>
    %34 = vector.multi_reduction <add>, %33, %cst_24 [1] : vector<8x32xf32> to vector<8xf32>
    %35 = vector.shape_cast %34 : vector<8xf32> to vector<8x1xf32>
    %cst_25 = arith.constant 3.200000e+01 : f32
    %36 = vector.broadcast %cst_25 : f32 to vector<8x1xf32>
    %37 = arith.divf %35, %36 : vector<8x1xf32>
    %38 = arith.mulf %32, %32 : vector<8x1xf32>
    %39 = arith.subf %37, %38 : vector<8x1xf32>
    %cst_26 = arith.constant 9.99999974E-6 : f32
    %40 = vector.broadcast %cst_26 : f32 to vector<8x1xf32>
    %41 = arith.addf %39, %40 : vector<8x1xf32>
    %42 = math.rsqrt %41 : vector<8x1xf32>
    %43 = vector.broadcast %32 : vector<8x1xf32> to vector<8x32xf32>
    %44 = arith.subf %25, %43 : vector<8x32xf32>
    %45 = vector.broadcast %42 : vector<8x1xf32> to vector<8x32xf32>
    %46 = arith.mulf %44, %45 : vector<8x32xf32>
    %c0_27 = arith.constant 0 : index
    %c0_28 = arith.constant 0 : index
    %47 = vector.load %arg3[%c0_27, %c0_28] : memref<1x32xf32, #tpu.memory_space<vmem>>, vector<1x32xf32>
    %48 = vector.broadcast %47 : vector<1x32xf32> to vector<8x32xf32>
    %49 = arith.mulf %46, %48 : vector<8x32xf32>
    %c0_29 = arith.constant 0 : index
    %c0_30 = arith.constant 0 : index
    %50 = vector.load %arg4[%c0_29, %c0_30] : memref<1x32xf32, #tpu.memory_space<vmem>>, vector<1x32xf32>
    %51 = vector.broadcast %50 : vector<1x32xf32> to vector<8x32xf32>
    %52 = arith.addf %49, %51 : vector<8x32xf32>
    %53 = arith.truncf %52 : vector<8x32xf32> to vector<8x32xbf16>
    %c0_31 = arith.constant 0 : index
    %c0_32 = arith.constant 0 : index
    %c0_33 = arith.constant 0 : index
    %54 = vector.load %arg6[%c0_31, %c0_32, %c0_33] : memref<1x8x32xbf16, #tpu.memory_space<vmem>>, vector<1x8x32xbf16>
    %55 = vector.shape_cast %54 : vector<1x8x32xbf16> to vector<8x32xbf16>
    %56 = vector.shape_cast %53 : vector<8x32xbf16> to vector<1x8x32xbf16>
    tpu.vector_store %arg6[%c0_31, %c0_32, %c0_33], %56 {strides = array<i32>} : memref<1x8x32xbf16, #tpu.memory_space<vmem>>, vector<1x8x32xbf16>,
    return
  }
  func.func @transform_0(%arg0: i32) -> (i32, i32, i32, i32, i32) {
    %c0_i32 = arith.constant 0 : i32
    %c0_i32_0 = arith.constant 0 : i32
    %c0_i32_1 = arith.constant 0 : i32
    %c0_i32_2 = arith.constant 0 : i32
    %c0_i32_3 = arith.constant 0 : i32
    return %arg0, %c0_i32, %c0_i32_0, %c0_i32_1, %c0_i32_2 : i32, i32, i32, i32, i32
  }
  func.func @transform_1(%arg0: i32) -> (i32, i32, i32) {
    %c0_i32 = arith.constant 0 : i32
    %c0_i32_0 = arith.constant 0 : i32
    %c0_i32_1 = arith.constant 0 : i32
    return %arg0, %c0_i32, %c0_i32_0 : i32, i32, i32
  }
  func.func @transform_2(%arg0: i32) -> (i32, i32) {
    %c0_i32 = arith.constant 0 : i32
    %c0_i32_0 = arith.constant 0 : i32
    %c0_i32_1 = arith.constant 0 : i32
    return %c0_i32, %c0_i32_0 : i32, i32
  }
  func.func @transform_3(%arg0: i32) -> (i32, i32) {
    %c0_i32 = arith.constant 0 : i32
    %c0_i32_0 = arith.constant 0 : i32
    %c0_i32_1 = arith.constant 0 : i32
    return %c0_i32, %c0_i32_0 : i32, i32
  }
  func.func @transform_4(%arg0: i32) -> (i32, i32, i32) {
    %c0_i32 = arith.constant 0 : i32
    %c0_i32_0 = arith.constant 0 : i32
    %c0_i32_1 = arith.constant 0 : i32
    return %arg0, %c0_i32, %c0_i32_0 : i32, i32, i32
  }
  func.func @transform_5(%arg0: i32) -> (i32, i32, i32) {
    %c0_i32 = arith.constant 0 : i32
    %c0_i32_0 = arith.constant 0 : i32
    %c0_i32_1 = arith.constant 0 : i32
    return %arg0, %c0_i32, %c0_i32_0 : i32, i32, i32
  }
}

module attributes {stable_mosaic.version = 11 : i64} {
  func.func @_ln_linear_kernel(%arg0: i32, %arg1: i32, %arg2: i32, %arg3: memref<2x8x32xf32, #tpu.memory_space<vmem>>, %arg4: memref<1x32xf32, #tpu.memory_space<vmem>>, %arg5: memref<1x32xf32, #tpu.memory_space<vmem>>, %arg6: memref<256x256xbf16, #tpu.memory_space<vmem>>, %arg7: memref<1x256xf32, #tpu.memory_space<vmem>>, %arg8: memref<2x256xbf16, #tpu.memory_space<vmem>>, %arg9: memref<2x256xf32, #tpu.memory_space<vmem>>) attributes {dimension_semantics = [#tpu.dimension_semantics<parallel>, #tpu.dimension_semantics<parallel>, #tpu.dimension_semantics<arbitrary>], iteration_bounds = array<i64: 1, 3, 1>, scalar_prefetch = 0 : i64, scratch_operands = 1 : i64, tpu.core_type = #tpu.core_type<tc>, window_params = [{transform_indices = @transform_0, window_bounds = array<i64: 2, 8, 32>}, {pipeline_mode = #tpu.pipeline_mode<synchronous>, transform_indices = @transform_1, window_bounds = array<i64: 1, 32>}, {pipeline_mode = #tpu.pipeline_mode<synchronous>, transform_indices = @transform_2, window_bounds = array<i64: 1, 32>}, {transform_indices = @transform_3, window_bounds = array<i64: 256, 256>}, {transform_indices = @transform_4, window_bounds = array<i64: 1, 256>}, {transform_indices = @transform_5, window_bounds = array<i64: 2, 256>}]} {
    %c0_i32 = arith.constant 0 : i32
    %0 = arith.cmpi eq, %arg2, %c0_i32 : i32
    %1 = arith.extui %0 : i1 to i32
    %c0_i32_0 = arith.constant 0 : i32
    %2 = arith.cmpi ne, %1, %c0_i32_0 : i32
    scf.if %2 {
      %cst_20 = arith.constant 0.000000e+00 : f32
      %40 = vector.broadcast %cst_20 : f32 to vector<2x256xf32>
      %c0_21 = arith.constant 0 : index
      %c0_22 = arith.constant 0 : index
      %41 = vector.load %arg9[%c0_21, %c0_22] : memref<2x256xf32, #tpu.memory_space<vmem>>, vector<2x256xf32>
      tpu.vector_store %arg9[%c0_21, %c0_22], %40 {strides = array<i32>} : memref<2x256xf32, #tpu.memory_space<vmem>>, vector<2x256xf32>,
    } else {
    }
    %c0 = arith.constant 0 : index
    %c0_1 = arith.constant 0 : index
    %c0_2 = arith.constant 0 : index
    %3 = vector.load %arg3[%c0, %c0_1, %c0_2] : memref<2x8x32xf32, #tpu.memory_space<vmem>>, vector<2x8x32xf32>
    %cst = arith.constant dense<0.000000e+00> : vector<2x8xf32>
    %4 = vector.multi_reduction <add>, %3, %cst [2] : vector<2x8x32xf32> to vector<2x8xf32>
    %5 = vector.shape_cast %4 : vector<2x8xf32> to vector<2x8x1xf32>
    %cst_3 = arith.constant 3.200000e+01 : f32
    %6 = vector.broadcast %cst_3 : f32 to vector<2x8x1xf32>
    %7 = arith.divf %5, %6 : vector<2x8x1xf32>
    %8 = arith.mulf %3, %3 : vector<2x8x32xf32>
    %cst_4 = arith.constant dense<0.000000e+00> : vector<2x8xf32>
    %9 = vector.multi_reduction <add>, %8, %cst_4 [2] : vector<2x8x32xf32> to vector<2x8xf32>
    %10 = vector.shape_cast %9 : vector<2x8xf32> to vector<2x8x1xf32>
    %cst_5 = arith.constant 3.200000e+01 : f32
    %11 = vector.broadcast %cst_5 : f32 to vector<2x8x1xf32>
    %12 = arith.divf %10, %11 : vector<2x8x1xf32>
    %13 = arith.mulf %7, %7 : vector<2x8x1xf32>
    %14 = arith.subf %12, %13 : vector<2x8x1xf32>
    %cst_6 = arith.constant 9.99999974E-6 : f32
    %15 = vector.broadcast %cst_6 : f32 to vector<2x8x1xf32>
    %16 = arith.addf %14, %15 : vector<2x8x1xf32>
    %17 = math.rsqrt %16 : vector<2x8x1xf32>
    %18 = vector.broadcast %7 : vector<2x8x1xf32> to vector<2x8x32xf32>
    %19 = arith.subf %3, %18 : vector<2x8x32xf32>
    %20 = vector.broadcast %17 : vector<2x8x1xf32> to vector<2x8x32xf32>
    %21 = arith.mulf %19, %20 : vector<2x8x32xf32>
    %c0_7 = arith.constant 0 : index
    %c0_8 = arith.constant 0 : index
    %22 = vector.load %arg4[%c0_7, %c0_8] : memref<1x32xf32, #tpu.memory_space<vmem>>, vector<1x32xf32>
    %23 = vector.shape_cast %22 : vector<1x32xf32> to vector<1x1x32xf32>
    %24 = vector.broadcast %23 : vector<1x1x32xf32> to vector<2x8x32xf32>
    %25 = arith.mulf %21, %24 : vector<2x8x32xf32>
    %c0_9 = arith.constant 0 : index
    %c0_10 = arith.constant 0 : index
    %26 = vector.load %arg5[%c0_9, %c0_10] : memref<1x32xf32, #tpu.memory_space<vmem>>, vector<1x32xf32>
    %27 = vector.shape_cast %26 : vector<1x32xf32> to vector<1x1x32xf32>
    %28 = vector.broadcast %27 : vector<1x1x32xf32> to vector<2x8x32xf32>
    %29 = arith.addf %25, %28 : vector<2x8x32xf32>
    %30 = vector.shape_cast %29 : vector<2x8x32xf32> to vector<2x256xf32>
    %31 = arith.truncf %30 : vector<2x256xf32> to vector<2x256xbf16>
    %c0_11 = arith.constant 0 : index
    %c0_12 = arith.constant 0 : index
    %32 = vector.load %arg9[%c0_11, %c0_12] : memref<2x256xf32, #tpu.memory_space<vmem>>, vector<2x256xf32>
    %c0_13 = arith.constant 0 : index
    %c0_14 = arith.constant 0 : index
    %33 = vector.load %arg6[%c0_13, %c0_14] : memref<256x256xbf16, #tpu.memory_space<vmem>>, vector<256x256xbf16>
    %cst_15 = arith.constant dense<0.000000e+00> : vector<2x256xf32>
    %34 = tpu.matmul %31, %33, %cst_15 {dimension_numbers = #tpu.dot_dimension_numbers<[1], [0], [0], [1], [0, 0, 1, 1], [], []>} : vector<2x256xbf16>, vector<256x256xbf16>, vector<2x256xf32> -> vector<2x256xf32>
    %35 = arith.addf %32, %34 : vector<2x256xf32>
    %c0_16 = arith.constant 0 : index
    %c0_17 = arith.constant 0 : index
    %36 = vector.load %arg9[%c0_16, %c0_17] : memref<2x256xf32, #tpu.memory_space<vmem>>, vector<2x256xf32>
    tpu.vector_store %arg9[%c0_16, %c0_17], %35 {strides = array<i32>} : memref<2x256xf32, #tpu.memory_space<vmem>>, vector<2x256xf32>,
    %c0_i32_18 = arith.constant 0 : i32
    %37 = arith.cmpi eq, %arg2, %c0_i32_18 : i32
    %38 = arith.extui %37 : i1 to i32
    %c0_i32_19 = arith.constant 0 : i32
    %39 = arith.cmpi ne, %38, %c0_i32_19 : i32
    scf.if %39 {
      %c0_20 = arith.constant 0 : index
      %c0_21 = arith.constant 0 : index
      %40 = vector.load %arg9[%c0_20, %c0_21] : memref<2x256xf32, #tpu.memory_space<vmem>>, vector<2x256xf32>
      %c0_22 = arith.constant 0 : index
      %c0_23 = arith.constant 0 : index
      %41 = vector.load %arg7[%c0_22, %c0_23] : memref<1x256xf32, #tpu.memory_space<vmem>>, vector<1x256xf32>
      %42 = vector.broadcast %41 : vector<1x256xf32> to vector<2x256xf32>
      %43 = arith.addf %40, %42 : vector<2x256xf32>
      %44 = arith.truncf %43 : vector<2x256xf32> to vector<2x256xbf16>
      %c0_24 = arith.constant 0 : index
      %c0_25 = arith.constant 0 : index
      %45 = vector.load %arg8[%c0_24, %c0_25] : memref<2x256xbf16, #tpu.memory_space<vmem>>, vector<2x256xbf16>
      tpu.vector_store %arg8[%c0_24, %c0_25], %44 {strides = array<i32>} : memref<2x256xbf16, #tpu.memory_space<vmem>>, vector<2x256xbf16>,
    } else {
    }
    return
  }
  func.func @transform_0(%arg0: i32, %arg1: i32, %arg2: i32) -> (i32, i32, i32) {
    %c0_i32 = arith.constant 0 : i32
    %c0_i32_0 = arith.constant 0 : i32
    return %arg0, %arg2, %c0_i32 : i32, i32, i32
  }
  func.func @transform_1(%arg0: i32, %arg1: i32, %arg2: i32) -> (i32, i32) {
    %c0_i32 = arith.constant 0 : i32
    %c0_i32_0 = arith.constant 0 : i32
    %c0_i32_1 = arith.constant 0 : i32
    return %c0_i32, %c0_i32_0 : i32, i32
  }
  func.func @transform_2(%arg0: i32, %arg1: i32, %arg2: i32) -> (i32, i32) {
    %c0_i32 = arith.constant 0 : i32
    %c0_i32_0 = arith.constant 0 : i32
    %c0_i32_1 = arith.constant 0 : i32
    return %c0_i32, %c0_i32_0 : i32, i32
  }
  func.func @transform_3(%arg0: i32, %arg1: i32, %arg2: i32) -> (i32, i32) {
    %c0_i32 = arith.constant 0 : i32
    return %arg2, %arg1 : i32, i32
  }
  func.func @transform_4(%arg0: i32, %arg1: i32, %arg2: i32) -> (i32, i32) {
    %c0_i32 = arith.constant 0 : i32
    %c0_i32_0 = arith.constant 0 : i32
    return %c0_i32, %arg1 : i32, i32
  }
  func.func @transform_5(%arg0: i32, %arg1: i32, %arg2: i32) -> (i32, i32) {
    %c0_i32 = arith.constant 0 : i32
    return %arg0, %arg1 : i32, i32
  }
}

module attributes {stable_mosaic.version = 11 : i64} {
  func.func @_linear_kernel(%arg0: i32, %arg1: i32, %arg2: i32, %arg3: memref<2x256xbf16, #tpu.memory_space<vmem>>, %arg4: memref<256x256xbf16, #tpu.memory_space<vmem>>, %arg5: memref<1x256xf32, #tpu.memory_space<vmem>>, %arg6: memref<2x256xbf16, #tpu.memory_space<vmem>>, %arg7: memref<2x256xf32, #tpu.memory_space<vmem>>) attributes {dimension_semantics = [#tpu.dimension_semantics<parallel>, #tpu.dimension_semantics<parallel>, #tpu.dimension_semantics<arbitrary>], iteration_bounds = array<i64: 1, 2, 1>, scalar_prefetch = 0 : i64, scratch_operands = 1 : i64, tpu.core_type = #tpu.core_type<tc>, window_params = [{transform_indices = @transform_0, window_bounds = array<i64: 2, 256>}, {transform_indices = @transform_1, window_bounds = array<i64: 256, 256>}, {transform_indices = @transform_2, window_bounds = array<i64: 1, 256>}, {transform_indices = @transform_3, window_bounds = array<i64: 2, 256>}]} {
    %c0_i32 = arith.constant 0 : i32
    %0 = arith.cmpi eq, %arg2, %c0_i32 : i32
    %1 = arith.extui %0 : i1 to i32
    %c0_i32_0 = arith.constant 0 : i32
    %2 = arith.cmpi ne, %1, %c0_i32_0 : i32
    scf.if %2 {
      %cst_10 = arith.constant 0.000000e+00 : f32
      %12 = vector.broadcast %cst_10 : f32 to vector<2x256xf32>
      %c0_11 = arith.constant 0 : index
      %c0_12 = arith.constant 0 : index
      %13 = vector.load %arg7[%c0_11, %c0_12] : memref<2x256xf32, #tpu.memory_space<vmem>>, vector<2x256xf32>
      tpu.vector_store %arg7[%c0_11, %c0_12], %12 {strides = array<i32>} : memref<2x256xf32, #tpu.memory_space<vmem>>, vector<2x256xf32>,
    } else {
    }
    %c0 = arith.constant 0 : index
    %c0_1 = arith.constant 0 : index
    %3 = vector.load %arg7[%c0, %c0_1] : memref<2x256xf32, #tpu.memory_space<vmem>>, vector<2x256xf32>
    %c0_2 = arith.constant 0 : index
    %c0_3 = arith.constant 0 : index
    %4 = vector.load %arg3[%c0_2, %c0_3] : memref<2x256xbf16, #tpu.memory_space<vmem>>, vector<2x256xbf16>
    %c0_4 = arith.constant 0 : index
    %c0_5 = arith.constant 0 : index
    %5 = vector.load %arg4[%c0_4, %c0_5] : memref<256x256xbf16, #tpu.memory_space<vmem>>, vector<256x256xbf16>
    %cst = arith.constant dense<0.000000e+00> : vector<2x256xf32>
    %6 = tpu.matmul %4, %5, %cst {dimension_numbers = #tpu.dot_dimension_numbers<[1], [0], [0], [1], [0, 0, 1, 1], [], []>} : vector<2x256xbf16>, vector<256x256xbf16>, vector<2x256xf32> -> vector<2x256xf32>
    %7 = arith.addf %3, %6 : vector<2x256xf32>
    %c0_6 = arith.constant 0 : index
    %c0_7 = arith.constant 0 : index
    %8 = vector.load %arg7[%c0_6, %c0_7] : memref<2x256xf32, #tpu.memory_space<vmem>>, vector<2x256xf32>
    tpu.vector_store %arg7[%c0_6, %c0_7], %7 {strides = array<i32>} : memref<2x256xf32, #tpu.memory_space<vmem>>, vector<2x256xf32>,
    %c0_i32_8 = arith.constant 0 : i32
    %9 = arith.cmpi eq, %arg2, %c0_i32_8 : i32
    %10 = arith.extui %9 : i1 to i32
    %c0_i32_9 = arith.constant 0 : i32
    %11 = arith.cmpi ne, %10, %c0_i32_9 : i32
    scf.if %11 {
      %c0_10 = arith.constant 0 : index
      %c0_11 = arith.constant 0 : index
      %12 = vector.load %arg7[%c0_10, %c0_11] : memref<2x256xf32, #tpu.memory_space<vmem>>, vector<2x256xf32>
      %c0_12 = arith.constant 0 : index
      %c0_13 = arith.constant 0 : index
      %13 = vector.load %arg5[%c0_12, %c0_13] : memref<1x256xf32, #tpu.memory_space<vmem>>, vector<1x256xf32>
      %14 = vector.broadcast %13 : vector<1x256xf32> to vector<2x256xf32>
      %15 = arith.addf %12, %14 : vector<2x256xf32>
      %cst_14 = arith.constant 0.000000e+00 : f32
      %16 = vector.broadcast %cst_14 : f32 to vector<2x256xf32>
      %17 = arith.maximumf %15, %16 : vector<2x256xf32>
      %18 = arith.truncf %17 : vector<2x256xf32> to vector<2x256xbf16>
      %c0_15 = arith.constant 0 : index
      %c0_16 = arith.constant 0 : index
      %19 = vector.load %arg6[%c0_15, %c0_16] : memref<2x256xbf16, #tpu.memory_space<vmem>>, vector<2x256xbf16>
      tpu.vector_store %arg6[%c0_15, %c0_16], %18 {strides = array<i32>} : memref<2x256xbf16, #tpu.memory_space<vmem>>, vector<2x256xbf16>,
    } else {
    }
    return
  }
  func.func @transform_0(%arg0: i32, %arg1: i32, %arg2: i32) -> (i32, i32) {
    %c0_i32 = arith.constant 0 : i32
    return %arg0, %arg2 : i32, i32
  }
  func.func @transform_1(%arg0: i32, %arg1: i32, %arg2: i32) -> (i32, i32) {
    %c0_i32 = arith.constant 0 : i32
    return %arg2, %arg1 : i32, i32
  }
  func.func @transform_2(%arg0: i32, %arg1: i32, %arg2: i32) -> (i32, i32) {
    %c0_i32 = arith.constant 0 : i32
    %c0_i32_0 = arith.constant 0 : i32
    return %c0_i32, %arg1 : i32, i32
  }
  func.func @transform_3(%arg0: i32, %arg1: i32, %arg2: i32) -> (i32, i32) {
    %c0_i32 = arith.constant 0 : i32
    return %arg0, %arg1 : i32, i32
  }
}

module attributes {stable_mosaic.version = 11 : i64} {
  func.func @_linear_kernel(%arg0: i32, %arg1: i32, %arg2: i32, %arg3: memref<2x512xbf16, #tpu.memory_space<vmem>>, %arg4: memref<512x128xbf16, #tpu.memory_space<vmem>>, %arg5: memref<1x128xf32, #tpu.memory_space<vmem>>, %arg6: memref<2x128xf32, #tpu.memory_space<vmem>>, %arg7: memref<2x128xf32, #tpu.memory_space<vmem>>, %arg8: memref<2x128xf32, #tpu.memory_space<vmem>>) attributes {dimension_semantics = [#tpu.dimension_semantics<parallel>, #tpu.dimension_semantics<parallel>, #tpu.dimension_semantics<arbitrary>], iteration_bounds = array<i64: 1, 2, 1>, scalar_prefetch = 0 : i64, scratch_operands = 1 : i64, tpu.core_type = #tpu.core_type<tc>, window_params = [{transform_indices = @transform_0, window_bounds = array<i64: 2, 512>}, {transform_indices = @transform_1, window_bounds = array<i64: 512, 128>}, {transform_indices = @transform_2, window_bounds = array<i64: 1, 128>}, {transform_indices = @transform_3, window_bounds = array<i64: 2, 128>}, {transform_indices = @transform_4, window_bounds = array<i64: 2, 128>}]} {
    %c0_i32 = arith.constant 0 : i32
    %0 = arith.cmpi eq, %arg2, %c0_i32 : i32
    %1 = arith.extui %0 : i1 to i32
    %c0_i32_0 = arith.constant 0 : i32
    %2 = arith.cmpi ne, %1, %c0_i32_0 : i32
    scf.if %2 {
      %cst_10 = arith.constant 0.000000e+00 : f32
      %12 = vector.broadcast %cst_10 : f32 to vector<2x128xf32>
      %c0_11 = arith.constant 0 : index
      %c0_12 = arith.constant 0 : index
      %13 = vector.load %arg8[%c0_11, %c0_12] : memref<2x128xf32, #tpu.memory_space<vmem>>, vector<2x128xf32>
      tpu.vector_store %arg8[%c0_11, %c0_12], %12 {strides = array<i32>} : memref<2x128xf32, #tpu.memory_space<vmem>>, vector<2x128xf32>,
    } else {
    }
    %c0 = arith.constant 0 : index
    %c0_1 = arith.constant 0 : index
    %3 = vector.load %arg8[%c0, %c0_1] : memref<2x128xf32, #tpu.memory_space<vmem>>, vector<2x128xf32>
    %c0_2 = arith.constant 0 : index
    %c0_3 = arith.constant 0 : index
    %4 = vector.load %arg3[%c0_2, %c0_3] : memref<2x512xbf16, #tpu.memory_space<vmem>>, vector<2x512xbf16>
    %c0_4 = arith.constant 0 : index
    %c0_5 = arith.constant 0 : index
    %5 = vector.load %arg4[%c0_4, %c0_5] : memref<512x128xbf16, #tpu.memory_space<vmem>>, vector<512x128xbf16>
    %cst = arith.constant dense<0.000000e+00> : vector<2x128xf32>
    %6 = tpu.matmul %4, %5, %cst {dimension_numbers = #tpu.dot_dimension_numbers<[1], [0], [0], [1], [0, 0, 1, 1], [], []>} : vector<2x512xbf16>, vector<512x128xbf16>, vector<2x128xf32> -> vector<2x128xf32>
    %7 = arith.addf %3, %6 : vector<2x128xf32>
    %c0_6 = arith.constant 0 : index
    %c0_7 = arith.constant 0 : index
    %8 = vector.load %arg8[%c0_6, %c0_7] : memref<2x128xf32, #tpu.memory_space<vmem>>, vector<2x128xf32>
    tpu.vector_store %arg8[%c0_6, %c0_7], %7 {strides = array<i32>} : memref<2x128xf32, #tpu.memory_space<vmem>>, vector<2x128xf32>,
    %c0_i32_8 = arith.constant 0 : i32
    %9 = arith.cmpi eq, %arg2, %c0_i32_8 : i32
    %10 = arith.extui %9 : i1 to i32
    %c0_i32_9 = arith.constant 0 : i32
    %11 = arith.cmpi ne, %10, %c0_i32_9 : i32
    scf.if %11 {
      %c0_10 = arith.constant 0 : index
      %c0_11 = arith.constant 0 : index
      %12 = vector.load %arg8[%c0_10, %c0_11] : memref<2x128xf32, #tpu.memory_space<vmem>>, vector<2x128xf32>
      %c0_12 = arith.constant 0 : index
      %c0_13 = arith.constant 0 : index
      %13 = vector.load %arg5[%c0_12, %c0_13] : memref<1x128xf32, #tpu.memory_space<vmem>>, vector<1x128xf32>
      %14 = vector.broadcast %13 : vector<1x128xf32> to vector<2x128xf32>
      %15 = arith.addf %12, %14 : vector<2x128xf32>
      %c0_14 = arith.constant 0 : index
      %c0_15 = arith.constant 0 : index
      %16 = vector.load %arg6[%c0_14, %c0_15] : memref<2x128xf32, #tpu.memory_space<vmem>>, vector<2x128xf32>
      %17 = arith.addf %15, %16 : vector<2x128xf32>
      %c0_16 = arith.constant 0 : index
      %c0_17 = arith.constant 0 : index
      %18 = vector.load %arg7[%c0_16, %c0_17] : memref<2x128xf32, #tpu.memory_space<vmem>>, vector<2x128xf32>
      tpu.vector_store %arg7[%c0_16, %c0_17], %17 {strides = array<i32>} : memref<2x128xf32, #tpu.memory_space<vmem>>, vector<2x128xf32>,
    } else {
    }
    return
  }
  func.func @transform_0(%arg0: i32, %arg1: i32, %arg2: i32) -> (i32, i32) {
    %c0_i32 = arith.constant 0 : i32
    return %arg0, %arg2 : i32, i32
  }
  func.func @transform_1(%arg0: i32, %arg1: i32, %arg2: i32) -> (i32, i32) {
    %c0_i32 = arith.constant 0 : i32
    return %arg2, %arg1 : i32, i32
  }
  func.func @transform_2(%arg0: i32, %arg1: i32, %arg2: i32) -> (i32, i32) {
    %c0_i32 = arith.constant 0 : i32
    %c0_i32_0 = arith.constant 0 : i32
    return %c0_i32, %arg1 : i32, i32
  }
  func.func @transform_3(%arg0: i32, %arg1: i32, %arg2: i32) -> (i32, i32) {
    %c0_i32 = arith.constant 0 : i32
    return %arg0, %arg1 : i32, i32
  }
  func.func @transform_4(%arg0: i32, %arg1: i32, %arg2: i32) -> (i32, i32) {
    %c0_i32 = arith.constant 0 : i32
    return %arg0, %arg1 : i32, i32
  }
}

module attributes {stable_mosaic.version = 11 : i64} {
  func.func @_ln_linear_kernel(%arg0: i32, %arg1: i32, %arg2: i32, %arg3: memref<2x8x32xf32, #tpu.memory_space<vmem>>, %arg4: memref<1x32xf32, #tpu.memory_space<vmem>>, %arg5: memref<1x32xf32, #tpu.memory_space<vmem>>, %arg6: memref<256x256xbf16, #tpu.memory_space<vmem>>, %arg7: memref<1x256xf32, #tpu.memory_space<vmem>>, %arg8: memref<2x256xbf16, #tpu.memory_space<vmem>>, %arg9: memref<2x256xf32, #tpu.memory_space<vmem>>) attributes {dimension_semantics = [#tpu.dimension_semantics<parallel>, #tpu.dimension_semantics<parallel>, #tpu.dimension_semantics<arbitrary>], iteration_bounds = array<i64: 1, 3, 1>, scalar_prefetch = 0 : i64, scratch_operands = 1 : i64, tpu.core_type = #tpu.core_type<tc>, window_params = [{transform_indices = @transform_0, window_bounds = array<i64: 2, 8, 32>}, {pipeline_mode = #tpu.pipeline_mode<synchronous>, transform_indices = @transform_1, window_bounds = array<i64: 1, 32>}, {pipeline_mode = #tpu.pipeline_mode<synchronous>, transform_indices = @transform_2, window_bounds = array<i64: 1, 32>}, {transform_indices = @transform_3, window_bounds = array<i64: 256, 256>}, {transform_indices = @transform_4, window_bounds = array<i64: 1, 256>}, {transform_indices = @transform_5, window_bounds = array<i64: 2, 256>}]} {
    %c0_i32 = arith.constant 0 : i32
    %0 = arith.cmpi eq, %arg2, %c0_i32 : i32
    %1 = arith.extui %0 : i1 to i32
    %c0_i32_0 = arith.constant 0 : i32
    %2 = arith.cmpi ne, %1, %c0_i32_0 : i32
    scf.if %2 {
      %cst_20 = arith.constant 0.000000e+00 : f32
      %40 = vector.broadcast %cst_20 : f32 to vector<2x256xf32>
      %c0_21 = arith.constant 0 : index
      %c0_22 = arith.constant 0 : index
      %41 = vector.load %arg9[%c0_21, %c0_22] : memref<2x256xf32, #tpu.memory_space<vmem>>, vector<2x256xf32>
      tpu.vector_store %arg9[%c0_21, %c0_22], %40 {strides = array<i32>} : memref<2x256xf32, #tpu.memory_space<vmem>>, vector<2x256xf32>,
    } else {
    }
    %c0 = arith.constant 0 : index
    %c0_1 = arith.constant 0 : index
    %c0_2 = arith.constant 0 : index
    %3 = vector.load %arg3[%c0, %c0_1, %c0_2] : memref<2x8x32xf32, #tpu.memory_space<vmem>>, vector<2x8x32xf32>
    %cst = arith.constant dense<0.000000e+00> : vector<2x8xf32>
    %4 = vector.multi_reduction <add>, %3, %cst [2] : vector<2x8x32xf32> to vector<2x8xf32>
    %5 = vector.shape_cast %4 : vector<2x8xf32> to vector<2x8x1xf32>
    %cst_3 = arith.constant 3.200000e+01 : f32
    %6 = vector.broadcast %cst_3 : f32 to vector<2x8x1xf32>
    %7 = arith.divf %5, %6 : vector<2x8x1xf32>
    %8 = arith.mulf %3, %3 : vector<2x8x32xf32>
    %cst_4 = arith.constant dense<0.000000e+00> : vector<2x8xf32>
    %9 = vector.multi_reduction <add>, %8, %cst_4 [2] : vector<2x8x32xf32> to vector<2x8xf32>
    %10 = vector.shape_cast %9 : vector<2x8xf32> to vector<2x8x1xf32>
    %cst_5 = arith.constant 3.200000e+01 : f32
    %11 = vector.broadcast %cst_5 : f32 to vector<2x8x1xf32>
    %12 = arith.divf %10, %11 : vector<2x8x1xf32>
    %13 = arith.mulf %7, %7 : vector<2x8x1xf32>
    %14 = arith.subf %12, %13 : vector<2x8x1xf32>
    %cst_6 = arith.constant 9.99999974E-6 : f32
    %15 = vector.broadcast %cst_6 : f32 to vector<2x8x1xf32>
    %16 = arith.addf %14, %15 : vector<2x8x1xf32>
    %17 = math.rsqrt %16 : vector<2x8x1xf32>
    %18 = vector.broadcast %7 : vector<2x8x1xf32> to vector<2x8x32xf32>
    %19 = arith.subf %3, %18 : vector<2x8x32xf32>
    %20 = vector.broadcast %17 : vector<2x8x1xf32> to vector<2x8x32xf32>
    %21 = arith.mulf %19, %20 : vector<2x8x32xf32>
    %c0_7 = arith.constant 0 : index
    %c0_8 = arith.constant 0 : index
    %22 = vector.load %arg4[%c0_7, %c0_8] : memref<1x32xf32, #tpu.memory_space<vmem>>, vector<1x32xf32>
    %23 = vector.shape_cast %22 : vector<1x32xf32> to vector<1x1x32xf32>
    %24 = vector.broadcast %23 : vector<1x1x32xf32> to vector<2x8x32xf32>
    %25 = arith.mulf %21, %24 : vector<2x8x32xf32>
    %c0_9 = arith.constant 0 : index
    %c0_10 = arith.constant 0 : index
    %26 = vector.load %arg5[%c0_9, %c0_10] : memref<1x32xf32, #tpu.memory_space<vmem>>, vector<1x32xf32>
    %27 = vector.shape_cast %26 : vector<1x32xf32> to vector<1x1x32xf32>
    %28 = vector.broadcast %27 : vector<1x1x32xf32> to vector<2x8x32xf32>
    %29 = arith.addf %25, %28 : vector<2x8x32xf32>
    %30 = vector.shape_cast %29 : vector<2x8x32xf32> to vector<2x256xf32>
    %31 = arith.truncf %30 : vector<2x256xf32> to vector<2x256xbf16>
    %c0_11 = arith.constant 0 : index
    %c0_12 = arith.constant 0 : index
    %32 = vector.load %arg9[%c0_11, %c0_12] : memref<2x256xf32, #tpu.memory_space<vmem>>, vector<2x256xf32>
    %c0_13 = arith.constant 0 : index
    %c0_14 = arith.constant 0 : index
    %33 = vector.load %arg6[%c0_13, %c0_14] : memref<256x256xbf16, #tpu.memory_space<vmem>>, vector<256x256xbf16>
    %cst_15 = arith.constant dense<0.000000e+00> : vector<2x256xf32>
    %34 = tpu.matmul %31, %33, %cst_15 {dimension_numbers = #tpu.dot_dimension_numbers<[1], [0], [0], [1], [0, 0, 1, 1], [], []>} : vector<2x256xbf16>, vector<256x256xbf16>, vector<2x256xf32> -> vector<2x256xf32>
    %35 = arith.addf %32, %34 : vector<2x256xf32>
    %c0_16 = arith.constant 0 : index
    %c0_17 = arith.constant 0 : index
    %36 = vector.load %arg9[%c0_16, %c0_17] : memref<2x256xf32, #tpu.memory_space<vmem>>, vector<2x256xf32>
    tpu.vector_store %arg9[%c0_16, %c0_17], %35 {strides = array<i32>} : memref<2x256xf32, #tpu.memory_space<vmem>>, vector<2x256xf32>,
    %c0_i32_18 = arith.constant 0 : i32
    %37 = arith.cmpi eq, %arg2, %c0_i32_18 : i32
    %38 = arith.extui %37 : i1 to i32
    %c0_i32_19 = arith.constant 0 : i32
    %39 = arith.cmpi ne, %38, %c0_i32_19 : i32
    scf.if %39 {
      %c0_20 = arith.constant 0 : index
      %c0_21 = arith.constant 0 : index
      %40 = vector.load %arg9[%c0_20, %c0_21] : memref<2x256xf32, #tpu.memory_space<vmem>>, vector<2x256xf32>
      %c0_22 = arith.constant 0 : index
      %c0_23 = arith.constant 0 : index
      %41 = vector.load %arg7[%c0_22, %c0_23] : memref<1x256xf32, #tpu.memory_space<vmem>>, vector<1x256xf32>
      %42 = vector.broadcast %41 : vector<1x256xf32> to vector<2x256xf32>
      %43 = arith.addf %40, %42 : vector<2x256xf32>
      %44 = arith.truncf %43 : vector<2x256xf32> to vector<2x256xbf16>
      %c0_24 = arith.constant 0 : index
      %c0_25 = arith.constant 0 : index
      %45 = vector.load %arg8[%c0_24, %c0_25] : memref<2x256xbf16, #tpu.memory_space<vmem>>, vector<2x256xbf16>
      tpu.vector_store %arg8[%c0_24, %c0_25], %44 {strides = array<i32>} : memref<2x256xbf16, #tpu.memory_space<vmem>>, vector<2x256xbf16>,
    } else {
    }
    return
  }
  func.func @transform_0(%arg0: i32, %arg1: i32, %arg2: i32) -> (i32, i32, i32) {
    %c0_i32 = arith.constant 0 : i32
    %c0_i32_0 = arith.constant 0 : i32
    return %arg0, %arg2, %c0_i32 : i32, i32, i32
  }
  func.func @transform_1(%arg0: i32, %arg1: i32, %arg2: i32) -> (i32, i32) {
    %c0_i32 = arith.constant 0 : i32
    %c0_i32_0 = arith.constant 0 : i32
    %c0_i32_1 = arith.constant 0 : i32
    return %c0_i32, %c0_i32_0 : i32, i32
  }
  func.func @transform_2(%arg0: i32, %arg1: i32, %arg2: i32) -> (i32, i32) {
    %c0_i32 = arith.constant 0 : i32
    %c0_i32_0 = arith.constant 0 : i32
    %c0_i32_1 = arith.constant 0 : i32
    return %c0_i32, %c0_i32_0 : i32, i32
  }
  func.func @transform_3(%arg0: i32, %arg1: i32, %arg2: i32) -> (i32, i32) {
    %c0_i32 = arith.constant 0 : i32
    return %arg2, %arg1 : i32, i32
  }
  func.func @transform_4(%arg0: i32, %arg1: i32, %arg2: i32) -> (i32, i32) {
    %c0_i32 = arith.constant 0 : i32
    %c0_i32_0 = arith.constant 0 : i32
    return %c0_i32, %arg1 : i32, i32
  }
  func.func @transform_5(%arg0: i32, %arg1: i32, %arg2: i32) -> (i32, i32) {
    %c0_i32 = arith.constant 0 : i32
    return %arg0, %arg1 : i32, i32
  }
}

</mosaic_0001>

<llo_original>
// kernel: master_encoder_forward.8
$region0: #{master_encoder_forward.8}
  #allocation0 [shape = 'u32[]', space=smem, size = 0x4, offset = 0x4, fixed_abs, tag = 'smem constant byte address 0x4 - core index']
  #allocation1 [shape = 'u32[144,128]{1,0:T(1,128)}', space=vmem, size = 0x12000, scoped, tag = 'internal scratch']
  #allocation2 [shape = 'f32[2,256]{1,0:T(2,128)}', space=vmem, size = 0x800, scoped, tag = 'scratch operand']
  %s0 = inlined_call_operand.vmem [shape: f32[2,8,32], index: 0, kind: input, shape index: {}]
  %s1 = inlined_call_operand.vmem [shape: f32[1,32], index: 1, kind: input, shape index: {}]
  %s2 = inlined_call_operand.vmem [shape: f32[1,32], index: 2, kind: input, shape index: {}]
  %s3 = inlined_call_operand.hbm [shape: bf16[256,768], index: 3, kind: input, shape index: {}]
  %s4 = inlined_call_operand.vmem [shape: f32[1,768], index: 4, kind: input, shape index: {}]
  %s5 = inlined_call_operand.vmem [shape: bf16[2,768], index: 5, kind: output, shape index: {}]
  %s6 = sld [smem:[#allocation0]]
  $region65: #{master_encoder_forward.8} parent=0
    _
  %s8 = ssub.s32 1, %s6
  %s9 = scalar_select 0, %s8, %s6
  $region1: #{master_encoder_forward.8} parent=0
    #allocation3 [shape = 'u8[262144]{0}', space=vmem, size = 0x40000, scoped, tag = 'input window, operand 3']
    #allocation4 [shape = 's32[2]{0}', space=sflag, size = 0x8, scoped, tag = 'scoped memory for master_encoder_forward.8']
    %10 = vsyncpa [#allocation4], 0
    %s11 = scalar_lea.sflag [#allocation4], 1
    %12 = vsyncpa %s11, 0
    loop: start=0, step=1, limit=5
    $region2: #{master_encoder_forward.8} parent=1 // loop_pre_header
      _
    $region3: #{master_encoder_forward.8} parent=1 // loop_header
      %s14 = sphi 0, %s18
      %p15 = scmp.ge.s32.totalorder %s14, 5
      %s21 = sphi 0, %s40
      %s22 = sphi 0, %s36
      %s23 = sphi 0, %s32
      %s24 = sphi 0, %s21
      %s25 = sphi 0, %s22
      %s26 = sphi 0, %s23
      %s27 = sphi 0, %s24
      %s28 = sphi 0, %s25
      %s29 = sphi 0, %s26
      %s45 = sphi 0, %s47
      %s48 = sphi 0, %s45
      %s49 = sphi 0, %s48
      %s65 = sphi 0, %s49
      %s69 = sphi 0, %s69
      %s71 = sphi 0, %s69
      %s72 = sphi 0, %s71
      %s86 = sphi 0, %s72
      %s90 = sphi 0, %s90
      %s92 = sphi 0, %s90
      %s93 = sphi 0, %s92
      %s107 = sphi 0, %s93
      %s115 = sphi 0, %s117
      %s118 = sphi 0, %s115
      %s119 = sphi 0, %s118
      %s135 = sphi 0, %s119
      %s141 = sphi 0, %s143
      %s144 = sphi 0, %s141
      %s145 = sphi 0, %s144
      %s161 = sphi 0, %s145
      %s169 = sphi 0, %s171
      %s172 = sphi 0, %s169
      %s173 = sphi 0, %s172
      %s189 = sphi 0, %s173
    $region4: #{master_encoder_forward.8} parent=1 // loop_header_branch
      %17 = sbr.rel (%p15) target = $region8
    $region5: #{master_encoder_forward.8} parent=1 // loop_body
      %s19 = ssub.s32 %s14, 1
      %s20 = ssub.s32 %s14, 2
      %s30 = sadd.s32 1, %s23
      %p31 = scmp.ge.s32.totalorder %s30, 1
      %s32 = scalar_select %p31, 0, %s30
      %s33 = sadd.s32 1, %s22
      %s34 = scalar_select %p31, %s33, %s22
      %p35 = scmp.ge.s32.totalorder %s34, 3
      %s36 = scalar_select %p35, 0, %s34
      %s37 = sadd.s32 1, %s21
      %s38 = scalar_select %p35, %s37, %s21
      %p39 = scmp.ge.s32.totalorder %s38, 1
      %s40 = scalar_select %p39, 0, %s38
      %s41 = ssub.s32 %s21, %s40
      %s42 = ssub.s32 %s23, %s32
      %s43 = sor.u32 %s41, %s42
      %p44 = scmp.eq.s32.totalorder %s43, 0
      %s46 = sadd.s32 %s45, 1
      %s47 = scalar_select %p44, %s45, %s46
      %p50 = pneg %p44
      %p51 = scmp.eq.s32.totalorder %s14, 2
      %p52 = por %p50, %p51
      %p53 = scmp.ne.s32.totalorder %s45, %s48
      %p54 = scmp.eq.s32.totalorder %s14, 0
      %p55 = por %p53, %p54
      %p56 = scmp.ne.s32.totalorder %s45, %s48
      %p57 = scmp.eq.s32.totalorder %s19, 2
      %p58 = por %p56, %p57
      %p59 = scmp.ne.s32.totalorder %s48, %s49
      %p60 = scmp.eq.s32.totalorder %s19, 0
      %p61 = por %p59, %p60
      %p62 = scmp.ne.s32.totalorder %s48, %s49
      %p63 = scmp.eq.s32.totalorder %s20, 2
      %p64 = por %p62, %p63
      %p66 = scmp.ne.s32.totalorder %s49, %s65
      %p67 = scmp.eq.s32.totalorder %s20, 0
      %p68 = por %p66, %p67
      %s70 = sadd.s32 %s69, 1
      %p73 = scmp.eq.s32.totalorder %s14, 2
      %p74 = scmp.ne.s32.totalorder %s69, %s71
      %p75 = scmp.eq.s32.totalorder %s14, 0
      %p76 = por %p74, %p75
      %p77 = scmp.ne.s32.totalorder %s69, %s71
      %p78 = scmp.eq.s32.totalorder %s19, 2
      %p79 = por %p77, %p78
      %p80 = scmp.ne.s32.totalorder %s71, %s72
      %p81 = scmp.eq.s32.totalorder %s19, 0
      %p82 = por %p80, %p81
      %p83 = scmp.ne.s32.totalorder %s71, %s72
      %p84 = scmp.eq.s32.totalorder %s20, 2
      %p85 = por %p83, %p84
      %p87 = scmp.ne.s32.totalorder %s72, %s86
      %p88 = scmp.eq.s32.totalorder %s20, 0
      %p89 = por %p87, %p88
      %s91 = sadd.s32 %s90, 1
      %p94 = scmp.eq.s32.totalorder %s14, 2
      %p95 = scmp.ne.s32.totalorder %s90, %s92
      %p96 = scmp.eq.s32.totalorder %s14, 0
      %p97 = por %p95, %p96
      %p98 = scmp.ne.s32.totalorder %s90, %s92
      %p99 = scmp.eq.s32.totalorder %s19, 2
      %p100 = por %p98, %p99
      %p101 = scmp.ne.s32.totalorder %s92, %s93
      %p102 = scmp.eq.s32.totalorder %s19, 0
      %p103 = por %p101, %p102
      %p104 = scmp.ne.s32.totalorder %s92, %s93
      %p105 = scmp.eq.s32.totalorder %s20, 2
      %p106 = por %p104, %p105
      %p108 = scmp.ne.s32.totalorder %s93, %s107
      %p109 = scmp.eq.s32.totalorder %s20, 0
      %p110 = por %p108, %p109
      %s111 = ssub.s32 %s23, %s32
      %s112 = ssub.s32 %s22, %s36
      %s113 = sor.u32 %s111, %s112
      %p114 = scmp.eq.s32.totalorder %s113, 0
      %s116 = sadd.s32 %s115, 1
      %s117 = scalar_select %p114, %s115, %s116
      %p120 = pneg %p114
      %p121 = scmp.eq.s32.totalorder %s14, 2
      %p122 = por %p120, %p121
      %p123 = scmp.ne.s32.totalorder %s115, %s118
      %p124 = scmp.eq.s32.totalorder %s14, 0
      %p125 = por %p123, %p124
      %p126 = scmp.ne.s32.totalorder %s115, %s118
      %p127 = scmp.eq.s32.totalorder %s19, 2
      %p128 = por %p126, %p127
      %p129 = scmp.ne.s32.totalorder %s118, %s119
      %p130 = scmp.eq.s32.totalorder %s19, 0
      %p131 = por %p129, %p130
      %p132 = scmp.ne.s32.totalorder %s118, %s119
      %p133 = scmp.eq.s32.totalorder %s20, 2
      %p134 = por %p132, %p133
      %p136 = scmp.ne.s32.totalorder %s119, %s135
      %p137 = scmp.eq.s32.totalorder %s20, 0
      %p138 = por %p136, %p137
      %s139 = ssub.s32 %s22, %s36
      %p140 = scmp.eq.s32.totalorder %s139, 0
      %s142 = sadd.s32 %s141, 1
      %s143 = scalar_select %p140, %s141, %s142
      %p146 = pneg %p140
      %p147 = scmp.eq.s32.totalorder %s14, 2
      %p148 = por %p146, %p147
      %p149 = scmp.ne.s32.totalorder %s141, %s144
      %p150 = scmp.eq.s32.totalorder %s14, 0
      %p151 = por %p149, %p150
      %p152 = scmp.ne.s32.totalorder %s141, %s144
      %p153 = scmp.eq.s32.totalorder %s19, 2
      %p154 = por %p152, %p153
      %p155 = scmp.ne.s32.totalorder %s144, %s145
      %p156 = scmp.eq.s32.totalorder %s19, 0
      %p157 = por %p155, %p156
      %p158 = scmp.ne.s32.totalorder %s144, %s145
      %p159 = scmp.eq.s32.totalorder %s20, 2
      %p160 = por %p158, %p159
      %p162 = scmp.ne.s32.totalorder %s145, %s161
      %p163 = scmp.eq.s32.totalorder %s20, 0
      %p164 = por %p162, %p163
      %s165 = ssub.s32 %s21, %s40
      %s166 = ssub.s32 %s22, %s36
      %s167 = sor.u32 %s165, %s166
      %p168 = scmp.eq.s32.totalorder %s167, 0
      %s170 = sadd.s32 %s169, 1
      %s171 = scalar_select %p168, %s169, %s170
      %p174 = pneg %p168
      %p175 = scmp.eq.s32.totalorder %s14, 2
      %p176 = por %p174, %p175
      %p177 = scmp.ne.s32.totalorder %s169, %s172
      %p178 = scmp.eq.s32.totalorder %s14, 0
      %p179 = por %p177, %p178
      %p180 = scmp.ne.s32.totalorder %s169, %s172
      %p181 = scmp.eq.s32.totalorder %s19, 2
      %p182 = por %p180, %p181
      %p183 = scmp.ne.s32.totalorder %s172, %s173
      %p184 = scmp.eq.s32.totalorder %s19, 0
      %p185 = por %p183, %p184
      %p186 = scmp.ne.s32.totalorder %s172, %s173
      %p187 = scmp.eq.s32.totalorder %s20, 2
      %p188 = por %p186, %p187
      %p190 = scmp.ne.s32.totalorder %s173, %s189
      %p191 = scmp.eq.s32.totalorder %s20, 0
      %p192 = por %p190, %p191
      %p193 = scmp.le.s32.totalorder 1, %s14
      %p194 = scmp.lt.s32.totalorder %s14, 4
      %p195 = pnand %p193, %p194
      %p196 = pneg %p195
      // Predicated region
      $region9: #{master_encoder_forward.8} parent=5 // pred_check
        _
      $region10: #{master_encoder_forward.8} parent=5 // pred_check_branch
        %198 = sbr.rel (%p195) target = $region12
      $region11: #{master_encoder_forward.8} parent=5 // pred_region
        %s199 = ssub.s32 %s14, 1
        // Predicated region
        $region13: #{master_encoder_forward.8} parent=11 // pred_check
          %p200 = pneg %p61
        $region14: #{master_encoder_forward.8} parent=11 // pred_check_branch
          %202 = sbr.rel (%p200) target = $region16
        $region15: #{master_encoder_forward.8} parent=11 // pred_region
          %s203 = smul.u32 2, %s24
          %p204 = scmp.lt.s32.totalorder %s203, 1
          %s205 = scalar_select %p204, %s203, 1
          %p206 = scmp.lt.s32.totalorder %s26, 0
          %s207 = scalar_select %p206, %s26, 0
          %s208 = sadd.s32 %s207, %s205
          %s209 = smul.addr %s208, 8
          %s210 = scalar_lea.vmem %s0, %s209
          %s211 = smul.u32 2, %s24
        $region16: #{master_encoder_forward.8} parent=11 // pred_fallthru
          _
        // Predicated region
        $region17: #{master_encoder_forward.8} parent=11 // pred_check
          %p212 = pneg %p82
        $region18: #{master_encoder_forward.8} parent=11 // pred_check_branch
          %214 = sbr.rel (%p212) target = $region20
        $region19: #{master_encoder_forward.8} parent=11 // pred_region
          _
        $region20: #{master_encoder_forward.8} parent=11 // pred_fallthru
          _
        // Predicated region
        $region21: #{master_encoder_forward.8} parent=11 // pred_check
          %p215 = pneg %p103
        $region22: #{master_encoder_forward.8} parent=11 // pred_check_branch
          %217 = sbr.rel (%p215) target = $region24
        $region23: #{master_encoder_forward.8} parent=11 // pred_region
          _
        $region24: #{master_encoder_forward.8} parent=11 // pred_fallthru
          _
      $region12: #{master_encoder_forward.8} parent=5 // pred_fallthru
        _
      %p218 = scmp.lt.s32.totalorder %s14, 3
      // Predicated region
      $region25: #{master_encoder_forward.8} parent=5 // pred_check
        %p219 = pneg %p218
      $region26: #{master_encoder_forward.8} parent=5 // pred_check_branch
        %221 = sbr.rel (%p219) target = $region28
      $region27: #{master_encoder_forward.8} parent=5 // pred_region
        // Predicated region
        $region29: #{master_encoder_forward.8} parent=27 // pred_check
          %p222 = pneg %p125
        $region30: #{master_encoder_forward.8} parent=27 // pred_check_branch
          %224 = sbr.rel (%p222) target = $region32
        $region31: #{master_encoder_forward.8} parent=27 // pred_region
          %s225 = sand.u32 %s115, 1
          %s226 = scalar_lea.sflag [#allocation4], %s225
          %s227 = sand.u32 %s115, 1
          %s228 = smul.addr %s227, 256
          %s229 = scalar_lea.vmem [#allocation3], %s228
          %s230 = smul.u32 32, %s23
          %s231 = smul.u32 2, %s22
          %s233 = ssub.s32 4096, 4096
          %234 = vsyncadd %s226, %s233
          %s235 = smul.addr %s230, 6
          %s236 = sadd.s32 %s231, %s235
          %s237 = smul.addr %s236, 64
          %s238 = scalar_lea.hbm %s3, %s237
          %s239 = sshll.u32 %s229, 4
          %s240 = int_to_ptr.vmem [resolvable:$true] %s239
          %245 = dma.hbm_to_vmem [thread:$0]  %s238, 4096, %s240, %s226, 384, 128, 8
        $region32: #{master_encoder_forward.8} parent=27 // pred_fallthru
          _
        // Predicated region
        $region33: #{master_encoder_forward.8} parent=27 // pred_check
          %p246 = pneg %p151
        $region34: #{master_encoder_forward.8} parent=27 // pred_check_branch
          %248 = sbr.rel (%p246) target = $region36
        $region35: #{master_encoder_forward.8} parent=27 // pred_region
          %s249 = smul.u32 2, %s22
          %p250 = scmp.lt.s32.totalorder %s249, 5
          %s251 = scalar_select %p250, %s249, 5
          %s252 = scalar_lea.vmem %s4, %s251
          %s253 = smul.u32 2, %s22
        $region36: #{master_encoder_forward.8} parent=27 // pred_fallthru
          _
      $region28: #{master_encoder_forward.8} parent=5 // pred_fallthru
        _
      %p254 = scmp.le.s32.totalorder 1, %s14
      %p255 = scmp.lt.s32.totalorder %s14, 4
      %p256 = pnand %p254, %p255
      %p257 = pneg %p256
      // Predicated region
      $region37: #{master_encoder_forward.8} parent=5 // pred_check
        _
      $region38: #{master_encoder_forward.8} parent=5 // pred_check_branch
        %259 = sbr.rel (%p256) target = $region40
      $region39: #{master_encoder_forward.8} parent=5 // pred_region
        %s260 = ssub.s32 %s14, 1
        %s261 = sand.u32 %s118, 1
        %s262 = scalar_lea.sflag [#allocation4], %s261
        %s263 = sand.u32 %s118, 1
        %s264 = smul.addr %s263, 256
        %s265 = scalar_lea.vmem [#allocation3], %s264
        // Predicated region
        $region41: #{master_encoder_forward.8} parent=39 // pred_check
          %p266 = pneg %p131
        $region42: #{master_encoder_forward.8} parent=39 // pred_check_branch
          %268 = sbr.rel (%p266) target = $region44
        $region43: #{master_encoder_forward.8} parent=39 // pred_region
          %269 = dma.done %s262, 4096
        $region44: #{master_encoder_forward.8} parent=39 // pred_fallthru
          _
        %s270 = smul.u32 2, %s24
        %p271 = scmp.lt.s32.totalorder %s270, 1
        %s272 = scalar_select %p271, %s270, 1
        %p273 = scmp.lt.s32.totalorder %s26, 0
        %s274 = scalar_select %p273, %s26, 0
        %s275 = sadd.s32 %s274, %s272
        %s276 = smul.addr %s275, 8
        %s277 = scalar_lea.vmem %s0, %s276
        %p278 = pneg %p61
        %p279 = pneg %p58
        %p280 = pneg %p82
        %p281 = pneg %p79
        %p282 = pneg %p103
        %p283 = pneg %p100
        %s284 = sand.u32 %s118, 1
        %s285 = scalar_lea.sflag [#allocation4], %s284
        %s286 = sand.u32 %s118, 1
        %s287 = smul.addr %s286, 256
        %s288 = scalar_lea.vmem [#allocation3], %s287
        %p289 = pneg %p131
        %p290 = pneg %p128
        %s291 = smul.u32 2, %s25
        %p292 = scmp.lt.s32.totalorder %s291, 5
        %s293 = scalar_select %p292, %s291, 5
        %s294 = scalar_lea.vmem %s4, %s293
        %p295 = pneg %p157
        %p296 = pneg %p154
        %p297 = pneg %p185
        %p298 = pneg %p182
        %s299 = smul.u32 2, %s25
        %p300 = scmp.lt.s32.totalorder %s24, 0
        %s301 = scalar_select %p300, %s24, 0
        %p302 = scmp.lt.s32.totalorder %s299, 5
        %s303 = scalar_select %p302, %s299, 5
        %s304 = smul.addr %s301, 6
        %s305 = sadd.s32 %s303, %s304
        %s306 = scalar_lea.vmem %s5, %s305
        %s307 = smul.u32 2, %s24
        %p308 = scmp.lt.s32.totalorder %s307, 1
        %s309 = scalar_select %p308, %s307, 1
        %p310 = scmp.lt.s32.totalorder %s26, 0
        %s311 = scalar_select %p310, %s26, 0
        %s312 = sadd.s32 %s311, %s309
        %s313 = smul.addr %s312, 8
        %s314 = scalar_lea.vmem %s0, %s313
        %s315 = smul.u32 2, %s24
        %s316 = smul.u32 32, %s26
        %s317 = smul.u32 2, %s25
        %s318 = smul.u32 2, %s25
        %p319 = scmp.lt.s32.totalorder %s318, 5
        %s320 = scalar_select %p319, %s318, 5
        %s321 = scalar_lea.vmem %s4, %s320
        %s322 = smul.u32 2, %s25
        %s323 = smul.u32 2, %s25
        %p324 = scmp.lt.s32.totalorder %s24, 0
        %s325 = scalar_select %p324, %s24, 0
        %p326 = scmp.lt.s32.totalorder %s323, 5
        %s327 = scalar_select %p326, %s323, 5
        %s328 = smul.addr %s325, 6
        %s329 = sadd.s32 %s327, %s328
        %s330 = scalar_lea.vmem %s5, %s329
        %s331 = smul.u32 2, %s25
        %p332 = scmp.eq.s32.totalorder %s26, 0
        // Predicated region
        $region45: #{master_encoder_forward.8} parent=39 // pred_check
          %p333 = pneg %p332
        $region46: #{master_encoder_forward.8} parent=39 // pred_check_branch
          %335 = sbr.rel (%p333) target = $region48
        $region47: #{master_encoder_forward.8} parent=39 // pred_region
          %336 = vst [vmem:[#allocation2] sm:$0xf] 0.0
        $region48: #{master_encoder_forward.8} parent=39 // pred_fallthru
          _
        %v337 = vld [vmem:[%s314] sm:$0xff]
        %v338 = vld [vmem:[%s314 + $0x8] sm:$0xff]
        %vm339 = vcmask 261120
        %v340 = vsel %vm339, %v337, 0.0
        %341 = vadd.xlane.f32.xlu0 %v340
        %v342 = vpop.xlane.xlu0 %341
        %v343 = vsel %vm339, %v338, 0.0
        %344 = vadd.xlane.f32.xlu0 %v343
        %v345 = vpop.xlane.xlu0 %344
        %v346 = vrcp.pop 32.0
        %v347 = vmul.f32 %v342, %v346
        %v348 = vmul.f32 %v345, %v346
        %v349 = vmul.f32 %v337, %v337
        %v350 = vmul.f32 %v338, %v338
        %v351 = vsel %vm339, %v349, 0.0
        %352 = vadd.xlane.f32.xlu0 %v351
        %v353 = vpop.xlane.xlu0 %352
        %v354 = vsel %vm339, %v350, 0.0
        %355 = vadd.xlane.f32.xlu0 %v354
        %v356 = vpop.xlane.xlu0 %355
        %v357 = vmul.f32 %v353, %v346
        %v358 = vmul.f32 %v356, %v346
        %v359 = vmul.f32 %v347, %v347
        %v360 = vmul.f32 %v348, %v348
        %v361 = vsub.f32 %v357, %v359
        %v362 = vsub.f32 %v358, %v360
        %v363 = vadd.f32 %v361, 1e-05
        %v364 = vadd.f32 %v362, 1e-05
        %v365 = vrsqrt.pop %v363
        %v366 = vrsqrt.pop %v364
        %v367 = vsub.f32 %v337, %v347
        %v368 = vsub.f32 %v338, %v348
        %v369 = vmul.f32 %v367, %v365
        %v370 = vmul.f32 %v368, %v366
        %v371 = vld [vmem:[%s1] sm:$0x1]
        %v373 = vlaneseq
        %v374 = vshrl.u32 %v373, 7
        %v375 = vsub.s32 0, %v374
        %v376 = vrot.slane %v371, %v375
        %v378 = vmul.f32 %v369, %v376
        %v379 = vmul.f32 %v370, %v376
        %v380 = vld [vmem:[%s2] sm:$0x1]
        %v382 = vlaneseq
        %v383 = vshrl.u32 %v382, 7
        %v384 = vsub.s32 0, %v383
        %v385 = vrot.slane %v380, %v384
        %v387 = vadd.f32 %v378, %v385
        %v388 = vadd.f32 %v379, %v385
        %v389 = vcombine.high %v387, 0.0
        %v391 = vunpack.c.l.s4 1983009808
        %v392 = vunpack.c.0.s8 %v391
        %v393 = vlaneseq
        %v394 = vshrl.u32 %v393, 7
        %v395 = vsub.s32 %v392, %v394
        %v396 = vrot.slane %v387, %v395
        %v398 = vunpack.c.l.s4 1983009808
        %v399 = vunpack.c.0.s8 %v398
        %v400 = vlaneseq
        %v401 = vshrl.u32 %v400, 7
        %v402 = vsub.s32 %v399, %v401
        %v403 = vrot.slane %v389, %v402
        %v404 = vcombine.high %v388, 0.0
        %v406 = vunpack.c.l.s4 1983009808
        %v407 = vunpack.c.0.s8 %v406
        %v408 = vlaneseq
        %v409 = vshrl.u32 %v408, 7
        %v410 = vsub.s32 %v407, %v409
        %v411 = vrot.slane %v388, %v410
        %v413 = vunpack.c.l.s4 1983009808
        %v414 = vunpack.c.0.s8 %v413
        %v415 = vlaneseq
        %v416 = vshrl.u32 %v415, 7
        %v417 = vsub.s32 %v414, %v416
        %v418 = vrot.slane %v404, %v417
        %v419 = vcombine.low %v396, %v411
        %v420 = vcombine.high %v396, %v411
        %v422 = vunpack.c.l.s4 1934713408
        %v423 = vunpack.c.0.s8 %v422
        %v424 = vlaneseq
        %v425 = vshrl.u32 %v424, 7
        %v426 = vsub.s32 %v423, %v425
        %v427 = vrot.slane %v419, %v426
        %v429 = vunpack.c.l.s4 1934713408
        %v430 = vunpack.c.0.s8 %v429
        %v431 = vlaneseq
        %v432 = vshrl.u32 %v431, 7
        %v433 = vsub.s32 %v430, %v432
        %v434 = vrot.slane %v420, %v433
        %v435 = vcombine.low %v403, %v418
        %v436 = vcombine.high %v403, %v418
        %v438 = vunpack.c.l.s4 1934713408
        %v439 = vunpack.c.0.s8 %v438
        %v440 = vlaneseq
        %v441 = vshrl.u32 %v440, 7
        %v442 = vsub.s32 %v439, %v441
        %v443 = vrot.slane %v435, %v442
        %v445 = vunpack.c.l.s4 1934713408
        %v446 = vunpack.c.0.s8 %v445
        %v447 = vlaneseq
        %v448 = vshrl.u32 %v447, 7
        %v449 = vsub.s32 %v446, %v448
        %v450 = vrot.slane %v436, %v449
        %v451 = vcombine.high %v427, 0.0
        %v452 = vcombine.high %v434, 0.0
        %v453 = vcombine.high %v443, 0.0
        %v454 = vcombine.high %v450, 0.0
        %456 = vrot.lane.b32.xlu0 %v451, 32
        %v457 = vpop.permute.xlu0 %456
        %460 = vrot.lane.b32.xlu0 %v434, 64
        %v461 = vpop.permute.xlu0 %460
        %464 = vrot.lane.b32.xlu0 %v452, 96
        %v465 = vpop.permute.xlu0 %464
        %468 = vrot.lane.b32.xlu0 %v453, 32
        %v469 = vpop.permute.xlu0 %468
        %472 = vrot.lane.b32.xlu0 %v450, 64
        %v473 = vpop.permute.xlu0 %472
        %476 = vrot.lane.b32.xlu0 %v454, 96
        %v477 = vpop.permute.xlu0 %476
        %v479 = vsel %vm339, %v427, %v457
        %vm480 = vcmask 523264
        %v481 = vsel %vm480, %v479, %v461
        %vm482 = vcmask 785408
        %v483 = vsel %vm482, %v481, %v465
        %v484 = vsel %vm339, %v443, %v469
        %v485 = vsel %vm480, %v484, %v473
        %v486 = vsel %vm482, %v485, %v477
        %v487 = vpack.c.bf16 %v483, %v483
        %v488 = vpack.c.bf16 %v486, %v486
        %v489 = vld [vmem:[#allocation2] sm:$0xf]
        %v490 = vld [vmem:[%s265] sm:$0xff]
        %v491 = vld [vmem:[%s265 + $0x8] sm:$0xff]
        %v492 = vld [vmem:[%s265 + $0x10] sm:$0xff]
        %v493 = vld [vmem:[%s265 + $0x18] sm:$0xff]
        %v494 = vld [vmem:[%s265 + $0x20] sm:$0xff]
        %v495 = vld [vmem:[%s265 + $0x28] sm:$0xff]
        %v496 = vld [vmem:[%s265 + $0x30] sm:$0xff]
        %v497 = vld [vmem:[%s265 + $0x38] sm:$0xff]
        %v498 = vld [vmem:[%s265 + $0x40] sm:$0xff]
        %v499 = vld [vmem:[%s265 + $0x48] sm:$0xff]
        %v500 = vld [vmem:[%s265 + $0x50] sm:$0xff]
        %v501 = vld [vmem:[%s265 + $0x58] sm:$0xff]
        %v502 = vld [vmem:[%s265 + $0x60] sm:$0xff]
        %v503 = vld [vmem:[%s265 + $0x68] sm:$0xff]
        %v504 = vld [vmem:[%s265 + $0x70] sm:$0xff]
        %v505 = vld [vmem:[%s265 + $0x78] sm:$0xff]
        %v506 = vld [vmem:[%s265 + $0x80] sm:$0xff]
        %v507 = vld [vmem:[%s265 + $0x88] sm:$0xff]
        %v508 = vld [vmem:[%s265 + $0x90] sm:$0xff]
        %v509 = vld [vmem:[%s265 + $0x98] sm:$0xff]
        %v510 = vld [vmem:[%s265 + $0xa0] sm:$0xff]
        %v511 = vld [vmem:[%s265 + $0xa8] sm:$0xff]
        %v512 = vld [vmem:[%s265 + $0xb0] sm:$0xff]
        %v513 = vld [vmem:[%s265 + $0xb8] sm:$0xff]
        %v514 = vld [vmem:[%s265 + $0xc0] sm:$0xff]
        %v515 = vld [vmem:[%s265 + $0xc8] sm:$0xff]
        %v516 = vld [vmem:[%s265 + $0xd0] sm:$0xff]
        %v517 = vld [vmem:[%s265 + $0xd8] sm:$0xff]
        %v518 = vld [vmem:[%s265 + $0xe0] sm:$0xff]
        %v519 = vld [vmem:[%s265 + $0xe8] sm:$0xff]
        %v520 = vld [vmem:[%s265 + $0xf0] sm:$0xff]
        %v521 = vld [vmem:[%s265 + $0xf8] sm:$0xff]
        %v554 = vunpack.c.l.b16 %v490
        %v555 = vunpack.c.h.b16 %v490
        %v556 = vunpack.c.l.b16 %v491
        %v557 = vunpack.c.h.b16 %v491
        %v558 = vunpack.c.l.b16 %v492
        %v559 = vunpack.c.h.b16 %v492
        %v560 = vunpack.c.l.b16 %v493
        %v561 = vunpack.c.h.b16 %v493
        %v562 = vunpack.c.l.b16 %v494
        %v563 = vunpack.c.h.b16 %v494
        %v564 = vunpack.c.l.b16 %v495
        %v565 = vunpack.c.h.b16 %v495
        %v566 = vunpack.c.l.b16 %v496
        %v567 = vunpack.c.h.b16 %v496
        %v568 = vunpack.c.l.b16 %v497
        %v569 = vunpack.c.h.b16 %v497
        %v570 = vunpack.c.l.b16 %v498
        %v571 = vunpack.c.h.b16 %v498
        %v572 = vunpack.c.l.b16 %v499
        %v573 = vunpack.c.h.b16 %v499
        %v574 = vunpack.c.l.b16 %v500
        %v575 = vunpack.c.h.b16 %v500
        %v576 = vunpack.c.l.b16 %v501
        %v577 = vunpack.c.h.b16 %v501
        %v578 = vunpack.c.l.b16 %v502
        %v579 = vunpack.c.h.b16 %v502
        %v580 = vunpack.c.l.b16 %v503
        %v581 = vunpack.c.h.b16 %v503
        %v582 = vunpack.c.l.b16 %v504
        %v583 = vunpack.c.h.b16 %v504
        %v584 = vunpack.c.l.b16 %v505
        %v585 = vunpack.c.h.b16 %v505
        %v586 = vunpack.c.l.b16 %v506
        %v587 = vunpack.c.h.b16 %v506
        %v588 = vunpack.c.l.b16 %v507
        %v589 = vunpack.c.h.b16 %v507
        %v590 = vunpack.c.l.b16 %v508
        %v591 = vunpack.c.h.b16 %v508
        %v592 = vunpack.c.l.b16 %v509
        %v593 = vunpack.c.h.b16 %v509
        %v594 = vunpack.c.l.b16 %v510
        %v595 = vunpack.c.h.b16 %v510
        %v596 = vunpack.c.l.b16 %v511
        %v597 = vunpack.c.h.b16 %v511
        %v598 = vunpack.c.l.b16 %v512
        %v599 = vunpack.c.h.b16 %v512
        %v600 = vunpack.c.l.b16 %v513
        %v601 = vunpack.c.h.b16 %v513
        %v602 = vunpack.c.l.b16 %v514
        %v603 = vunpack.c.h.b16 %v514
        %v604 = vunpack.c.l.b16 %v515
        %v605 = vunpack.c.h.b16 %v515
        %v606 = vunpack.c.l.b16 %v516
        %v607 = vunpack.c.h.b16 %v516
        %v608 = vunpack.c.l.b16 %v517
        %v609 = vunpack.c.h.b16 %v517
        %v610 = vunpack.c.l.b16 %v518
        %v611 = vunpack.c.h.b16 %v518
        %v612 = vunpack.c.l.b16 %v519
        %v613 = vunpack.c.h.b16 %v519
        %v614 = vunpack.c.l.b16 %v520
        %v615 = vunpack.c.h.b16 %v520
        %v616 = vunpack.c.l.b16 %v521
        %v617 = vunpack.c.h.b16 %v521
        %v618 = vpack.c.b16 %v556, %v554
        %v619 = vpack.c.b16 %v557, %v555
        %v620 = vpack.c.b16 %v560, %v558
        %v621 = vpack.c.b16 %v561, %v559
        %v622 = vpack.c.b16 %v564, %v562
        %v623 = vpack.c.b16 %v565, %v563
        %v624 = vpack.c.b16 %v568, %v566
        %v625 = vpack.c.b16 %v569, %v567
        %v626 = vpack.c.b16 %v572, %v570
        %v627 = vpack.c.b16 %v573, %v571
        %v628 = vpack.c.b16 %v576, %v574
        %v629 = vpack.c.b16 %v577, %v575
        %v630 = vpack.c.b16 %v580, %v578
        %v631 = vpack.c.b16 %v581, %v579
        %v632 = vpack.c.b16 %v584, %v582
        %v633 = vpack.c.b16 %v585, %v583
        %v634 = vpack.c.b16 %v588, %v586
        %v635 = vpack.c.b16 %v589, %v587
        %v636 = vpack.c.b16 %v592, %v590
        %v637 = vpack.c.b16 %v593, %v591
        %v638 = vpack.c.b16 %v596, %v594
        %v639 = vpack.c.b16 %v597, %v595
        %v640 = vpack.c.b16 %v600, %v598
        %v641 = vpack.c.b16 %v601, %v599
        %v642 = vpack.c.b16 %v604, %v602
        %v643 = vpack.c.b16 %v605, %v603
        %v644 = vpack.c.b16 %v608, %v606
        %v645 = vpack.c.b16 %v609, %v607
        %v646 = vpack.c.b16 %v612, %v610
        %v647 = vpack.c.b16 %v613, %v611
        %v648 = vpack.c.b16 %v616, %v614
        %v649 = vpack.c.b16 %v617, %v615
        %682 = vmatprep.subr.bf16.mxu0 %v619
        %683 = vmatpush1.bf16.msra.mxu0 %v618
        %684 = vmatprep.subr.bf16.mxu0 %v621
        %685 = vmatpush1.bf16.msra.mxu0 %v620
        %686 = vmatprep.subr.bf16.mxu0 %v623
        %687 = vmatpush1.bf16.msra.mxu0 %v622
        %688 = vmatprep.subr.bf16.mxu0 %v625
        %689 = vmatpush1.bf16.msra.mxu0 %v624
        %690 = vmatprep.subr.bf16.mxu0 %v627
        %691 = vmatpush1.bf16.msra.mxu0 %v626
        %692 = vmatprep.subr.bf16.mxu0 %v629
        %693 = vmatpush1.bf16.msra.mxu0 %v628
        %694 = vmatprep.subr.bf16.mxu0 %v631
        %695 = vmatpush1.bf16.msra.mxu0 %v630
        %696 = vmatprep.subr.bf16.mxu0 %v633
        %697 = vmatpush1.bf16.msra.mxu0 %v632
        %698 = vmatprep.subr.bf16.mxu0 %v635
        %699 = vmatpush1.bf16.msra.mxu0 %v634
        %700 = vmatprep.subr.bf16.mxu0 %v637
        %701 = vmatpush1.bf16.msra.mxu0 %v636
        %702 = vmatprep.subr.bf16.mxu0 %v639
        %703 = vmatpush1.bf16.msra.mxu0 %v638
        %704 = vmatprep.subr.bf16.mxu0 %v641
        %705 = vmatpush1.bf16.msra.mxu0 %v640
        %706 = vmatprep.subr.bf16.mxu0 %v643
        %707 = vmatpush1.bf16.msra.mxu0 %v642
        %708 = vmatprep.subr.bf16.mxu0 %v645
        %709 = vmatpush1.bf16.msra.mxu0 %v644
        %710 = vmatprep.subr.bf16.mxu0 %v647
        %711 = vmatpush1.bf16.msra.mxu0 %v646
        %712 = vmatprep.subr.bf16.mxu0 %v649
        %713 = vmatpush1.bf16.msra.mxu0 %v648
        %714 = vmatprep.mubr.bf16.mxu0 %v488
        %715 = vmatmul.mubr.bf16.gmra.mrb[0].mxu0 %v487
        %v716 = vpop.f32.mrb[0].mxu0
        %v717 = vadd.f32 0.0, %v716
        %v718 = vpop.f32.mrb[0].mxu0
        %v719 = vadd.f32 0.0, %v718
        %v720 = vpop.f32.mrb[0].mxu0
        %v721 = vpop.f32.mrb[0].mxu0
        %722 = vdwg.mxu0
        %v725 = vcombine.low %v717, %v719
        %v727 = vunpack.c.l.s4 1983009808
        %v728 = vunpack.c.0.s8 %v727
        %v729 = vlaneseq
        %v730 = vshrl.u32 %v729, 7
        %v731 = vsub.s32 %v728, %v730
        %v732 = vrot.slane %v725, %v731
        %v734 = vadd.f32 %v489, %v732
        %735 = vst [vmem:[#allocation2] sm:$0xf] %v734
        // Predicated region
        $region49: #{master_encoder_forward.8} parent=39 // pred_check
          %p736 = pneg %p332
        $region50: #{master_encoder_forward.8} parent=39 // pred_check_branch
          %738 = sbr.rel (%p736) target = $region52
        $region51: #{master_encoder_forward.8} parent=39 // pred_region
          %v739 = vld [vmem:[#allocation2] sm:$0xf]
          %v740 = vld [vmem:[%s321] sm:$0x3]
          %v742 = vlaneseq
          %v743 = vshrl.u32 %v742, 7
          %v744 = vsub.s32 0, %v743
          %v745 = vrot.slane %v740, %v744
          %v746 = vlaneseq
          %v747 = vshrl.u32 %v746, 7
          %v748 = vsub.s32 1, %v747
          %v749 = vrot.slane %v740, %v748
          %v750 = vcombine.low %v745, %v749
          %v752 = vunpack.c.l.s4 1983009808
          %v753 = vunpack.c.0.s8 %v752
          %v754 = vlaneseq
          %v755 = vshrl.u32 %v754, 7
          %v756 = vsub.s32 %v753, %v755
          %v757 = vrot.slane %v750, %v756
          %v759 = vadd.f32 %v739, %v757
          %v762 = vunpack.c.l.s4 1983009808
          %v763 = vunpack.c.0.s8 %v762
          %v764 = vlaneseq
          %v765 = vshrl.u32 %v764, 7
          %v766 = vsub.s32 %v763, %v765
          %v767 = vrot.slane %v759, %v766
          %v768 = vcombine.high %v767, %v767
          %v771 = vpack.c.bf16 %v767, %v767
          %v772 = vpack.c.bf16 %v768, %v768
          %v775 = vcombine.low %v771, %v772
          %v777 = vunpack.c.l.s4 1966171168
          %v778 = vunpack.c.0.s8 %v777
          %v779 = vlaneseq
          %v780 = vshrl.u32 %v779, 7
          %v781 = vsub.s32 %v778, %v780
          %v782 = vrot.slane %v775, %v781
          %v784 = vunpack.c.l.s4 1966171168
          %v785 = vunpack.c.0.s8 %v784
          %v786 = vlaneseq
          %v787 = vshrl.u32 %v786, 7
          %v788 = vsub.s32 %v785, %v787
          %v789 = vrot.slane %v782, %v788
          %791 = vst [vmem:[%s330] sm:$0x3] %v789
        $region52: #{master_encoder_forward.8} parent=39 // pred_fallthru
          _
        %s792 = smul.u32 2, %s25
        %p793 = scmp.lt.s32.totalorder %s24, 0
        %s794 = scalar_select %p793, %s24, 0
        %p795 = scmp.lt.s32.totalorder %s792, 5
        %s796 = scalar_select %p795, %s792, 5
        %s797 = smul.addr %s794, 6
        %s798 = sadd.s32 %s796, %s797
        %s799 = scalar_lea.vmem %s5, %s798
        // Predicated region
        $region53: #{master_encoder_forward.8} parent=39 // pred_check
          %p800 = pneg %p182
        $region54: #{master_encoder_forward.8} parent=39 // pred_check_branch
          %802 = sbr.rel (%p800) target = $region56
        $region55: #{master_encoder_forward.8} parent=39 // pred_region
          %s803 = smul.u32 2, %s25
        $region56: #{master_encoder_forward.8} parent=39 // pred_fallthru
          _
      $region40: #{master_encoder_forward.8} parent=5 // pred_fallthru
        _
      %p804 = scmp.le.s32.totalorder 2, %s14
      // Predicated region
      $region57: #{master_encoder_forward.8} parent=5 // pred_check
        %p805 = pneg %p804
      $region58: #{master_encoder_forward.8} parent=5 // pred_check_branch
        %807 = sbr.rel (%p805) target = $region60
      $region59: #{master_encoder_forward.8} parent=5 // pred_region
        %s808 = ssub.s32 %s14, 2
        // Predicated region
        $region61: #{master_encoder_forward.8} parent=59 // pred_check
          %p809 = pneg %p188
        $region62: #{master_encoder_forward.8} parent=59 // pred_check_branch
          %811 = sbr.rel (%p809) target = $region64
        $region63: #{master_encoder_forward.8} parent=59 // pred_region
          %s812 = smul.u32 2, %s28
          %p813 = scmp.lt.s32.totalorder %s27, 0
          %s814 = scalar_select %p813, %s27, 0
          %p815 = scmp.lt.s32.totalorder %s812, 5
          %s816 = scalar_select %p815, %s812, 5
          %s817 = smul.addr %s814, 6
          %s818 = sadd.s32 %s816, %s817
          %s819 = scalar_lea.vmem %s5, %s818
        $region64: #{master_encoder_forward.8} parent=59 // pred_fallthru
          _
      $region60: #{master_encoder_forward.8} parent=5 // pred_fallthru
        _
    $region6: #{master_encoder_forward.8} parent=1 // loop_footer
      %s18 = sadd.s32 1, %s14
    $region7: #{master_encoder_forward.8} parent=1 // loop_footer_branch
      %13 = sbr.rel target = $region3
    $region8: #{master_encoder_forward.8} parent=1 // loop_exit
      _
    %820 = vsyncpa [#allocation4], 1
    %s821 = scalar_lea.sflag [#allocation4], 1
    %822 = vsyncpa %s821, 1

// kernel: master_encoder_forward.9
$region0: #{master_encoder_forward.9}
  #allocation0 [shape = 'u32[]', space=smem, size = 0x4, offset = 0x4, fixed_abs, tag = 'smem constant byte address 0x4 - core index']
  #allocation1 [shape = 'u32[144,128]{1,0:T(1,128)}', space=vmem, size = 0x12000, scoped, tag = 'internal scratch']
  %s0 = inlined_call_operand.vmem [shape: bf16[2,3,4,8,8], index: 0, kind: input, shape index: {}]
  %s1 = inlined_call_operand.vmem [shape: f32[2,8,32], index: 1, kind: input, shape index: {}]
  %s2 = inlined_call_operand.vmem [shape: f32[1,32], index: 2, kind: input, shape index: {}]
  %s3 = inlined_call_operand.vmem [shape: f32[1,32], index: 3, kind: input, shape index: {}]
  %s4 = inlined_call_operand.vmem [shape: f32[2,8,32], index: 4, kind: output, shape index: {0}]
  %s5 = inlined_call_operand.vmem [shape: bf16[2,8,32], index: 5, kind: output, shape index: {1}]
  %6 = xla_tuple %s4, %s5
  %s7 = sld [smem:[#allocation0]]
  $region57: #{master_encoder_forward.9} parent=0
    _
  %s9 = ssub.s32 1, %s7
  %s10 = scalar_select 0, %s9, %s7
  loop: start=0, step=1, limit=4
  $region2: #{master_encoder_forward.9} parent=0 // loop_pre_header
    _
  $region3: #{master_encoder_forward.9} parent=0 // loop_header
    %s12 = sphi 0, %s16
    %p13 = scmp.ge.s32.totalorder %s12, 4
    %s22 = sphi 0, %s24
    %s25 = sphi 0, %s22
    %s26 = sphi 0, %s25
    %s42 = sphi 0, %s26
    %s48 = sphi 0, %s50
    %s51 = sphi 0, %s48
    %s52 = sphi 0, %s51
    %s68 = sphi 0, %s52
    %s72 = sphi 0, %s72
    %s74 = sphi 0, %s72
    %s75 = sphi 0, %s74
    %s89 = sphi 0, %s75
    %s93 = sphi 0, %s93
    %s95 = sphi 0, %s93
    %s96 = sphi 0, %s95
    %s110 = sphi 0, %s96
    %s116 = sphi 0, %s118
    %s119 = sphi 0, %s116
    %s120 = sphi 0, %s119
    %s136 = sphi 0, %s120
    %s142 = sphi 0, %s144
    %s145 = sphi 0, %s142
    %s146 = sphi 0, %s145
    %s162 = sphi 0, %s146
  $region4: #{master_encoder_forward.9} parent=0 // loop_header_branch
    %15 = sbr.rel (%p13) target = $region8
  $region5: #{master_encoder_forward.9} parent=0 // loop_body
    %s17 = ssub.s32 %s12, 1
    %s18 = ssub.s32 %s12, 2
    %s19 = sadd.s32 %s12, 1
    %s20 = ssub.s32 %s12, %s19
    %p21 = scmp.eq.s32.totalorder %s20, 0
    %s23 = sadd.s32 %s22, 1
    %s24 = scalar_select %p21, %s22, %s23
    %p27 = pneg %p21
    %p28 = scmp.eq.s32.totalorder %s12, 1
    %p29 = por %p27, %p28
    %p30 = scmp.ne.s32.totalorder %s22, %s25
    %p31 = scmp.eq.s32.totalorder %s12, 0
    %p32 = por %p30, %p31
    %p33 = scmp.ne.s32.totalorder %s22, %s25
    %p34 = scmp.eq.s32.totalorder %s17, 1
    %p35 = por %p33, %p34
    %p36 = scmp.ne.s32.totalorder %s25, %s26
    %p37 = scmp.eq.s32.totalorder %s17, 0
    %p38 = por %p36, %p37
    %p39 = scmp.ne.s32.totalorder %s25, %s26
    %p40 = scmp.eq.s32.totalorder %s18, 1
    %p41 = por %p39, %p40
    %p43 = scmp.ne.s32.totalorder %s26, %s42
    %p44 = scmp.eq.s32.totalorder %s18, 0
    %p45 = por %p43, %p44
    %s46 = ssub.s32 %s12, %s19
    %p47 = scmp.eq.s32.totalorder %s46, 0
    %s49 = sadd.s32 %s48, 1
    %s50 = scalar_select %p47, %s48, %s49
    %p53 = pneg %p47
    %p54 = scmp.eq.s32.totalorder %s12, 1
    %p55 = por %p53, %p54
    %p56 = scmp.ne.s32.totalorder %s48, %s51
    %p57 = scmp.eq.s32.totalorder %s12, 0
    %p58 = por %p56, %p57
    %p59 = scmp.ne.s32.totalorder %s48, %s51
    %p60 = scmp.eq.s32.totalorder %s17, 1
    %p61 = por %p59, %p60
    %p62 = scmp.ne.s32.totalorder %s51, %s52
    %p63 = scmp.eq.s32.totalorder %s17, 0
    %p64 = por %p62, %p63
    %p65 = scmp.ne.s32.totalorder %s51, %s52
    %p66 = scmp.eq.s32.totalorder %s18, 1
    %p67 = por %p65, %p66
    %p69 = scmp.ne.s32.totalorder %s52, %s68
    %p70 = scmp.eq.s32.totalorder %s18, 0
    %p71 = por %p69, %p70
    %s73 = sadd.s32 %s72, 1
    %p76 = scmp.eq.s32.totalorder %s12, 1
    %p77 = scmp.ne.s32.totalorder %s72, %s74
    %p78 = scmp.eq.s32.totalorder %s12, 0
    %p79 = por %p77, %p78
    %p80 = scmp.ne.s32.totalorder %s72, %s74
    %p81 = scmp.eq.s32.totalorder %s17, 1
    %p82 = por %p80, %p81
    %p83 = scmp.ne.s32.totalorder %s74, %s75
    %p84 = scmp.eq.s32.totalorder %s17, 0
    %p85 = por %p83, %p84
    %p86 = scmp.ne.s32.totalorder %s74, %s75
    %p87 = scmp.eq.s32.totalorder %s18, 1
    %p88 = por %p86, %p87
    %p90 = scmp.ne.s32.totalorder %s75, %s89
    %p91 = scmp.eq.s32.totalorder %s18, 0
    %p92 = por %p90, %p91
    %s94 = sadd.s32 %s93, 1
    %p97 = scmp.eq.s32.totalorder %s12, 1
    %p98 = scmp.ne.s32.totalorder %s93, %s95
    %p99 = scmp.eq.s32.totalorder %s12, 0
    %p100 = por %p98, %p99
    %p101 = scmp.ne.s32.totalorder %s93, %s95
    %p102 = scmp.eq.s32.totalorder %s17, 1
    %p103 = por %p101, %p102
    %p104 = scmp.ne.s32.totalorder %s95, %s96
    %p105 = scmp.eq.s32.totalorder %s17, 0
    %p106 = por %p104, %p105
    %p107 = scmp.ne.s32.totalorder %s95, %s96
    %p108 = scmp.eq.s32.totalorder %s18, 1
    %p109 = por %p107, %p108
    %p111 = scmp.ne.s32.totalorder %s96, %s110
    %p112 = scmp.eq.s32.totalorder %s18, 0
    %p113 = por %p111, %p112
    %s114 = ssub.s32 %s12, %s19
    %p115 = scmp.eq.s32.totalorder %s114, 0
    %s117 = sadd.s32 %s116, 1
    %s118 = scalar_select %p115, %s116, %s117
    %p121 = pneg %p115
    %p122 = scmp.eq.s32.totalorder %s12, 1
    %p123 = por %p121, %p122
    %p124 = scmp.ne.s32.totalorder %s116, %s119
    %p125 = scmp.eq.s32.totalorder %s12, 0
    %p126 = por %p124, %p125
    %p127 = scmp.ne.s32.totalorder %s116, %s119
    %p128 = scmp.eq.s32.totalorder %s17, 1
    %p129 = por %p127, %p128
    %p130 = scmp.ne.s32.totalorder %s119, %s120
    %p131 = scmp.eq.s32.totalorder %s17, 0
    %p132 = por %p130, %p131
    %p133 = scmp.ne.s32.totalorder %s119, %s120
    %p134 = scmp.eq.s32.totalorder %s18, 1
    %p135 = por %p133, %p134
    %p137 = scmp.ne.s32.totalorder %s120, %s136
    %p138 = scmp.eq.s32.totalorder %s18, 0
    %p139 = por %p137, %p138
    %s140 = ssub.s32 %s12, %s19
    %p141 = scmp.eq.s32.totalorder %s140, 0
    %s143 = sadd.s32 %s142, 1
    %s144 = scalar_select %p141, %s142, %s143
    %p147 = pneg %p141
    %p148 = scmp.eq.s32.totalorder %s12, 1
    %p149 = por %p147, %p148
    %p150 = scmp.ne.s32.totalorder %s142, %s145
    %p151 = scmp.eq.s32.totalorder %s12, 0
    %p152 = por %p150, %p151
    %p153 = scmp.ne.s32.totalorder %s142, %s145
    %p154 = scmp.eq.s32.totalorder %s17, 1
    %p155 = por %p153, %p154
    %p156 = scmp.ne.s32.totalorder %s145, %s146
    %p157 = scmp.eq.s32.totalorder %s17, 0
    %p158 = por %p156, %p157
    %p159 = scmp.ne.s32.totalorder %s145, %s146
    %p160 = scmp.eq.s32.totalorder %s18, 1
    %p161 = por %p159, %p160
    %p163 = scmp.ne.s32.totalorder %s146, %s162
    %p164 = scmp.eq.s32.totalorder %s18, 0
    %p165 = por %p163, %p164
    %p166 = scmp.le.s32.totalorder 1, %s12
    %p167 = scmp.lt.s32.totalorder %s12, 3
    %p168 = pnand %p166, %p167
    %p169 = pneg %p168
    // Predicated region
    $region9: #{master_encoder_forward.9} parent=5 // pred_check
      _
    $region10: #{master_encoder_forward.9} parent=5 // pred_check_branch
      %171 = sbr.rel (%p168) target = $region12
    $region11: #{master_encoder_forward.9} parent=5 // pred_region
      %s172 = ssub.s32 %s12, 1
      // Predicated region
      $region13: #{master_encoder_forward.9} parent=11 // pred_check
        %p173 = pneg %p85
      $region14: #{master_encoder_forward.9} parent=11 // pred_check_branch
        %175 = sbr.rel (%p173) target = $region16
      $region15: #{master_encoder_forward.9} parent=11 // pred_region
        _
      $region16: #{master_encoder_forward.9} parent=11 // pred_fallthru
        _
      // Predicated region
      $region17: #{master_encoder_forward.9} parent=11 // pred_check
        %p176 = pneg %p106
      $region18: #{master_encoder_forward.9} parent=11 // pred_check_branch
        %178 = sbr.rel (%p176) target = $region20
      $region19: #{master_encoder_forward.9} parent=11 // pred_region
        _
      $region20: #{master_encoder_forward.9} parent=11 // pred_fallthru
        _
    $region12: #{master_encoder_forward.9} parent=5 // pred_fallthru
      _
    %p179 = scmp.lt.s32.totalorder %s12, 2
    // Predicated region
    $region21: #{master_encoder_forward.9} parent=5 // pred_check
      %p180 = pneg %p179
    $region22: #{master_encoder_forward.9} parent=5 // pred_check_branch
      %182 = sbr.rel (%p180) target = $region24
    $region23: #{master_encoder_forward.9} parent=5 // pred_region
      // Predicated region
      $region25: #{master_encoder_forward.9} parent=23 // pred_check
        %p183 = pneg %p32
      $region26: #{master_encoder_forward.9} parent=23 // pred_check_branch
        %185 = sbr.rel (%p183) target = $region28
      $region27: #{master_encoder_forward.9} parent=23 // pred_region
        %p186 = scmp.lt.s32.totalorder %s12, 1
        %s187 = scalar_select %p186, %s12, 1
        %s188 = smul.addr %s187, 12
        %s189 = smul.addr %s188, 4
        %s190 = scalar_lea.vmem %s0, %s189
      $region28: #{master_encoder_forward.9} parent=23 // pred_fallthru
        _
      // Predicated region
      $region29: #{master_encoder_forward.9} parent=23 // pred_check
        %p191 = pneg %p58
      $region30: #{master_encoder_forward.9} parent=23 // pred_check_branch
        %193 = sbr.rel (%p191) target = $region32
      $region31: #{master_encoder_forward.9} parent=23 // pred_region
        %p194 = scmp.lt.s32.totalorder %s12, 1
        %s195 = scalar_select %p194, %s12, 1
        %s196 = smul.addr %s195, 8
        %s197 = scalar_lea.vmem %s1, %s196
      $region32: #{master_encoder_forward.9} parent=23 // pred_fallthru
        _
    $region24: #{master_encoder_forward.9} parent=5 // pred_fallthru
      _
    %p198 = scmp.le.s32.totalorder 1, %s12
    %p199 = scmp.lt.s32.totalorder %s12, 3
    %p200 = pnand %p198, %p199
    %p201 = pneg %p200
    // Predicated region
    $region33: #{master_encoder_forward.9} parent=5 // pred_check
      _
    $region34: #{master_encoder_forward.9} parent=5 // pred_check_branch
      %203 = sbr.rel (%p200) target = $region36
    $region35: #{master_encoder_forward.9} parent=5 // pred_region
      %s204 = ssub.s32 %s12, 1
      %p205 = scmp.lt.s32.totalorder %s17, 1
      %s206 = scalar_select %p205, %s17, 1
      %s207 = smul.addr %s206, 12
      %s208 = smul.addr %s207, 4
      %s209 = scalar_lea.vmem %s0, %s208
      %p210 = pneg %p38
      %p211 = pneg %p35
      %p212 = scmp.lt.s32.totalorder %s17, 1
      %s213 = scalar_select %p212, %s17, 1
      %s214 = smul.addr %s213, 8
      %s215 = scalar_lea.vmem %s1, %s214
      %p216 = pneg %p64
      %p217 = pneg %p61
      %p218 = pneg %p85
      %p219 = pneg %p82
      %p220 = pneg %p106
      %p221 = pneg %p103
      %p222 = pneg %p132
      %p223 = pneg %p129
      %p224 = scmp.lt.s32.totalorder %s17, 1
      %s225 = scalar_select %p224, %s17, 1
      %s226 = smul.addr %s225, 8
      %s227 = scalar_lea.vmem %s4, %s226
      %p228 = pneg %p158
      %p229 = pneg %p155
      %p230 = scmp.lt.s32.totalorder %s17, 1
      %s231 = scalar_select %p230, %s17, 1
      %s232 = smul.addr %s231, 4
      %s233 = scalar_lea.vmem %s5, %s232
      %p234 = scmp.lt.s32.totalorder %s17, 1
      %s235 = scalar_select %p234, %s17, 1
      %s236 = smul.addr %s235, 12
      %s237 = smul.addr %s236, 4
      %s238 = scalar_lea.vmem %s0, %s237
      %p239 = scmp.lt.s32.totalorder %s17, 1
      %s240 = scalar_select %p239, %s17, 1
      %s241 = smul.addr %s240, 8
      %s242 = scalar_lea.vmem %s1, %s241
      %p243 = scmp.lt.s32.totalorder %s17, 1
      %s244 = scalar_select %p243, %s17, 1
      %s245 = smul.addr %s244, 8
      %s246 = scalar_lea.vmem %s4, %s245
      %p247 = scmp.lt.s32.totalorder %s17, 1
      %s248 = scalar_select %p247, %s17, 1
      %s249 = smul.addr %s248, 4
      %s250 = scalar_lea.vmem %s5, %s249
      %v252 = vld [vmem:[%s238] sm:$0xf]
      %v253 = vld [vmem:[%s238 + $0x4] sm:$0xf]
      %v254 = vld [vmem:[%s238 + $0x8] sm:$0xf]
      %v255 = vld [vmem:[%s238 + $0xc] sm:$0xf]
      %s256 = scalar_lea.vmem %s238, 16
      %v257 = vld [vmem:[%s256] sm:$0xf]
      %v258 = vld [vmem:[%s256 + $0x4] sm:$0xf]
      %v259 = vld [vmem:[%s256 + $0x8] sm:$0xf]
      %v260 = vld [vmem:[%s256 + $0xc] sm:$0xf]
      %s261 = scalar_lea.vmem %s238, 32
      %v262 = vld [vmem:[%s261] sm:$0xf]
      %v263 = vld [vmem:[%s261 + $0x4] sm:$0xf]
      %v264 = vld [vmem:[%s261 + $0x8] sm:$0xf]
      %v265 = vld [vmem:[%s261 + $0xc] sm:$0xf]
      %vm266 = vcmask 64512
      %v268 = vsel %vm266, %v252, 0
      %v271 = vsel %vm266, %v257, 0
      %273 = vmatprep.subr.bf16.mxu0 0
      %274 = vmatpush1.bf16.xpose.msra.mxu0 %v271
      %275 = vmatprep.subr.bf16.mxu0 0
      %276 = vmatpush1.bf16.xpose.msra.mxu0 0
      %277 = vmatprep.subr.bf16.mxu0 0
      %278 = vmatpush1.bf16.xpose.msra.mxu0 0
      %279 = vmatprep.subr.bf16.mxu0 0
      %280 = vmatpush1.bf16.xpose.msra.mxu0 0
      %281 = vmatprep.subr.bf16.mxu0 0
      %282 = vmatpush1.bf16.xpose.msra.mxu0 0
      %283 = vmatprep.subr.bf16.mxu0 0
      %284 = vmatpush1.bf16.xpose.msra.mxu0 0
      %285 = vmatprep.subr.bf16.mxu0 0
      %286 = vmatpush1.bf16.xpose.msra.mxu0 0
      %287 = vmatprep.subr.bf16.mxu0 0
      %288 = vmatpush1.bf16.xpose.msra.mxu0 0
      %289 = vmatprep.subr.bf16.mxu0 0
      %290 = vmatpush1.bf16.xpose.msra.mxu0 0
      %291 = vmatprep.subr.bf16.mxu0 0
      %292 = vmatpush1.bf16.xpose.msra.mxu0 0
      %293 = vmatprep.subr.bf16.mxu0 0
      %294 = vmatpush1.bf16.xpose.msra.mxu0 0
      %295 = vmatprep.subr.bf16.mxu0 0
      %296 = vmatpush1.bf16.xpose.msra.mxu0 0
      %297 = vmatprep.subr.bf16.mxu0 0
      %298 = vmatpush1.bf16.xpose.msra.mxu0 0
      %299 = vmatprep.subr.bf16.mxu0 0
      %300 = vmatpush1.bf16.xpose.msra.mxu0 0
      %301 = vmatprep.subr.bf16.mxu0 0
      %302 = vmatpush1.bf16.xpose.msra.mxu0 0
      %303 = vmatprep.subr.bf16.mxu0 0
      %304 = vmatpush1.bf16.xpose.msra.mxu0 0
      %305 = vmatprep.mubr.bf16.mxu0 0
      %306 = vmatmul.mubr.bf16.gmra.mrb[0].mxu0 %v268
      %v307 = vpop.f32.mrb[0].mxu0
      %v308 = vadd.f32 0.0, %v307
      %v309 = vpop.f32.mrb[0].mxu0
      %v310 = vpop.f32.mrb[0].mxu0
      %v311 = vpop.f32.mrb[0].mxu0
      %312 = vdwg.mxu0
      %v314 = vsel %vm266, %v253, 0
      %v317 = vsel %vm266, %v258, 0
      %319 = vmatprep.subr.bf16.mxu0 0
      %320 = vmatpush1.bf16.xpose.msra.mxu0 %v317
      %321 = vmatprep.subr.bf16.mxu0 0
      %322 = vmatpush1.bf16.xpose.msra.mxu0 0
      %323 = vmatprep.subr.bf16.mxu0 0
      %324 = vmatpush1.bf16.xpose.msra.mxu0 0
      %325 = vmatprep.subr.bf16.mxu0 0
      %326 = vmatpush1.bf16.xpose.msra.mxu0 0
      %327 = vmatprep.subr.bf16.mxu0 0
      %328 = vmatpush1.bf16.xpose.msra.mxu0 0
      %329 = vmatprep.subr.bf16.mxu0 0
      %330 = vmatpush1.bf16.xpose.msra.mxu0 0
      %331 = vmatprep.subr.bf16.mxu0 0
      %332 = vmatpush1.bf16.xpose.msra.mxu0 0
      %333 = vmatprep.subr.bf16.mxu0 0
      %334 = vmatpush1.bf16.xpose.msra.mxu0 0
      %335 = vmatprep.subr.bf16.mxu0 0
      %336 = vmatpush1.bf16.xpose.msra.mxu0 0
      %337 = vmatprep.subr.bf16.mxu0 0
      %338 = vmatpush1.bf16.xpose.msra.mxu0 0
      %339 = vmatprep.subr.bf16.mxu0 0
      %340 = vmatpush1.bf16.xpose.msra.mxu0 0
      %341 = vmatprep.subr.bf16.mxu0 0
      %342 = vmatpush1.bf16.xpose.msra.mxu0 0
      %343 = vmatprep.subr.bf16.mxu0 0
      %344 = vmatpush1.bf16.xpose.msra.mxu0 0
      %345 = vmatprep.subr.bf16.mxu0 0
      %346 = vmatpush1.bf16.xpose.msra.mxu0 0
      %347 = vmatprep.subr.bf16.mxu0 0
      %348 = vmatpush1.bf16.xpose.msra.mxu0 0
      %349 = vmatprep.subr.bf16.mxu0 0
      %350 = vmatpush1.bf16.xpose.msra.mxu0 0
      %351 = vmatprep.mubr.bf16.mxu0 0
      %352 = vmatmul.mubr.bf16.gmra.mrb[0].mxu0 %v314
      %v353 = vpop.f32.mrb[0].mxu0
      %v354 = vadd.f32 0.0, %v353
      %v355 = vpop.f32.mrb[0].mxu0
      %v356 = vpop.f32.mrb[0].mxu0
      %v357 = vpop.f32.mrb[0].mxu0
      %358 = vdwg.mxu0
      %v360 = vsel %vm266, %v254, 0
      %v363 = vsel %vm266, %v259, 0
      %365 = vmatprep.subr.bf16.mxu0 0
      %366 = vmatpush1.bf16.xpose.msra.mxu0 %v363
      %367 = vmatprep.subr.bf16.mxu0 0
      %368 = vmatpush1.bf16.xpose.msra.mxu0 0
      %369 = vmatprep.subr.bf16.mxu0 0
      %370 = vmatpush1.bf16.xpose.msra.mxu0 0
      %371 = vmatprep.subr.bf16.mxu0 0
      %372 = vmatpush1.bf16.xpose.msra.mxu0 0
      %373 = vmatprep.subr.bf16.mxu0 0
      %374 = vmatpush1.bf16.xpose.msra.mxu0 0
      %375 = vmatprep.subr.bf16.mxu0 0
      %376 = vmatpush1.bf16.xpose.msra.mxu0 0
      %377 = vmatprep.subr.bf16.mxu0 0
      %378 = vmatpush1.bf16.xpose.msra.mxu0 0
      %379 = vmatprep.subr.bf16.mxu0 0
      %380 = vmatpush1.bf16.xpose.msra.mxu0 0
      %381 = vmatprep.subr.bf16.mxu0 0
      %382 = vmatpush1.bf16.xpose.msra.mxu0 0
      %383 = vmatprep.subr.bf16.mxu0 0
      %384 = vmatpush1.bf16.xpose.msra.mxu0 0
      %385 = vmatprep.subr.bf16.mxu0 0
      %386 = vmatpush1.bf16.xpose.msra.mxu0 0
      %387 = vmatprep.subr.bf16.mxu0 0
      %388 = vmatpush1.bf16.xpose.msra.mxu0 0
      %389 = vmatprep.subr.bf16.mxu0 0
      %390 = vmatpush1.bf16.xpose.msra.mxu0 0
      %391 = vmatprep.subr.bf16.mxu0 0
      %392 = vmatpush1.bf16.xpose.msra.mxu0 0
      %393 = vmatprep.subr.bf16.mxu0 0
      %394 = vmatpush1.bf16.xpose.msra.mxu0 0
      %395 = vmatprep.subr.bf16.mxu0 0
      %396 = vmatpush1.bf16.xpose.msra.mxu0 0
      %397 = vmatprep.mubr.bf16.mxu0 0
      %398 = vmatmul.mubr.bf16.gmra.mrb[0].mxu0 %v360
      %v399 = vpop.f32.mrb[0].mxu0
      %v400 = vadd.f32 0.0, %v399
      %v401 = vpop.f32.mrb[0].mxu0
      %v402 = vpop.f32.mrb[0].mxu0
      %v403 = vpop.f32.mrb[0].mxu0
      %404 = vdwg.mxu0
      %v406 = vsel %vm266, %v255, 0
      %v409 = vsel %vm266, %v260, 0
      %411 = vmatprep.subr.bf16.mxu0 0
      %412 = vmatpush1.bf16.xpose.msra.mxu0 %v409
      %413 = vmatprep.subr.bf16.mxu0 0
      %414 = vmatpush1.bf16.xpose.msra.mxu0 0
      %415 = vmatprep.subr.bf16.mxu0 0
      %416 = vmatpush1.bf16.xpose.msra.mxu0 0
      %417 = vmatprep.subr.bf16.mxu0 0
      %418 = vmatpush1.bf16.xpose.msra.mxu0 0
      %419 = vmatprep.subr.bf16.mxu0 0
      %420 = vmatpush1.bf16.xpose.msra.mxu0 0
      %421 = vmatprep.subr.bf16.mxu0 0
      %422 = vmatpush1.bf16.xpose.msra.mxu0 0
      %423 = vmatprep.subr.bf16.mxu0 0
      %424 = vmatpush1.bf16.xpose.msra.mxu0 0
      %425 = vmatprep.subr.bf16.mxu0 0
      %426 = vmatpush1.bf16.xpose.msra.mxu0 0
      %427 = vmatprep.subr.bf16.mxu0 0
      %428 = vmatpush1.bf16.xpose.msra.mxu0 0
      %429 = vmatprep.subr.bf16.mxu0 0
      %430 = vmatpush1.bf16.xpose.msra.mxu0 0
      %431 = vmatprep.subr.bf16.mxu0 0
      %432 = vmatpush1.bf16.xpose.msra.mxu0 0
      %433 = vmatprep.subr.bf16.mxu0 0
      %434 = vmatpush1.bf16.xpose.msra.mxu0 0
      %435 = vmatprep.subr.bf16.mxu0 0
      %436 = vmatpush1.bf16.xpose.msra.mxu0 0
      %437 = vmatprep.subr.bf16.mxu0 0
      %438 = vmatpush1.bf16.xpose.msra.mxu0 0
      %439 = vmatprep.subr.bf16.mxu0 0
      %440 = vmatpush1.bf16.xpose.msra.mxu0 0
      %441 = vmatprep.subr.bf16.mxu0 0
      %442 = vmatpush1.bf16.xpose.msra.mxu0 0
      %443 = vmatprep.mubr.bf16.mxu0 0
      %444 = vmatmul.mubr.bf16.gmra.mrb[0].mxu0 %v406
      %v445 = vpop.f32.mrb[0].mxu0
      %v446 = vadd.f32 0.0, %v445
      %v447 = vpop.f32.mrb[0].mxu0
      %v448 = vpop.f32.mrb[0].mxu0
      %v449 = vpop.f32.mrb[0].mxu0
      %450 = vdwg.mxu0
      %v451 = vsel %vm266, %v308, -inf
      %452 = vmax.xlane.f32.xlu0 %v451
      %v453 = vpop.xlane.xlu0 %452
      %v454 = vsel %vm266, %v354, -inf
      %455 = vmax.xlane.f32.xlu0 %v454
      %v456 = vpop.xlane.xlu0 %455
      %v457 = vsel %vm266, %v400, -inf
      %458 = vmax.xlane.f32.xlu0 %v457
      %v459 = vpop.xlane.xlu0 %458
      %v460 = vsel %vm266, %v446, -inf
      %461 = vmax.xlane.f32.xlu0 %v460
      %v462 = vpop.xlane.xlu0 %461
      %v463 = vsub.f32 %v308, %v453
      %v464 = vsub.f32 %v354, %v456
      %v465 = vsub.f32 %v400, %v459
      %v466 = vsub.f32 %v446, %v462
      %v467 = vmul.f32 %v463, 1.442695
      %v468 = vpow.pop %v467
      %v469 = vmul.f32 %v464, 1.442695
      %v470 = vpow.pop %v469
      %v471 = vmul.f32 %v465, 1.442695
      %v472 = vpow.pop %v471
      %v473 = vmul.f32 %v466, 1.442695
      %v474 = vpow.pop %v473
      %v475 = vsel %vm266, %v468, 0.0
      %476 = vadd.xlane.f32.xlu0 %v475
      %v477 = vpop.xlane.xlu0 %476
      %v478 = vsel %vm266, %v470, 0.0
      %479 = vadd.xlane.f32.xlu0 %v478
      %v480 = vpop.xlane.xlu0 %479
      %v481 = vsel %vm266, %v472, 0.0
      %482 = vadd.xlane.f32.xlu0 %v481
      %v483 = vpop.xlane.xlu0 %482
      %v484 = vsel %vm266, %v474, 0.0
      %485 = vadd.xlane.f32.xlu0 %v484
      %v486 = vpop.xlane.xlu0 %485
      %v487 = vrcp.pop %v477
      %v488 = vrcp.pop %v480
      %v489 = vrcp.pop %v483
      %v490 = vrcp.pop %v486
      %v491 = vmul.f32 %v487, 0.35355338
      %v492 = vmul.f32 %v488, 0.35355338
      %v493 = vmul.f32 %v489, 0.35355338
      %v494 = vmul.f32 %v490, 0.35355338
      %v495 = vmul.f32 %v468, %v491
      %v496 = vmul.f32 %v470, %v492
      %v497 = vmul.f32 %v472, %v493
      %v498 = vmul.f32 %v474, %v494
      %v499 = vpack.c.bf16 %v495, %v495
      %v500 = vpack.c.bf16 %v496, %v496
      %v501 = vpack.c.bf16 %v497, %v497
      %v502 = vpack.c.bf16 %v498, %v498
      %503 = vxpose.xlu0.c.b16.start [1/8] %v262, 128
      %504 = vxpose.xlu0.c.b16.cont [2/8] 0, 128
      %505 = vxpose.xlu0.c.b16.cont [3/8] 0, 128
      %506 = vxpose.xlu0.c.b16.cont [4/8] 0, 128
      %507 = vxpose.xlu0.c.b16.cont [5/8] 0, 128
      %508 = vxpose.xlu0.c.b16.cont [6/8] 0, 128
      %509 = vxpose.xlu0.c.b16.cont [7/8] 0, 128
      %510 = vxpose.xlu0.c.b16.end [8/8] 0, 128
      %v511 = vpop.trf.xlu0
      %v512 = vpop.trf.xlu0
      %v513 = vpop.trf.xlu0
      %v514 = vpop.trf.xlu0
      %v515 = vpop.trf.xlu0
      %v516 = vpop.trf.xlu0
      %v517 = vpop.trf.xlu0
      %v518 = vpop.trf.xlu0
      %v520 = vsel %vm266, %v511, 0
      %v523 = vsel %vm266, %v499, 0
      %525 = vmatprep.subr.bf16.mxu0 0
      %526 = vmatpush1.bf16.xpose.msra.mxu0 %v523
      %527 = vmatprep.subr.bf16.mxu0 0
      %528 = vmatpush1.bf16.xpose.msra.mxu0 0
      %529 = vmatprep.subr.bf16.mxu0 0
      %530 = vmatpush1.bf16.xpose.msra.mxu0 0
      %531 = vmatprep.subr.bf16.mxu0 0
      %532 = vmatpush1.bf16.xpose.msra.mxu0 0
      %533 = vmatprep.subr.bf16.mxu0 0
      %534 = vmatpush1.bf16.xpose.msra.mxu0 0
      %535 = vmatprep.subr.bf16.mxu0 0
      %536 = vmatpush1.bf16.xpose.msra.mxu0 0
      %537 = vmatprep.subr.bf16.mxu0 0
      %538 = vmatpush1.bf16.xpose.msra.mxu0 0
      %539 = vmatprep.subr.bf16.mxu0 0
      %540 = vmatpush1.bf16.xpose.msra.mxu0 0
      %541 = vmatprep.subr.bf16.mxu0 0
      %542 = vmatpush1.bf16.xpose.msra.mxu0 0
      %543 = vmatprep.subr.bf16.mxu0 0
      %544 = vmatpush1.bf16.xpose.msra.mxu0 0
      %545 = vmatprep.subr.bf16.mxu0 0
      %546 = vmatpush1.bf16.xpose.msra.mxu0 0
      %547 = vmatprep.subr.bf16.mxu0 0
      %548 = vmatpush1.bf16.xpose.msra.mxu0 0
      %549 = vmatprep.subr.bf16.mxu0 0
      %550 = vmatpush1.bf16.xpose.msra.mxu0 0
      %551 = vmatprep.subr.bf16.mxu0 0
      %552 = vmatpush1.bf16.xpose.msra.mxu0 0
      %553 = vmatprep.subr.bf16.mxu0 0
      %554 = vmatpush1.bf16.xpose.msra.mxu0 0
      %555 = vmatprep.subr.bf16.mxu0 0
      %556 = vmatpush1.bf16.xpose.msra.mxu0 0
      %557 = vmatprep.mubr.bf16.mxu0 0
      %558 = vmatmul.mubr.bf16.gmra.mrb[0].mxu0 %v520
      %v559 = vpop.f32.mrb[0].mxu0
      %v560 = vadd.f32 0.0, %v559
      %v561 = vpop.f32.mrb[0].mxu0
      %v562 = vpop.f32.mrb[0].mxu0
      %v563 = vpop.f32.mrb[0].mxu0
      %564 = vdwg.mxu0
      %565 = vxpose.xlu0.c.b16.start [1/8] %v263, 128
      %566 = vxpose.xlu0.c.b16.cont [2/8] 0, 128
      %567 = vxpose.xlu0.c.b16.cont [3/8] 0, 128
      %568 = vxpose.xlu0.c.b16.cont [4/8] 0, 128
      %569 = vxpose.xlu0.c.b16.cont [5/8] 0, 128
      %570 = vxpose.xlu0.c.b16.cont [6/8] 0, 128
      %571 = vxpose.xlu0.c.b16.cont [7/8] 0, 128
      %572 = vxpose.xlu0.c.b16.end [8/8] 0, 128
      %v573 = vpop.trf.xlu0
      %v574 = vpop.trf.xlu0
      %v575 = vpop.trf.xlu0
      %v576 = vpop.trf.xlu0
      %v577 = vpop.trf.xlu0
      %v578 = vpop.trf.xlu0
      %v579 = vpop.trf.xlu0
      %v580 = vpop.trf.xlu0
      %v582 = vsel %vm266, %v573, 0
      %v585 = vsel %vm266, %v500, 0
      %587 = vmatprep.subr.bf16.mxu0 0
      %588 = vmatpush1.bf16.xpose.msra.mxu0 %v585
      %589 = vmatprep.subr.bf16.mxu0 0
      %590 = vmatpush1.bf16.xpose.msra.mxu0 0
      %591 = vmatprep.subr.bf16.mxu0 0
      %592 = vmatpush1.bf16.xpose.msra.mxu0 0
      %593 = vmatprep.subr.bf16.mxu0 0
      %594 = vmatpush1.bf16.xpose.msra.mxu0 0
      %595 = vmatprep.subr.bf16.mxu0 0
      %596 = vmatpush1.bf16.xpose.msra.mxu0 0
      %597 = vmatprep.subr.bf16.mxu0 0
      %598 = vmatpush1.bf16.xpose.msra.mxu0 0
      %599 = vmatprep.subr.bf16.mxu0 0
      %600 = vmatpush1.bf16.xpose.msra.mxu0 0
      %601 = vmatprep.subr.bf16.mxu0 0
      %602 = vmatpush1.bf16.xpose.msra.mxu0 0
      %603 = vmatprep.subr.bf16.mxu0 0
      %604 = vmatpush1.bf16.xpose.msra.mxu0 0
      %605 = vmatprep.subr.bf16.mxu0 0
      %606 = vmatpush1.bf16.xpose.msra.mxu0 0
      %607 = vmatprep.subr.bf16.mxu0 0
      %608 = vmatpush1.bf16.xpose.msra.mxu0 0
      %609 = vmatprep.subr.bf16.mxu0 0
      %610 = vmatpush1.bf16.xpose.msra.mxu0 0
      %611 = vmatprep.subr.bf16.mxu0 0
      %612 = vmatpush1.bf16.xpose.msra.mxu0 0
      %613 = vmatprep.subr.bf16.mxu0 0
      %614 = vmatpush1.bf16.xpose.msra.mxu0 0
      %615 = vmatprep.subr.bf16.mxu0 0
      %616 = vmatpush1.bf16.xpose.msra.mxu0 0
      %617 = vmatprep.subr.bf16.mxu0 0
      %618 = vmatpush1.bf16.xpose.msra.mxu0 0
      %619 = vmatprep.mubr.bf16.mxu0 0
      %620 = vmatmul.mubr.bf16.gmra.mrb[0].mxu0 %v582
      %v621 = vpop.f32.mrb[0].mxu0
      %v622 = vadd.f32 0.0, %v621
      %v623 = vpop.f32.mrb[0].mxu0
      %v624 = vpop.f32.mrb[0].mxu0
      %v625 = vpop.f32.mrb[0].mxu0
      %626 = vdwg.mxu0
      %627 = vxpose.xlu0.c.b16.start [1/8] %v264, 128
      %628 = vxpose.xlu0.c.b16.cont [2/8] 0, 128
      %629 = vxpose.xlu0.c.b16.cont [3/8] 0, 128
      %630 = vxpose.xlu0.c.b16.cont [4/8] 0, 128
      %631 = vxpose.xlu0.c.b16.cont [5/8] 0, 128
      %632 = vxpose.xlu0.c.b16.cont [6/8] 0, 128
      %633 = vxpose.xlu0.c.b16.cont [7/8] 0, 128
      %634 = vxpose.xlu0.c.b16.end [8/8] 0, 128
      %v635 = vpop.trf.xlu0
      %v636 = vpop.trf.xlu0
      %v637 = vpop.trf.xlu0
      %v638 = vpop.trf.xlu0
      %v639 = vpop.trf.xlu0
      %v640 = vpop.trf.xlu0
      %v641 = vpop.trf.xlu0
      %v642 = vpop.trf.xlu0
      %v644 = vsel %vm266, %v635, 0
      %v647 = vsel %vm266, %v501, 0
      %649 = vmatprep.subr.bf16.mxu0 0
      %650 = vmatpush1.bf16.xpose.msra.mxu0 %v647
      %651 = vmatprep.subr.bf16.mxu0 0
      %652 = vmatpush1.bf16.xpose.msra.mxu0 0
      %653 = vmatprep.subr.bf16.mxu0 0
      %654 = vmatpush1.bf16.xpose.msra.mxu0 0
      %655 = vmatprep.subr.bf16.mxu0 0
      %656 = vmatpush1.bf16.xpose.msra.mxu0 0
      %657 = vmatprep.subr.bf16.mxu0 0
      %658 = vmatpush1.bf16.xpose.msra.mxu0 0
      %659 = vmatprep.subr.bf16.mxu0 0
      %660 = vmatpush1.bf16.xpose.msra.mxu0 0
      %661 = vmatprep.subr.bf16.mxu0 0
      %662 = vmatpush1.bf16.xpose.msra.mxu0 0
      %663 = vmatprep.subr.bf16.mxu0 0
      %664 = vmatpush1.bf16.xpose.msra.mxu0 0
      %665 = vmatprep.subr.bf16.mxu0 0
      %666 = vmatpush1.bf16.xpose.msra.mxu0 0
      %667 = vmatprep.subr.bf16.mxu0 0
      %668 = vmatpush1.bf16.xpose.msra.mxu0 0
      %669 = vmatprep.subr.bf16.mxu0 0
      %670 = vmatpush1.bf16.xpose.msra.mxu0 0
      %671 = vmatprep.subr.bf16.mxu0 0
      %672 = vmatpush1.bf16.xpose.msra.mxu0 0
      %673 = vmatprep.subr.bf16.mxu0 0
      %674 = vmatpush1.bf16.xpose.msra.mxu0 0
      %675 = vmatprep.subr.bf16.mxu0 0
      %676 = vmatpush1.bf16.xpose.msra.mxu0 0
      %677 = vmatprep.subr.bf16.mxu0 0
      %678 = vmatpush1.bf16.xpose.msra.mxu0 0
      %679 = vmatprep.subr.bf16.mxu0 0
      %680 = vmatpush1.bf16.xpose.msra.mxu0 0
      %681 = vmatprep.mubr.bf16.mxu0 0
      %682 = vmatmul.mubr.bf16.gmra.mrb[0].mxu0 %v644
      %v683 = vpop.f32.mrb[0].mxu0
      %v684 = vadd.f32 0.0, %v683
      %v685 = vpop.f32.mrb[0].mxu0
      %v686 = vpop.f32.mrb[0].mxu0
      %v687 = vpop.f32.mrb[0].mxu0
      %688 = vdwg.mxu0
      %689 = vxpose.xlu0.c.b16.start [1/8] %v265, 128
      %690 = vxpose.xlu0.c.b16.cont [2/8] 0, 128
      %691 = vxpose.xlu0.c.b16.cont [3/8] 0, 128
      %692 = vxpose.xlu0.c.b16.cont [4/8] 0, 128
      %693 = vxpose.xlu0.c.b16.cont [5/8] 0, 128
      %694 = vxpose.xlu0.c.b16.cont [6/8] 0, 128
      %695 = vxpose.xlu0.c.b16.cont [7/8] 0, 128
      %696 = vxpose.xlu0.c.b16.end [8/8] 0, 128
      %v697 = vpop.trf.xlu0
      %v698 = vpop.trf.xlu0
      %v699 = vpop.trf.xlu0
      %v700 = vpop.trf.xlu0
      %v701 = vpop.trf.xlu0
      %v702 = vpop.trf.xlu0
      %v703 = vpop.trf.xlu0
      %v704 = vpop.trf.xlu0
      %v706 = vsel %vm266, %v697, 0
      %v709 = vsel %vm266, %v502, 0
      %711 = vmatprep.subr.bf16.mxu0 0
      %712 = vmatpush1.bf16.xpose.msra.mxu0 %v709
      %713 = vmatprep.subr.bf16.mxu0 0
      %714 = vmatpush1.bf16.xpose.msra.mxu0 0
      %715 = vmatprep.subr.bf16.mxu0 0
      %716 = vmatpush1.bf16.xpose.msra.mxu0 0
      %717 = vmatprep.subr.bf16.mxu0 0
      %718 = vmatpush1.bf16.xpose.msra.mxu0 0
      %719 = vmatprep.subr.bf16.mxu0 0
      %720 = vmatpush1.bf16.xpose.msra.mxu0 0
      %721 = vmatprep.subr.bf16.mxu0 0
      %722 = vmatpush1.bf16.xpose.msra.mxu0 0
      %723 = vmatprep.subr.bf16.mxu0 0
      %724 = vmatpush1.bf16.xpose.msra.mxu0 0
      %725 = vmatprep.subr.bf16.mxu0 0
      %726 = vmatpush1.bf16.xpose.msra.mxu0 0
      %727 = vmatprep.subr.bf16.mxu0 0
      %728 = vmatpush1.bf16.xpose.msra.mxu0 0
      %729 = vmatprep.subr.bf16.mxu0 0
      %730 = vmatpush1.bf16.xpose.msra.mxu0 0
      %731 = vmatprep.subr.bf16.mxu0 0
      %732 = vmatpush1.bf16.xpose.msra.mxu0 0
      %733 = vmatprep.subr.bf16.mxu0 0
      %734 = vmatpush1.bf16.xpose.msra.mxu0 0
      %735 = vmatprep.subr.bf16.mxu0 0
      %736 = vmatpush1.bf16.xpose.msra.mxu0 0
      %737 = vmatprep.subr.bf16.mxu0 0
      %738 = vmatpush1.bf16.xpose.msra.mxu0 0
      %739 = vmatprep.subr.bf16.mxu0 0
      %740 = vmatpush1.bf16.xpose.msra.mxu0 0
      %741 = vmatprep.subr.bf16.mxu0 0
      %742 = vmatpush1.bf16.xpose.msra.mxu0 0
      %743 = vmatprep.mubr.bf16.mxu0 0
      %744 = vmatmul.mubr.bf16.gmra.mrb[0].mxu0 %v706
      %v745 = vpop.f32.mrb[0].mxu0
      %v746 = vadd.f32 0.0, %v745
      %v747 = vpop.f32.mrb[0].mxu0
      %v748 = vpop.f32.mrb[0].mxu0
      %v749 = vpop.f32.mrb[0].mxu0
      %750 = vdwg.mxu0
      %751 = vxpose.xlu0.b32.start [1/16] %v560, 128
      %752 = vxpose.xlu0.b32.cont [2/16] 0.0, 128
      %753 = vxpose.xlu0.b32.cont [3/16] 0.0, 128
      %754 = vxpose.xlu0.b32.cont [4/16] 0.0, 128
      %755 = vxpose.xlu0.b32.cont [5/16] 0.0, 128
      %756 = vxpose.xlu0.b32.cont [6/16] 0.0, 128
      %757 = vxpose.xlu0.b32.cont [7/16] 0.0, 128
      %758 = vxpose.xlu0.b32.cont [8/16] 0.0, 128
      %759 = vxpose.xlu0.b32.cont [9/16] 0.0, 128
      %760 = vxpose.xlu0.b32.cont [10/16] 0.0, 128
      %761 = vxpose.xlu0.b32.cont [11/16] 0.0, 128
      %762 = vxpose.xlu0.b32.cont [12/16] 0.0, 128
      %763 = vxpose.xlu0.b32.cont [13/16] 0.0, 128
      %764 = vxpose.xlu0.b32.cont [14/16] 0.0, 128
      %765 = vxpose.xlu0.b32.cont [15/16] 0.0, 128
      %766 = vxpose.xlu0.b32.end [16/16] 0.0, 128
      %v767 = vpop.trf.xlu0
      %v768 = vpop.trf.xlu0
      %v769 = vpop.trf.xlu0
      %v770 = vpop.trf.xlu0
      %v771 = vpop.trf.xlu0
      %v772 = vpop.trf.xlu0
      %v773 = vpop.trf.xlu0
      %v774 = vpop.trf.xlu0
      %v775 = vpop.trf.xlu0
      %v776 = vpop.trf.xlu0
      %v777 = vpop.trf.xlu0
      %v778 = vpop.trf.xlu0
      %v779 = vpop.trf.xlu0
      %v780 = vpop.trf.xlu0
      %v781 = vpop.trf.xlu0
      %v782 = vpop.trf.xlu0
      %783 = vxpose.xlu0.b32.start [1/16] %v622, 128
      %784 = vxpose.xlu0.b32.cont [2/16] 0.0, 128
      %785 = vxpose.xlu0.b32.cont [3/16] 0.0, 128
      %786 = vxpose.xlu0.b32.cont [4/16] 0.0, 128
      %787 = vxpose.xlu0.b32.cont [5/16] 0.0, 128
      %788 = vxpose.xlu0.b32.cont [6/16] 0.0, 128
      %789 = vxpose.xlu0.b32.cont [7/16] 0.0, 128
      %790 = vxpose.xlu0.b32.cont [8/16] 0.0, 128
      %791 = vxpose.xlu0.b32.cont [9/16] 0.0, 128
      %792 = vxpose.xlu0.b32.cont [10/16] 0.0, 128
      %793 = vxpose.xlu0.b32.cont [11/16] 0.0, 128
      %794 = vxpose.xlu0.b32.cont [12/16] 0.0, 128
      %795 = vxpose.xlu0.b32.cont [13/16] 0.0, 128
      %796 = vxpose.xlu0.b32.cont [14/16] 0.0, 128
      %797 = vxpose.xlu0.b32.cont [15/16] 0.0, 128
      %798 = vxpose.xlu0.b32.end [16/16] 0.0, 128
      %v799 = vpop.trf.xlu0
      %v800 = vpop.trf.xlu0
      %v801 = vpop.trf.xlu0
      %v802 = vpop.trf.xlu0
      %v803 = vpop.trf.xlu0
      %v804 = vpop.trf.xlu0
      %v805 = vpop.trf.xlu0
      %v806 = vpop.trf.xlu0
      %v807 = vpop.trf.xlu0
      %v808 = vpop.trf.xlu0
      %v809 = vpop.trf.xlu0
      %v810 = vpop.trf.xlu0
      %v811 = vpop.trf.xlu0
      %v812 = vpop.trf.xlu0
      %v813 = vpop.trf.xlu0
      %v814 = vpop.trf.xlu0
      %815 = vxpose.xlu0.b32.start [1/16] %v684, 128
      %816 = vxpose.xlu0.b32.cont [2/16] 0.0, 128
      %817 = vxpose.xlu0.b32.cont [3/16] 0.0, 128
      %818 = vxpose.xlu0.b32.cont [4/16] 0.0, 128
      %819 = vxpose.xlu0.b32.cont [5/16] 0.0, 128
      %820 = vxpose.xlu0.b32.cont [6/16] 0.0, 128
      %821 = vxpose.xlu0.b32.cont [7/16] 0.0, 128
      %822 = vxpose.xlu0.b32.cont [8/16] 0.0, 128
      %823 = vxpose.xlu0.b32.cont [9/16] 0.0, 128
      %824 = vxpose.xlu0.b32.cont [10/16] 0.0, 128
      %825 = vxpose.xlu0.b32.cont [11/16] 0.0, 128
      %826 = vxpose.xlu0.b32.cont [12/16] 0.0, 128
      %827 = vxpose.xlu0.b32.cont [13/16] 0.0, 128
      %828 = vxpose.xlu0.b32.cont [14/16] 0.0, 128
      %829 = vxpose.xlu0.b32.cont [15/16] 0.0, 128
      %830 = vxpose.xlu0.b32.end [16/16] 0.0, 128
      %v831 = vpop.trf.xlu0
      %v832 = vpop.trf.xlu0
      %v833 = vpop.trf.xlu0
      %v834 = vpop.trf.xlu0
      %v835 = vpop.trf.xlu0
      %v836 = vpop.trf.xlu0
      %v837 = vpop.trf.xlu0
      %v838 = vpop.trf.xlu0
      %v839 = vpop.trf.xlu0
      %v840 = vpop.trf.xlu0
      %v841 = vpop.trf.xlu0
      %v842 = vpop.trf.xlu0
      %v843 = vpop.trf.xlu0
      %v844 = vpop.trf.xlu0
      %v845 = vpop.trf.xlu0
      %v846 = vpop.trf.xlu0
      %847 = vxpose.xlu0.b32.start [1/16] %v746, 128
      %848 = vxpose.xlu0.b32.cont [2/16] 0.0, 128
      %849 = vxpose.xlu0.b32.cont [3/16] 0.0, 128
      %850 = vxpose.xlu0.b32.cont [4/16] 0.0, 128
      %851 = vxpose.xlu0.b32.cont [5/16] 0.0, 128
      %852 = vxpose.xlu0.b32.cont [6/16] 0.0, 128
      %853 = vxpose.xlu0.b32.cont [7/16] 0.0, 128
      %854 = vxpose.xlu0.b32.cont [8/16] 0.0, 128
      %855 = vxpose.xlu0.b32.cont [9/16] 0.0, 128
      %856 = vxpose.xlu0.b32.cont [10/16] 0.0, 128
      %857 = vxpose.xlu0.b32.cont [11/16] 0.0, 128
      %858 = vxpose.xlu0.b32.cont [12/16] 0.0, 128
      %859 = vxpose.xlu0.b32.cont [13/16] 0.0, 128
      %860 = vxpose.xlu0.b32.cont [14/16] 0.0, 128
      %861 = vxpose.xlu0.b32.cont [15/16] 0.0, 128
      %862 = vxpose.xlu0.b32.end [16/16] 0.0, 128
      %v863 = vpop.trf.xlu0
      %v864 = vpop.trf.xlu0
      %v865 = vpop.trf.xlu0
      %v866 = vpop.trf.xlu0
      %v867 = vpop.trf.xlu0
      %v868 = vpop.trf.xlu0
      %v869 = vpop.trf.xlu0
      %v870 = vpop.trf.xlu0
      %v871 = vpop.trf.xlu0
      %v872 = vpop.trf.xlu0
      %v873 = vpop.trf.xlu0
      %v874 = vpop.trf.xlu0
      %v875 = vpop.trf.xlu0
      %v876 = vpop.trf.xlu0
      %v877 = vpop.trf.xlu0
      %v878 = vpop.trf.xlu0
      %v879 = vcombine.low %v767, %v831
      %v880 = vcombine.high %v767, %v831
      %v882 = vunpack.c.l.s4 1983009808
      %v883 = vunpack.c.0.s8 %v882
      %v884 = vlaneseq
      %v885 = vshrl.u32 %v884, 7
      %v886 = vsub.s32 %v883, %v885
      %v887 = vrot.slane %v879, %v886
      %v889 = vunpack.c.l.s4 1983009808
      %v890 = vunpack.c.0.s8 %v889
      %v891 = vlaneseq
      %v892 = vshrl.u32 %v891, 7
      %v893 = vsub.s32 %v890, %v892
      %v894 = vrot.slane %v880, %v893
      %v895 = vcombine.low %v799, %v863
      %v896 = vcombine.high %v799, %v863
      %v898 = vunpack.c.l.s4 1983009808
      %v899 = vunpack.c.0.s8 %v898
      %v900 = vlaneseq
      %v901 = vshrl.u32 %v900, 7
      %v902 = vsub.s32 %v899, %v901
      %v903 = vrot.slane %v895, %v902
      %v905 = vunpack.c.l.s4 1983009808
      %v906 = vunpack.c.0.s8 %v905
      %v907 = vlaneseq
      %v908 = vshrl.u32 %v907, 7
      %v909 = vsub.s32 %v906, %v908
      %v910 = vrot.slane %v896, %v909
      %v911 = vcombine.low %v887, %v903
      %v912 = vcombine.high %v887, %v903
      %v914 = vunpack.c.l.s4 1934713408
      %v915 = vunpack.c.0.s8 %v914
      %v916 = vlaneseq
      %v917 = vshrl.u32 %v916, 7
      %v918 = vsub.s32 %v915, %v917
      %v919 = vrot.slane %v911, %v918
      %v921 = vunpack.c.l.s4 1934713408
      %v922 = vunpack.c.0.s8 %v921
      %v923 = vlaneseq
      %v924 = vshrl.u32 %v923, 7
      %v925 = vsub.s32 %v922, %v924
      %v926 = vrot.slane %v912, %v925
      %v927 = vcombine.low %v894, %v910
      %v928 = vcombine.high %v894, %v910
      %v930 = vunpack.c.l.s4 1934713408
      %v931 = vunpack.c.0.s8 %v930
      %v932 = vlaneseq
      %v933 = vshrl.u32 %v932, 7
      %v934 = vsub.s32 %v931, %v933
      %v935 = vrot.slane %v927, %v934
      %v937 = vunpack.c.l.s4 1934713408
      %v938 = vunpack.c.0.s8 %v937
      %v939 = vlaneseq
      %v940 = vshrl.u32 %v939, 7
      %v941 = vsub.s32 %v938, %v940
      %v942 = vrot.slane %v928, %v941
      %v943 = vcombine.high %v919, 0.0
      %v944 = vcombine.high %v926, 0.0
      %v945 = vcombine.high %v935, 0.0
      %v946 = vcombine.high %v942, 0.0
      %v947 = vcombine.low %v919, %v926
      %v949 = vunpack.c.l.s4 1983009808
      %v950 = vunpack.c.0.s8 %v949
      %v951 = vlaneseq
      %v952 = vshrl.u32 %v951, 7
      %v953 = vsub.s32 %v950, %v952
      %v954 = vrot.slane %v947, %v953
      %v955 = vcombine.low %v943, %v944
      %v957 = vunpack.c.l.s4 1983009808
      %v958 = vunpack.c.0.s8 %v957
      %v959 = vlaneseq
      %v960 = vshrl.u32 %v959, 7
      %v961 = vsub.s32 %v958, %v960
      %v962 = vrot.slane %v955, %v961
      %v963 = vcombine.low %v935, %v942
      %v965 = vunpack.c.l.s4 1983009808
      %v966 = vunpack.c.0.s8 %v965
      %v967 = vlaneseq
      %v968 = vshrl.u32 %v967, 7
      %v969 = vsub.s32 %v966, %v968
      %v970 = vrot.slane %v963, %v969
      %v971 = vcombine.low %v945, %v946
      %v973 = vunpack.c.l.s4 1983009808
      %v974 = vunpack.c.0.s8 %v973
      %v975 = vlaneseq
      %v976 = vshrl.u32 %v975, 7
      %v977 = vsub.s32 %v974, %v976
      %v978 = vrot.slane %v971, %v977
      %v979 = vcombine.low %v954, %v962
      %v980 = vcombine.high %v954, %v962
      %v982 = vunpack.c.l.s4 1934713408
      %v983 = vunpack.c.0.s8 %v982
      %v984 = vlaneseq
      %v985 = vshrl.u32 %v984, 7
      %v986 = vsub.s32 %v983, %v985
      %v987 = vrot.slane %v979, %v986
      %v989 = vunpack.c.l.s4 1934713408
      %v990 = vunpack.c.0.s8 %v989
      %v991 = vlaneseq
      %v992 = vshrl.u32 %v991, 7
      %v993 = vsub.s32 %v990, %v992
      %v994 = vrot.slane %v980, %v993
      %v995 = vcombine.low %v970, %v978
      %v996 = vcombine.high %v970, %v978
      %v998 = vunpack.c.l.s4 1934713408
      %v999 = vunpack.c.0.s8 %v998
      %v1000 = vlaneseq
      %v1001 = vshrl.u32 %v1000, 7
      %v1002 = vsub.s32 %v999, %v1001
      %v1003 = vrot.slane %v995, %v1002
      %v1005 = vunpack.c.l.s4 1934713408
      %v1006 = vunpack.c.0.s8 %v1005
      %v1007 = vlaneseq
      %v1008 = vshrl.u32 %v1007, 7
      %v1009 = vsub.s32 %v1006, %v1008
      %v1010 = vrot.slane %v996, %v1009
      %v1011 = vcombine.low %v987, %v1003
      %v1012 = vcombine.high %v987, %v1003
      %v1013 = vcombine.low %v994, %v1010
      %v1014 = vcombine.high %v994, %v1010
      %1016 = vrot.lane.b32.xlu0 %v1012, 8
      %v1017 = vpop.permute.xlu0 %1016
      %1020 = vrot.lane.b32.xlu0 %v1013, 16
      %v1021 = vpop.permute.xlu0 %1020
      %1024 = vrot.lane.b32.xlu0 %v1014, 24
      %v1025 = vpop.permute.xlu0 %1024
      %v1027 = vsel %vm266, %v1011, %v1017
      %vm1028 = vcmask 130048
      %v1029 = vsel %vm1028, %v1027, %v1021
      %vm1030 = vcmask 195584
      %v1031 = vsel %vm1030, %v1029, %v1025
      %v1032 = vld [vmem:[%s242] sm:$0xff]
      %v1033 = vadd.f32 %v1031, %v1032
      %vm1034 = vcmask 261120
      %1035 = vst.msk [vmem:[%s246] sm:$0xff] %vm1034, %v1033
      %v1036 = vsel %vm1034, %v1033, 0.0
      %1037 = vadd.xlane.f32.xlu0 %v1036
      %v1038 = vpop.xlane.xlu0 %1037
      %v1039 = vrcp.pop 32.0
      %v1040 = vmul.f32 %v1038, %v1039
      %v1041 = vmul.f32 %v1033, %v1033
      %v1042 = vsel %vm1034, %v1041, 0.0
      %1043 = vadd.xlane.f32.xlu0 %v1042
      %v1044 = vpop.xlane.xlu0 %1043
      %v1045 = vmul.f32 %v1044, %v1039
      %v1046 = vmul.f32 %v1040, %v1040
      %v1047 = vsub.f32 %v1045, %v1046
      %v1048 = vadd.f32 %v1047, 1e-05
      %v1049 = vrsqrt.pop %v1048
      %v1050 = vsub.f32 %v1033, %v1040
      %v1051 = vmul.f32 %v1050, %v1049
      %v1052 = vld [vmem:[%s2] sm:$0x1]
      %v1054 = vlaneseq
      %v1055 = vshrl.u32 %v1054, 7
      %v1056 = vsub.s32 0, %v1055
      %v1057 = vrot.slane %v1052, %v1056
      %v1059 = vmul.f32 %v1051, %v1057
      %v1060 = vld [vmem:[%s3] sm:$0x1]
      %v1062 = vlaneseq
      %v1063 = vshrl.u32 %v1062, 7
      %v1064 = vsub.s32 0, %v1063
      %v1065 = vrot.slane %v1060, %v1064
      %v1067 = vadd.f32 %v1059, %v1065
      %v1068 = vpack.c.bf16 %v1067, %v1067
      %vm1069 = vcmask 257024
      %1070 = vst.msk [vmem:[%s250] sm:$0xf] %vm1069, %v1068
      %p1071 = scmp.lt.s32.totalorder %s17, 1
      %s1072 = scalar_select %p1071, %s17, 1
      %s1073 = smul.addr %s1072, 8
      %s1074 = scalar_lea.vmem %s4, %s1073
      %p1075 = scmp.lt.s32.totalorder %s17, 1
      %s1076 = scalar_select %p1075, %s17, 1
      %s1077 = smul.addr %s1076, 4
      %s1078 = scalar_lea.vmem %s5, %s1077
      // Predicated region
      $region37: #{master_encoder_forward.9} parent=35 // pred_check
        %p1079 = pneg %p129
      $region38: #{master_encoder_forward.9} parent=35 // pred_check_branch
        %1081 = sbr.rel (%p1079) target = $region40
      $region39: #{master_encoder_forward.9} parent=35 // pred_region
        _
      $region40: #{master_encoder_forward.9} parent=35 // pred_fallthru
        _
      // Predicated region
      $region41: #{master_encoder_forward.9} parent=35 // pred_check
        %p1082 = pneg %p155
      $region42: #{master_encoder_forward.9} parent=35 // pred_check_branch
        %1084 = sbr.rel (%p1082) target = $region44
      $region43: #{master_encoder_forward.9} parent=35 // pred_region
        _
      $region44: #{master_encoder_forward.9} parent=35 // pred_fallthru
        _
    $region36: #{master_encoder_forward.9} parent=5 // pred_fallthru
      _
    %p1085 = scmp.le.s32.totalorder 2, %s12
    // Predicated region
    $region45: #{master_encoder_forward.9} parent=5 // pred_check
      %p1086 = pneg %p1085
    $region46: #{master_encoder_forward.9} parent=5 // pred_check_branch
      %1088 = sbr.rel (%p1086) target = $region48
    $region47: #{master_encoder_forward.9} parent=5 // pred_region
      %s1089 = ssub.s32 %s12, 2
      // Predicated region
      $region49: #{master_encoder_forward.9} parent=47 // pred_check
        %p1090 = pneg %p135
      $region50: #{master_encoder_forward.9} parent=47 // pred_check_branch
        %1092 = sbr.rel (%p1090) target = $region52
      $region51: #{master_encoder_forward.9} parent=47 // pred_region
        %p1093 = scmp.lt.s32.totalorder %s18, 1
        %s1094 = scalar_select %p1093, %s18, 1
        %s1095 = smul.addr %s1094, 8
        %s1096 = scalar_lea.vmem %s4, %s1095
      $region52: #{master_encoder_forward.9} parent=47 // pred_fallthru
        _
      // Predicated region
      $region53: #{master_encoder_forward.9} parent=47 // pred_check
        %p1097 = pneg %p161
      $region54: #{master_encoder_forward.9} parent=47 // pred_check_branch
        %1099 = sbr.rel (%p1097) target = $region56
      $region55: #{master_encoder_forward.9} parent=47 // pred_region
        %p1100 = scmp.lt.s32.totalorder %s18, 1
        %s1101 = scalar_select %p1100, %s18, 1
        %s1102 = smul.addr %s1101, 4
        %s1103 = scalar_lea.vmem %s5, %s1102
      $region56: #{master_encoder_forward.9} parent=47 // pred_fallthru
        _
    $region48: #{master_encoder_forward.9} parent=5 // pred_fallthru
      _
  $region6: #{master_encoder_forward.9} parent=0 // loop_footer
    %s16 = sadd.s32 1, %s12
  $region7: #{master_encoder_forward.9} parent=0 // loop_footer_branch
    %11 = sbr.rel target = $region3
  $region8: #{master_encoder_forward.9} parent=0 // loop_exit
    _

// kernel: master_encoder_forward.10
$region0: #{master_encoder_forward.10}
  #allocation0 [shape = 'u32[]', space=smem, size = 0x4, offset = 0x4, fixed_abs, tag = 'smem constant byte address 0x4 - core index']
  #allocation1 [shape = 'u32[144,128]{1,0:T(1,128)}', space=vmem, size = 0x12000, scoped, tag = 'internal scratch']
  #allocation2 [shape = 'f32[2,256]{1,0:T(2,128)}', space=vmem, size = 0x800, scoped, tag = 'scratch operand']
  %s0 = inlined_call_operand.vmem [shape: bf16[2,256], index: 0, kind: input, shape index: {}]
  %s1 = inlined_call_operand.vmem [shape: bf16[256,512], index: 1, kind: input, shape index: {}]
  %s2 = inlined_call_operand.vmem [shape: f32[1,512], index: 2, kind: input, shape index: {}]
  %s3 = inlined_call_operand.vmem [shape: bf16[2,512], index: 3, kind: output, shape index: {}]
  %s4 = sld [smem:[#allocation0]]
  $region91: #{master_encoder_forward.10} parent=0
    _
  %s6 = ssub.s32 1, %s4
  %s7 = scalar_select 0, %s6, %s4
  $region1: #{master_encoder_forward.10} parent=0
    #allocation3 [shape = 'u8[262144]{0}', space=vmem, size = 0x40000, scoped, tag = 'input window, operand 1']
    loop: start=0, step=1, limit=4
    $region2: #{master_encoder_forward.10} parent=1 // loop_pre_header
      _
    $region3: #{master_encoder_forward.10} parent=1 // loop_header
      %s9 = sphi 0, %s13
      %p10 = scmp.ge.s32.totalorder %s9, 4
      %s16 = sphi 0, %s35
      %s17 = sphi 0, %s31
      %s18 = sphi 0, %s27
      %s19 = sphi 0, %s16
      %s20 = sphi 0, %s17
      %s21 = sphi 0, %s18
      %s22 = sphi 0, %s19
      %s23 = sphi 0, %s20
      %s24 = sphi 0, %s21
      %s40 = sphi 0, %s42
      %s43 = sphi 0, %s40
      %s44 = sphi 0, %s43
      %s60 = sphi 0, %s44
      %s68 = sphi 0, %s70
      %s71 = sphi 0, %s68
      %s72 = sphi 0, %s71
      %s88 = sphi 0, %s72
      %s94 = sphi 0, %s96
      %s97 = sphi 0, %s94
      %s98 = sphi 0, %s97
      %s114 = sphi 0, %s98
      %s122 = sphi 0, %s124
      %s125 = sphi 0, %s122
      %s126 = sphi 0, %s125
      %s142 = sphi 0, %s126
    $region4: #{master_encoder_forward.10} parent=1 // loop_header_branch
      %12 = sbr.rel (%p10) target = $region8
    $region5: #{master_encoder_forward.10} parent=1 // loop_body
      %s14 = ssub.s32 %s9, 1
      %s15 = ssub.s32 %s9, 2
      %s25 = sadd.s32 1, %s18
      %p26 = scmp.ge.s32.totalorder %s25, 1
      %s27 = scalar_select %p26, 0, %s25
      %s28 = sadd.s32 1, %s17
      %s29 = scalar_select %p26, %s28, %s17
      %p30 = scmp.ge.s32.totalorder %s29, 2
      %s31 = scalar_select %p30, 0, %s29
      %s32 = sadd.s32 1, %s16
      %s33 = scalar_select %p30, %s32, %s16
      %p34 = scmp.ge.s32.totalorder %s33, 1
      %s35 = scalar_select %p34, 0, %s33
      %s36 = ssub.s32 %s16, %s35
      %s37 = ssub.s32 %s18, %s27
      %s38 = sor.u32 %s36, %s37
      %p39 = scmp.eq.s32.totalorder %s38, 0
      %s41 = sadd.s32 %s40, 1
      %s42 = scalar_select %p39, %s40, %s41
      %p45 = pneg %p39
      %p46 = scmp.eq.s32.totalorder %s9, 1
      %p47 = por %p45, %p46
      %p48 = scmp.ne.s32.totalorder %s40, %s43
      %p49 = scmp.eq.s32.totalorder %s9, 0
      %p50 = por %p48, %p49
      %p51 = scmp.ne.s32.totalorder %s40, %s43
      %p52 = scmp.eq.s32.totalorder %s14, 1
      %p53 = por %p51, %p52
      %p54 = scmp.ne.s32.totalorder %s43, %s44
      %p55 = scmp.eq.s32.totalorder %s14, 0
      %p56 = por %p54, %p55
      %p57 = scmp.ne.s32.totalorder %s43, %s44
      %p58 = scmp.eq.s32.totalorder %s15, 1
      %p59 = por %p57, %p58
      %p61 = scmp.ne.s32.totalorder %s44, %s60
      %p62 = scmp.eq.s32.totalorder %s15, 0
      %p63 = por %p61, %p62
      %s64 = ssub.s32 %s18, %s27
      %s65 = ssub.s32 %s17, %s31
      %s66 = sor.u32 %s64, %s65
      %p67 = scmp.eq.s32.totalorder %s66, 0
      %s69 = sadd.s32 %s68, 1
      %s70 = scalar_select %p67, %s68, %s69
      %p73 = pneg %p67
      %p74 = scmp.eq.s32.totalorder %s9, 1
      %p75 = por %p73, %p74
      %p76 = scmp.ne.s32.totalorder %s68, %s71
      %p77 = scmp.eq.s32.totalorder %s9, 0
      %p78 = por %p76, %p77
      %p79 = scmp.ne.s32.totalorder %s68, %s71
      %p80 = scmp.eq.s32.totalorder %s14, 1
      %p81 = por %p79, %p80
      %p82 = scmp.ne.s32.totalorder %s71, %s72
      %p83 = scmp.eq.s32.totalorder %s14, 0
      %p84 = por %p82, %p83
      %p85 = scmp.ne.s32.totalorder %s71, %s72
      %p86 = scmp.eq.s32.totalorder %s15, 1
      %p87 = por %p85, %p86
      %p89 = scmp.ne.s32.totalorder %s72, %s88
      %p90 = scmp.eq.s32.totalorder %s15, 0
      %p91 = por %p89, %p90
      %s92 = ssub.s32 %s17, %s31
      %p93 = scmp.eq.s32.totalorder %s92, 0
      %s95 = sadd.s32 %s94, 1
      %s96 = scalar_select %p93, %s94, %s95
      %p99 = pneg %p93
      %p100 = scmp.eq.s32.totalorder %s9, 1
      %p101 = por %p99, %p100
      %p102 = scmp.ne.s32.totalorder %s94, %s97
      %p103 = scmp.eq.s32.totalorder %s9, 0
      %p104 = por %p102, %p103
      %p105 = scmp.ne.s32.totalorder %s94, %s97
      %p106 = scmp.eq.s32.totalorder %s14, 1
      %p107 = por %p105, %p106
      %p108 = scmp.ne.s32.totalorder %s97, %s98
      %p109 = scmp.eq.s32.totalorder %s14, 0
      %p110 = por %p108, %p109
      %p111 = scmp.ne.s32.totalorder %s97, %s98
      %p112 = scmp.eq.s32.totalorder %s15, 1
      %p113 = por %p111, %p112
      %p115 = scmp.ne.s32.totalorder %s98, %s114
      %p116 = scmp.eq.s32.totalorder %s15, 0
      %p117 = por %p115, %p116
      %s118 = ssub.s32 %s16, %s35
      %s119 = ssub.s32 %s17, %s31
      %s120 = sor.u32 %s118, %s119
      %p121 = scmp.eq.s32.totalorder %s120, 0
      %s123 = sadd.s32 %s122, 1
      %s124 = scalar_select %p121, %s122, %s123
      %p127 = pneg %p121
      %p128 = scmp.eq.s32.totalorder %s9, 1
      %p129 = por %p127, %p128
      %p130 = scmp.ne.s32.totalorder %s122, %s125
      %p131 = scmp.eq.s32.totalorder %s9, 0
      %p132 = por %p130, %p131
      %p133 = scmp.ne.s32.totalorder %s122, %s125
      %p134 = scmp.eq.s32.totalorder %s14, 1
      %p135 = por %p133, %p134
      %p136 = scmp.ne.s32.totalorder %s125, %s126
      %p137 = scmp.eq.s32.totalorder %s14, 0
      %p138 = por %p136, %p137
      %p139 = scmp.ne.s32.totalorder %s125, %s126
      %p140 = scmp.eq.s32.totalorder %s15, 1
      %p141 = por %p139, %p140
      %p143 = scmp.ne.s32.totalorder %s126, %s142
      %p144 = scmp.eq.s32.totalorder %s15, 0
      %p145 = por %p143, %p144
      %p146 = scmp.le.s32.totalorder 1, %s9
      %p147 = scmp.lt.s32.totalorder %s9, 3
      %p148 = pnand %p146, %p147
      %p149 = pneg %p148
      // Predicated region
      $region9: #{master_encoder_forward.10} parent=5 // pred_check
        _
      $region10: #{master_encoder_forward.10} parent=5 // pred_check_branch
        %151 = sbr.rel (%p148) target = $region12
      $region11: #{master_encoder_forward.10} parent=5 // pred_region
        %s152 = ssub.s32 %s9, 1
        // Predicated region
        $region13: #{master_encoder_forward.10} parent=11 // pred_check
          %p153 = pneg %p56
        $region14: #{master_encoder_forward.10} parent=11 // pred_check_branch
          %155 = sbr.rel (%p153) target = $region16
        $region15: #{master_encoder_forward.10} parent=11 // pred_region
          %s156 = smul.u32 2, %s21
          %p157 = scmp.lt.s32.totalorder %s19, 0
          %s158 = scalar_select %p157, %s19, 0
          %p159 = scmp.lt.s32.totalorder %s156, 1
          %s160 = scalar_select %p159, %s156, 1
          %s161 = smul.addr %s158, 2
          %s162 = sadd.s32 %s160, %s161
          %s163 = scalar_lea.vmem %s0, %s162
          %s164 = smul.u32 2, %s21
        $region16: #{master_encoder_forward.10} parent=11 // pred_fallthru
          _
      $region12: #{master_encoder_forward.10} parent=5 // pred_fallthru
        _
      %p165 = scmp.lt.s32.totalorder %s9, 2
      // Predicated region
      $region17: #{master_encoder_forward.10} parent=5 // pred_check
        %p166 = pneg %p165
      $region18: #{master_encoder_forward.10} parent=5 // pred_check_branch
        %168 = sbr.rel (%p166) target = $region20
      $region19: #{master_encoder_forward.10} parent=5 // pred_region
        // Predicated region
        $region21: #{master_encoder_forward.10} parent=19 // pred_check
          %p169 = pneg %p78
        $region22: #{master_encoder_forward.10} parent=19 // pred_check_branch
          %171 = sbr.rel (%p169) target = $region24
        $region23: #{master_encoder_forward.10} parent=19 // pred_region
          %s172 = sand.u32 %s68, 1
          %s173 = sand.u32 %s68, 1
          %s174 = smul.addr %s173, 256
          %s175 = scalar_lea.vmem [#allocation3], %s174
          %s176 = smul.u32 32, %s18
          %s177 = smul.u32 2, %s17
          %s178 = smul.addr %s176, 4
          %s179 = sadd.s32 %s177, %s178
          %s180 = smul.addr %s179, 4
          %s181 = scalar_lea.vmem %s1, %s180
          // Predicated region
          $region25: #{master_encoder_forward.10} parent=23 // pred_check
            _
          $region26: #{master_encoder_forward.10} parent=23 // pred_check_branch
            %183 = sbr.rel (0) target = $region28
          $region27: #{master_encoder_forward.10} parent=23 // pred_region
            // Predicated region
            $region29: #{master_encoder_forward.10} parent=27 // pred_check
              _
            $region30: #{master_encoder_forward.10} parent=27 // pred_check_branch
              %185 = sbr.rel (0) target = $region32
            $region31: #{master_encoder_forward.10} parent=27 // pred_region
              // Predicated region
              $region44: #{master_encoder_forward.10} parent=31 // pred_check
                _
              $region45: #{master_encoder_forward.10} parent=31 // pred_check_branch
                %262 = sbr.rel (0) target = $region47
              $region46: #{master_encoder_forward.10} parent=31 // pred_region
                loop: start=0, step=1, limit=1
                $region48: #{master_encoder_forward.10} parent=46 // loop_pre_header
                  _
                $region49: #{master_encoder_forward.10} parent=46 // loop_header
                  %s264 = sphi 0, %s268
                  %p265 = scmp.ge.s32.totalorder %s264, 1
                  %s269 = sphi %s181, %s181
                  %s270 = sphi %s175, %s175
                $region50: #{master_encoder_forward.10} parent=46 // loop_header_branch
                  %267 = sbr.rel (%p265) target = $region54
                $region51: #{master_encoder_forward.10} parent=46 // loop_body
                  %v271 = vld [vmem:[%s269] sm:$0xff]
                  %272 = vst [vmem:[%s270] sm:$0xff] %v271
                  %v273 = vld [vmem:[%s269 + $0x10] sm:$0xff]
                  %274 = vst [vmem:[%s270 + $0x8] sm:$0xff] %v273
                  %v275 = vld [vmem:[%s269 + $0x20] sm:$0xff]
                  %276 = vst [vmem:[%s270 + $0x10] sm:$0xff] %v275
                  %v277 = vld [vmem:[%s269 + $0x30] sm:$0xff]
                  %278 = vst [vmem:[%s270 + $0x18] sm:$0xff] %v277
                  %v279 = vld [vmem:[%s269 + $0x40] sm:$0xff]
                  %280 = vst [vmem:[%s270 + $0x20] sm:$0xff] %v279
                  %v281 = vld [vmem:[%s269 + $0x50] sm:$0xff]
                  %282 = vst [vmem:[%s270 + $0x28] sm:$0xff] %v281
                  %v283 = vld [vmem:[%s269 + $0x60] sm:$0xff]
                  %284 = vst [vmem:[%s270 + $0x30] sm:$0xff] %v283
                  %v285 = vld [vmem:[%s269 + $0x70] sm:$0xff]
                  %286 = vst [vmem:[%s270 + $0x38] sm:$0xff] %v285
                  %v287 = vld [vmem:[%s269 + $0x80] sm:$0xff]
                  %288 = vst [vmem:[%s270 + $0x40] sm:$0xff] %v287
                  %v289 = vld [vmem:[%s269 + $0x90] sm:$0xff]
                  %290 = vst [vmem:[%s270 + $0x48] sm:$0xff] %v289
                  %v291 = vld [vmem:[%s269 + $0xa0] sm:$0xff]
                  %292 = vst [vmem:[%s270 + $0x50] sm:$0xff] %v291
                  %v293 = vld [vmem:[%s269 + $0xb0] sm:$0xff]
                  %294 = vst [vmem:[%s270 + $0x58] sm:$0xff] %v293
                  %v295 = vld [vmem:[%s269 + $0xc0] sm:$0xff]
                  %296 = vst [vmem:[%s270 + $0x60] sm:$0xff] %v295
                  %v297 = vld [vmem:[%s269 + $0xd0] sm:$0xff]
                  %298 = vst [vmem:[%s270 + $0x68] sm:$0xff] %v297
                  %v299 = vld [vmem:[%s269 + $0xe0] sm:$0xff]
                  %300 = vst [vmem:[%s270 + $0x70] sm:$0xff] %v299
                  %v301 = vld [vmem:[%s269 + $0xf0] sm:$0xff]
                  %302 = vst [vmem:[%s270 + $0x78] sm:$0xff] %v301
                  %v303 = vld [vmem:[%s269 + $0x100] sm:$0xff]
                  %304 = vst [vmem:[%s270 + $0x80] sm:$0xff] %v303
                  %v305 = vld [vmem:[%s269 + $0x110] sm:$0xff]
                  %306 = vst [vmem:[%s270 + $0x88] sm:$0xff] %v305
                  %v307 = vld [vmem:[%s269 + $0x120] sm:$0xff]
                  %308 = vst [vmem:[%s270 + $0x90] sm:$0xff] %v307
                  %v309 = vld [vmem:[%s269 + $0x130] sm:$0xff]
                  %310 = vst [vmem:[%s270 + $0x98] sm:$0xff] %v309
                  %v311 = vld [vmem:[%s269 + $0x140] sm:$0xff]
                  %312 = vst [vmem:[%s270 + $0xa0] sm:$0xff] %v311
                  %v313 = vld [vmem:[%s269 + $0x150] sm:$0xff]
                  %314 = vst [vmem:[%s270 + $0xa8] sm:$0xff] %v313
                  %v315 = vld [vmem:[%s269 + $0x160] sm:$0xff]
                  %316 = vst [vmem:[%s270 + $0xb0] sm:$0xff] %v315
                  %v317 = vld [vmem:[%s269 + $0x170] sm:$0xff]
                  %318 = vst [vmem:[%s270 + $0xb8] sm:$0xff] %v317
                  %v319 = vld [vmem:[%s269 + $0x180] sm:$0xff]
                  %320 = vst [vmem:[%s270 + $0xc0] sm:$0xff] %v319
                  %v321 = vld [vmem:[%s269 + $0x190] sm:$0xff]
                  %322 = vst [vmem:[%s270 + $0xc8] sm:$0xff] %v321
                  %v323 = vld [vmem:[%s269 + $0x1a0] sm:$0xff]
                  %324 = vst [vmem:[%s270 + $0xd0] sm:$0xff] %v323
                  %v325 = vld [vmem:[%s269 + $0x1b0] sm:$0xff]
                  %326 = vst [vmem:[%s270 + $0xd8] sm:$0xff] %v325
                  %v327 = vld [vmem:[%s269 + $0x1c0] sm:$0xff]
                  %328 = vst [vmem:[%s270 + $0xe0] sm:$0xff] %v327
                  %v329 = vld [vmem:[%s269 + $0x1d0] sm:$0xff]
                  %330 = vst [vmem:[%s270 + $0xe8] sm:$0xff] %v329
                  %v331 = vld [vmem:[%s269 + $0x1e0] sm:$0xff]
                  %332 = vst [vmem:[%s270 + $0xf0] sm:$0xff] %v331
                  %v333 = vld [vmem:[%s269 + $0x1f0] sm:$0xff]
                  %334 = vst [vmem:[%s270 + $0xf8] sm:$0xff] %v333
                $region52: #{master_encoder_forward.10} parent=46 // loop_footer
                  %s268 = sadd.s32 1, %s264
                $region53: #{master_encoder_forward.10} parent=46 // loop_footer_branch
                  %263 = sbr.rel target = $region49
                $region54: #{master_encoder_forward.10} parent=46 // loop_exit
                  _
              $region47: #{master_encoder_forward.10} parent=31 // pred_fallthru
                _
              // Predicated region
              $region55: #{master_encoder_forward.10} parent=31 // pred_check
                _
              $region56: #{master_encoder_forward.10} parent=31 // pred_check_branch
                %336 = sbr.rel target = $region58
              $region57: #{master_encoder_forward.10} parent=31 // pred_region
                _
              $region58: #{master_encoder_forward.10} parent=31 // pred_fallthru
                _
            $region32: #{master_encoder_forward.10} parent=27 // pred_fallthru
              _
            // Predicated region
            $region33: #{master_encoder_forward.10} parent=27 // pred_check
              _
            $region34: #{master_encoder_forward.10} parent=27 // pred_check_branch
              %187 = sbr.rel target = $region36
            $region35: #{master_encoder_forward.10} parent=27 // pred_region
              loop: start=0, step=1, limit=1
              $region37: #{master_encoder_forward.10} parent=35 // loop_pre_header
                _
              $region38: #{master_encoder_forward.10} parent=35 // loop_header
                %s190 = sphi 0, %s194
                %p191 = scmp.ge.s32.totalorder %s190, 1
                %s195 = sphi %s181, %s181
                %s196 = sphi %s175, %s175
              $region39: #{master_encoder_forward.10} parent=35 // loop_header_branch
                %193 = sbr.rel (%p191) target = $region43
              $region40: #{master_encoder_forward.10} parent=35 // loop_body
                %v197 = vld [vmem:[%s195] sm:$0xff]
                %198 = vst [vmem:[%s196] sm:$0xff] %v197
                %v199 = vld [vmem:[%s195 + $0x10] sm:$0xff]
                %200 = vst [vmem:[%s196 + $0x8] sm:$0xff] %v199
                %v201 = vld [vmem:[%s195 + $0x20] sm:$0xff]
                %202 = vst [vmem:[%s196 + $0x10] sm:$0xff] %v201
                %v203 = vld [vmem:[%s195 + $0x30] sm:$0xff]
                %204 = vst [vmem:[%s196 + $0x18] sm:$0xff] %v203
                %v205 = vld [vmem:[%s195 + $0x40] sm:$0xff]
                %206 = vst [vmem:[%s196 + $0x20] sm:$0xff] %v205
                %v207 = vld [vmem:[%s195 + $0x50] sm:$0xff]
                %208 = vst [vmem:[%s196 + $0x28] sm:$0xff] %v207
                %v209 = vld [vmem:[%s195 + $0x60] sm:$0xff]
                %210 = vst [vmem:[%s196 + $0x30] sm:$0xff] %v209
                %v211 = vld [vmem:[%s195 + $0x70] sm:$0xff]
                %212 = vst [vmem:[%s196 + $0x38] sm:$0xff] %v211
                %v213 = vld [vmem:[%s195 + $0x80] sm:$0xff]
                %214 = vst [vmem:[%s196 + $0x40] sm:$0xff] %v213
                %v215 = vld [vmem:[%s195 + $0x90] sm:$0xff]
                %216 = vst [vmem:[%s196 + $0x48] sm:$0xff] %v215
                %v217 = vld [vmem:[%s195 + $0xa0] sm:$0xff]
                %218 = vst [vmem:[%s196 + $0x50] sm:$0xff] %v217
                %v219 = vld [vmem:[%s195 + $0xb0] sm:$0xff]
                %220 = vst [vmem:[%s196 + $0x58] sm:$0xff] %v219
                %v221 = vld [vmem:[%s195 + $0xc0] sm:$0xff]
                %222 = vst [vmem:[%s196 + $0x60] sm:$0xff] %v221
                %v223 = vld [vmem:[%s195 + $0xd0] sm:$0xff]
                %224 = vst [vmem:[%s196 + $0x68] sm:$0xff] %v223
                %v225 = vld [vmem:[%s195 + $0xe0] sm:$0xff]
                %226 = vst [vmem:[%s196 + $0x70] sm:$0xff] %v225
                %v227 = vld [vmem:[%s195 + $0xf0] sm:$0xff]
                %228 = vst [vmem:[%s196 + $0x78] sm:$0xff] %v227
                %v229 = vld [vmem:[%s195 + $0x100] sm:$0xff]
                %230 = vst [vmem:[%s196 + $0x80] sm:$0xff] %v229
                %v231 = vld [vmem:[%s195 + $0x110] sm:$0xff]
                %232 = vst [vmem:[%s196 + $0x88] sm:$0xff] %v231
                %v233 = vld [vmem:[%s195 + $0x120] sm:$0xff]
                %234 = vst [vmem:[%s196 + $0x90] sm:$0xff] %v233
                %v235 = vld [vmem:[%s195 + $0x130] sm:$0xff]
                %236 = vst [vmem:[%s196 + $0x98] sm:$0xff] %v235
                %v237 = vld [vmem:[%s195 + $0x140] sm:$0xff]
                %238 = vst [vmem:[%s196 + $0xa0] sm:$0xff] %v237
                %v239 = vld [vmem:[%s195 + $0x150] sm:$0xff]
                %240 = vst [vmem:[%s196 + $0xa8] sm:$0xff] %v239
                %v241 = vld [vmem:[%s195 + $0x160] sm:$0xff]
                %242 = vst [vmem:[%s196 + $0xb0] sm:$0xff] %v241
                %v243 = vld [vmem:[%s195 + $0x170] sm:$0xff]
                %244 = vst [vmem:[%s196 + $0xb8] sm:$0xff] %v243
                %v245 = vld [vmem:[%s195 + $0x180] sm:$0xff]
                %246 = vst [vmem:[%s196 + $0xc0] sm:$0xff] %v245
                %v247 = vld [vmem:[%s195 + $0x190] sm:$0xff]
                %248 = vst [vmem:[%s196 + $0xc8] sm:$0xff] %v247
                %v249 = vld [vmem:[%s195 + $0x1a0] sm:$0xff]
                %250 = vst [vmem:[%s196 + $0xd0] sm:$0xff] %v249
                %v251 = vld [vmem:[%s195 + $0x1b0] sm:$0xff]
                %252 = vst [vmem:[%s196 + $0xd8] sm:$0xff] %v251
                %v253 = vld [vmem:[%s195 + $0x1c0] sm:$0xff]
                %254 = vst [vmem:[%s196 + $0xe0] sm:$0xff] %v253
                %v255 = vld [vmem:[%s195 + $0x1d0] sm:$0xff]
                %256 = vst [vmem:[%s196 + $0xe8] sm:$0xff] %v255
                %v257 = vld [vmem:[%s195 + $0x1e0] sm:$0xff]
                %258 = vst [vmem:[%s196 + $0xf0] sm:$0xff] %v257
                %v259 = vld [vmem:[%s195 + $0x1f0] sm:$0xff]
                %260 = vst [vmem:[%s196 + $0xf8] sm:$0xff] %v259
              $region41: #{master_encoder_forward.10} parent=35 // loop_footer
                %s194 = sadd.s32 1, %s190
              $region42: #{master_encoder_forward.10} parent=35 // loop_footer_branch
                %189 = sbr.rel target = $region38
              $region43: #{master_encoder_forward.10} parent=35 // loop_exit
                _
            $region36: #{master_encoder_forward.10} parent=27 // pred_fallthru
              _
          $region28: #{master_encoder_forward.10} parent=23 // pred_fallthru
            _
          %337 = vnop
        $region24: #{master_encoder_forward.10} parent=19 // pred_fallthru
          _
        // Predicated region
        $region59: #{master_encoder_forward.10} parent=19 // pred_check
          %p338 = pneg %p104
        $region60: #{master_encoder_forward.10} parent=19 // pred_check_branch
          %340 = sbr.rel (%p338) target = $region62
        $region61: #{master_encoder_forward.10} parent=19 // pred_region
          %s341 = smul.u32 2, %s17
          %p342 = scmp.lt.s32.totalorder %s341, 3
          %s343 = scalar_select %p342, %s341, 3
          %s344 = scalar_lea.vmem %s2, %s343
          %s345 = smul.u32 2, %s17
        $region62: #{master_encoder_forward.10} parent=19 // pred_fallthru
          _
      $region20: #{master_encoder_forward.10} parent=5 // pred_fallthru
        _
      %p346 = scmp.le.s32.totalorder 1, %s9
      %p347 = scmp.lt.s32.totalorder %s9, 3
      %p348 = pnand %p346, %p347
      %p349 = pneg %p348
      // Predicated region
      $region63: #{master_encoder_forward.10} parent=5 // pred_check
        _
      $region64: #{master_encoder_forward.10} parent=5 // pred_check_branch
        %351 = sbr.rel (%p348) target = $region66
      $region65: #{master_encoder_forward.10} parent=5 // pred_region
        %s352 = ssub.s32 %s9, 1
        %s353 = sand.u32 %s71, 1
        %s354 = sand.u32 %s71, 1
        %s355 = smul.addr %s354, 256
        %s356 = scalar_lea.vmem [#allocation3], %s355
        // Predicated region
        $region67: #{master_encoder_forward.10} parent=65 // pred_check
          %p357 = pneg %p84
        $region68: #{master_encoder_forward.10} parent=65 // pred_check_branch
          %359 = sbr.rel (%p357) target = $region70
        $region69: #{master_encoder_forward.10} parent=65 // pred_region
          _
        $region70: #{master_encoder_forward.10} parent=65 // pred_fallthru
          _
        %s360 = smul.u32 2, %s21
        %p361 = scmp.lt.s32.totalorder %s19, 0
        %s362 = scalar_select %p361, %s19, 0
        %p363 = scmp.lt.s32.totalorder %s360, 1
        %s364 = scalar_select %p363, %s360, 1
        %s365 = smul.addr %s362, 2
        %s366 = sadd.s32 %s364, %s365
        %s367 = scalar_lea.vmem %s0, %s366
        %p368 = pneg %p56
        %p369 = pneg %p53
        %s370 = sand.u32 %s71, 1
        %s371 = sand.u32 %s71, 1
        %s372 = smul.addr %s371, 256
        %s373 = scalar_lea.vmem [#allocation3], %s372
        %p374 = pneg %p84
        %p375 = pneg %p81
        %s376 = smul.u32 2, %s20
        %p377 = scmp.lt.s32.totalorder %s376, 3
        %s378 = scalar_select %p377, %s376, 3
        %s379 = scalar_lea.vmem %s2, %s378
        %p380 = pneg %p110
        %p381 = pneg %p107
        %p382 = pneg %p138
        %p383 = pneg %p135
        %s384 = smul.u32 2, %s20
        %p385 = scmp.lt.s32.totalorder %s19, 0
        %s386 = scalar_select %p385, %s19, 0
        %p387 = scmp.lt.s32.totalorder %s384, 3
        %s388 = scalar_select %p387, %s384, 3
        %s389 = smul.addr %s386, 4
        %s390 = sadd.s32 %s388, %s389
        %s391 = scalar_lea.vmem %s3, %s390
        %s392 = smul.u32 2, %s21
        %p393 = scmp.lt.s32.totalorder %s19, 0
        %s394 = scalar_select %p393, %s19, 0
        %p395 = scmp.lt.s32.totalorder %s392, 1
        %s396 = scalar_select %p395, %s392, 1
        %s397 = smul.addr %s394, 2
        %s398 = sadd.s32 %s396, %s397
        %s399 = scalar_lea.vmem %s0, %s398
        %s400 = smul.u32 2, %s21
        %s401 = smul.u32 32, %s21
        %s402 = smul.u32 2, %s20
        %s403 = smul.u32 2, %s20
        %p404 = scmp.lt.s32.totalorder %s403, 3
        %s405 = scalar_select %p404, %s403, 3
        %s406 = scalar_lea.vmem %s2, %s405
        %s407 = smul.u32 2, %s20
        %s408 = smul.u32 2, %s20
        %p409 = scmp.lt.s32.totalorder %s19, 0
        %s410 = scalar_select %p409, %s19, 0
        %p411 = scmp.lt.s32.totalorder %s408, 3
        %s412 = scalar_select %p411, %s408, 3
        %s413 = smul.addr %s410, 4
        %s414 = sadd.s32 %s412, %s413
        %s415 = scalar_lea.vmem %s3, %s414
        %s416 = smul.u32 2, %s20
        %p417 = scmp.eq.s32.totalorder %s21, 0
        // Predicated region
        $region71: #{master_encoder_forward.10} parent=65 // pred_check
          %p418 = pneg %p417
        $region72: #{master_encoder_forward.10} parent=65 // pred_check_branch
          %420 = sbr.rel (%p418) target = $region74
        $region73: #{master_encoder_forward.10} parent=65 // pred_region
          %421 = vst [vmem:[#allocation2] sm:$0xf] 0.0
        $region74: #{master_encoder_forward.10} parent=65 // pred_fallthru
          _
        %v422 = vld [vmem:[#allocation2] sm:$0xf]
        %v423 = vld [vmem:[%s399] sm:$0x3]
        %v424 = vld [vmem:[%s356] sm:$0xff]
        %v425 = vld [vmem:[%s356 + $0x8] sm:$0xff]
        %v426 = vld [vmem:[%s356 + $0x10] sm:$0xff]
        %v427 = vld [vmem:[%s356 + $0x18] sm:$0xff]
        %v428 = vld [vmem:[%s356 + $0x20] sm:$0xff]
        %v429 = vld [vmem:[%s356 + $0x28] sm:$0xff]
        %v430 = vld [vmem:[%s356 + $0x30] sm:$0xff]
        %v431 = vld [vmem:[%s356 + $0x38] sm:$0xff]
        %v432 = vld [vmem:[%s356 + $0x40] sm:$0xff]
        %v433 = vld [vmem:[%s356 + $0x48] sm:$0xff]
        %v434 = vld [vmem:[%s356 + $0x50] sm:$0xff]
        %v435 = vld [vmem:[%s356 + $0x58] sm:$0xff]
        %v436 = vld [vmem:[%s356 + $0x60] sm:$0xff]
        %v437 = vld [vmem:[%s356 + $0x68] sm:$0xff]
        %v438 = vld [vmem:[%s356 + $0x70] sm:$0xff]
        %v439 = vld [vmem:[%s356 + $0x78] sm:$0xff]
        %v440 = vld [vmem:[%s356 + $0x80] sm:$0xff]
        %v441 = vld [vmem:[%s356 + $0x88] sm:$0xff]
        %v442 = vld [vmem:[%s356 + $0x90] sm:$0xff]
        %v443 = vld [vmem:[%s356 + $0x98] sm:$0xff]
        %v444 = vld [vmem:[%s356 + $0xa0] sm:$0xff]
        %v445 = vld [vmem:[%s356 + $0xa8] sm:$0xff]
        %v446 = vld [vmem:[%s356 + $0xb0] sm:$0xff]
        %v447 = vld [vmem:[%s356 + $0xb8] sm:$0xff]
        %v448 = vld [vmem:[%s356 + $0xc0] sm:$0xff]
        %v449 = vld [vmem:[%s356 + $0xc8] sm:$0xff]
        %v450 = vld [vmem:[%s356 + $0xd0] sm:$0xff]
        %v451 = vld [vmem:[%s356 + $0xd8] sm:$0xff]
        %v452 = vld [vmem:[%s356 + $0xe0] sm:$0xff]
        %v453 = vld [vmem:[%s356 + $0xe8] sm:$0xff]
        %v454 = vld [vmem:[%s356 + $0xf0] sm:$0xff]
        %v455 = vld [vmem:[%s356 + $0xf8] sm:$0xff]
        %v458 = vunpack.c.l.s4 1966171168
        %v459 = vunpack.c.0.s8 %v458
        %v460 = vlaneseq
        %v461 = vshrl.u32 %v460, 7
        %v462 = vsub.s32 %v459, %v461
        %v463 = vrot.slane %v423, %v462
        %v464 = vcombine.high %v463, %v463
        %v466 = vunpack.c.l.s4 1966171168
        %v467 = vunpack.c.0.s8 %v466
        %v468 = vlaneseq
        %v469 = vshrl.u32 %v468, 7
        %v470 = vsub.s32 %v467, %v469
        %v471 = vrot.slane %v463, %v470
        %v473 = vunpack.c.l.s4 1966171168
        %v474 = vunpack.c.0.s8 %v473
        %v475 = vlaneseq
        %v476 = vshrl.u32 %v475, 7
        %v477 = vsub.s32 %v474, %v476
        %v478 = vrot.slane %v464, %v477
        %v513 = vunpack.c.l.b16 %v424
        %v514 = vunpack.c.h.b16 %v424
        %v515 = vunpack.c.l.b16 %v425
        %v516 = vunpack.c.h.b16 %v425
        %v517 = vunpack.c.l.b16 %v426
        %v518 = vunpack.c.h.b16 %v426
        %v519 = vunpack.c.l.b16 %v427
        %v520 = vunpack.c.h.b16 %v427
        %v521 = vunpack.c.l.b16 %v428
        %v522 = vunpack.c.h.b16 %v428
        %v523 = vunpack.c.l.b16 %v429
        %v524 = vunpack.c.h.b16 %v429
        %v525 = vunpack.c.l.b16 %v430
        %v526 = vunpack.c.h.b16 %v430
        %v527 = vunpack.c.l.b16 %v431
        %v528 = vunpack.c.h.b16 %v431
        %v529 = vunpack.c.l.b16 %v432
        %v530 = vunpack.c.h.b16 %v432
        %v531 = vunpack.c.l.b16 %v433
        %v532 = vunpack.c.h.b16 %v433
        %v533 = vunpack.c.l.b16 %v434
        %v534 = vunpack.c.h.b16 %v434
        %v535 = vunpack.c.l.b16 %v435
        %v536 = vunpack.c.h.b16 %v435
        %v537 = vunpack.c.l.b16 %v436
        %v538 = vunpack.c.h.b16 %v436
        %v539 = vunpack.c.l.b16 %v437
        %v540 = vunpack.c.h.b16 %v437
        %v541 = vunpack.c.l.b16 %v438
        %v542 = vunpack.c.h.b16 %v438
        %v543 = vunpack.c.l.b16 %v439
        %v544 = vunpack.c.h.b16 %v439
        %v545 = vunpack.c.l.b16 %v440
        %v546 = vunpack.c.h.b16 %v440
        %v547 = vunpack.c.l.b16 %v441
        %v548 = vunpack.c.h.b16 %v441
        %v549 = vunpack.c.l.b16 %v442
        %v550 = vunpack.c.h.b16 %v442
        %v551 = vunpack.c.l.b16 %v443
        %v552 = vunpack.c.h.b16 %v443
        %v553 = vunpack.c.l.b16 %v444
        %v554 = vunpack.c.h.b16 %v444
        %v555 = vunpack.c.l.b16 %v445
        %v556 = vunpack.c.h.b16 %v445
        %v557 = vunpack.c.l.b16 %v446
        %v558 = vunpack.c.h.b16 %v446
        %v559 = vunpack.c.l.b16 %v447
        %v560 = vunpack.c.h.b16 %v447
        %v561 = vunpack.c.l.b16 %v448
        %v562 = vunpack.c.h.b16 %v448
        %v563 = vunpack.c.l.b16 %v449
        %v564 = vunpack.c.h.b16 %v449
        %v565 = vunpack.c.l.b16 %v450
        %v566 = vunpack.c.h.b16 %v450
        %v567 = vunpack.c.l.b16 %v451
        %v568 = vunpack.c.h.b16 %v451
        %v569 = vunpack.c.l.b16 %v452
        %v570 = vunpack.c.h.b16 %v452
        %v571 = vunpack.c.l.b16 %v453
        %v572 = vunpack.c.h.b16 %v453
        %v573 = vunpack.c.l.b16 %v454
        %v574 = vunpack.c.h.b16 %v454
        %v575 = vunpack.c.l.b16 %v455
        %v576 = vunpack.c.h.b16 %v455
        %v577 = vpack.c.b16 %v515, %v513
        %v578 = vpack.c.b16 %v516, %v514
        %v579 = vpack.c.b16 %v519, %v517
        %v580 = vpack.c.b16 %v520, %v518
        %v581 = vpack.c.b16 %v523, %v521
        %v582 = vpack.c.b16 %v524, %v522
        %v583 = vpack.c.b16 %v527, %v525
        %v584 = vpack.c.b16 %v528, %v526
        %v585 = vpack.c.b16 %v531, %v529
        %v586 = vpack.c.b16 %v532, %v530
        %v587 = vpack.c.b16 %v535, %v533
        %v588 = vpack.c.b16 %v536, %v534
        %v589 = vpack.c.b16 %v539, %v537
        %v590 = vpack.c.b16 %v540, %v538
        %v591 = vpack.c.b16 %v543, %v541
        %v592 = vpack.c.b16 %v544, %v542
        %v593 = vpack.c.b16 %v547, %v545
        %v594 = vpack.c.b16 %v548, %v546
        %v595 = vpack.c.b16 %v551, %v549
        %v596 = vpack.c.b16 %v552, %v550
        %v597 = vpack.c.b16 %v555, %v553
        %v598 = vpack.c.b16 %v556, %v554
        %v599 = vpack.c.b16 %v559, %v557
        %v600 = vpack.c.b16 %v560, %v558
        %v601 = vpack.c.b16 %v563, %v561
        %v602 = vpack.c.b16 %v564, %v562
        %v603 = vpack.c.b16 %v567, %v565
        %v604 = vpack.c.b16 %v568, %v566
        %v605 = vpack.c.b16 %v571, %v569
        %v606 = vpack.c.b16 %v572, %v570
        %v607 = vpack.c.b16 %v575, %v573
        %v608 = vpack.c.b16 %v576, %v574
        %641 = vmatprep.subr.bf16.mxu0 %v578
        %642 = vmatpush1.bf16.msra.mxu0 %v577
        %643 = vmatprep.subr.bf16.mxu0 %v580
        %644 = vmatpush1.bf16.msra.mxu0 %v579
        %645 = vmatprep.subr.bf16.mxu0 %v582
        %646 = vmatpush1.bf16.msra.mxu0 %v581
        %647 = vmatprep.subr.bf16.mxu0 %v584
        %648 = vmatpush1.bf16.msra.mxu0 %v583
        %649 = vmatprep.subr.bf16.mxu0 %v586
        %650 = vmatpush1.bf16.msra.mxu0 %v585
        %651 = vmatprep.subr.bf16.mxu0 %v588
        %652 = vmatpush1.bf16.msra.mxu0 %v587
        %653 = vmatprep.subr.bf16.mxu0 %v590
        %654 = vmatpush1.bf16.msra.mxu0 %v589
        %655 = vmatprep.subr.bf16.mxu0 %v592
        %656 = vmatpush1.bf16.msra.mxu0 %v591
        %657 = vmatprep.subr.bf16.mxu0 %v594
        %658 = vmatpush1.bf16.msra.mxu0 %v593
        %659 = vmatprep.subr.bf16.mxu0 %v596
        %660 = vmatpush1.bf16.msra.mxu0 %v595
        %661 = vmatprep.subr.bf16.mxu0 %v598
        %662 = vmatpush1.bf16.msra.mxu0 %v597
        %663 = vmatprep.subr.bf16.mxu0 %v600
        %664 = vmatpush1.bf16.msra.mxu0 %v599
        %665 = vmatprep.subr.bf16.mxu0 %v602
        %666 = vmatpush1.bf16.msra.mxu0 %v601
        %667 = vmatprep.subr.bf16.mxu0 %v604
        %668 = vmatpush1.bf16.msra.mxu0 %v603
        %669 = vmatprep.subr.bf16.mxu0 %v606
        %670 = vmatpush1.bf16.msra.mxu0 %v605
        %671 = vmatprep.subr.bf16.mxu0 %v608
        %672 = vmatpush1.bf16.msra.mxu0 %v607
        %673 = vmatprep.mubr.bf16.mxu0 %v478
        %674 = vmatmul.mubr.bf16.gmra.mrb[0].mxu0 %v471
        %v675 = vpop.f32.mrb[0].mxu0
        %v676 = vadd.f32 0.0, %v675
        %v677 = vpop.f32.mrb[0].mxu0
        %v678 = vadd.f32 0.0, %v677
        %v679 = vpop.f32.mrb[0].mxu0
        %v680 = vpop.f32.mrb[0].mxu0
        %681 = vdwg.mxu0
        %v684 = vcombine.low %v676, %v678
        %v686 = vunpack.c.l.s4 1983009808
        %v687 = vunpack.c.0.s8 %v686
        %v688 = vlaneseq
        %v689 = vshrl.u32 %v688, 7
        %v690 = vsub.s32 %v687, %v689
        %v691 = vrot.slane %v684, %v690
        %v693 = vadd.f32 %v422, %v691
        %694 = vst [vmem:[#allocation2] sm:$0xf] %v693
        // Predicated region
        $region75: #{master_encoder_forward.10} parent=65 // pred_check
          %p695 = pneg %p417
        $region76: #{master_encoder_forward.10} parent=65 // pred_check_branch
          %697 = sbr.rel (%p695) target = $region78
        $region77: #{master_encoder_forward.10} parent=65 // pred_region
          %v698 = vld [vmem:[#allocation2] sm:$0xf]
          %v699 = vld [vmem:[%s406] sm:$0x3]
          %v701 = vlaneseq
          %v702 = vshrl.u32 %v701, 7
          %v703 = vsub.s32 0, %v702
          %v704 = vrot.slane %v699, %v703
          %v705 = vlaneseq
          %v706 = vshrl.u32 %v705, 7
          %v707 = vsub.s32 1, %v706
          %v708 = vrot.slane %v699, %v707
          %v709 = vcombine.low %v704, %v708
          %v711 = vunpack.c.l.s4 1983009808
          %v712 = vunpack.c.0.s8 %v711
          %v713 = vlaneseq
          %v714 = vshrl.u32 %v713, 7
          %v715 = vsub.s32 %v712, %v714
          %v716 = vrot.slane %v709, %v715
          %v718 = vadd.f32 %v698, %v716
          %v719 = vmax.f32 %v718, 0.0
          %v722 = vunpack.c.l.s4 1983009808
          %v723 = vunpack.c.0.s8 %v722
          %v724 = vlaneseq
          %v725 = vshrl.u32 %v724, 7
          %v726 = vsub.s32 %v723, %v725
          %v727 = vrot.slane %v719, %v726
          %v728 = vcombine.high %v727, %v727
          %v731 = vpack.c.bf16 %v727, %v727
          %v732 = vpack.c.bf16 %v728, %v728
          %v735 = vcombine.low %v731, %v732
          %v737 = vunpack.c.l.s4 1966171168
          %v738 = vunpack.c.0.s8 %v737
          %v739 = vlaneseq
          %v740 = vshrl.u32 %v739, 7
          %v741 = vsub.s32 %v738, %v740
          %v742 = vrot.slane %v735, %v741
          %v744 = vunpack.c.l.s4 1966171168
          %v745 = vunpack.c.0.s8 %v744
          %v746 = vlaneseq
          %v747 = vshrl.u32 %v746, 7
          %v748 = vsub.s32 %v745, %v747
          %v749 = vrot.slane %v742, %v748
          %751 = vst [vmem:[%s415] sm:$0x3] %v749
        $region78: #{master_encoder_forward.10} parent=65 // pred_fallthru
          _
        %s752 = smul.u32 2, %s20
        %p753 = scmp.lt.s32.totalorder %s19, 0
        %s754 = scalar_select %p753, %s19, 0
        %p755 = scmp.lt.s32.totalorder %s752, 3
        %s756 = scalar_select %p755, %s752, 3
        %s757 = smul.addr %s754, 4
        %s758 = sadd.s32 %s756, %s757
        %s759 = scalar_lea.vmem %s3, %s758
        // Predicated region
        $region79: #{master_encoder_forward.10} parent=65 // pred_check
          %p760 = pneg %p135
        $region80: #{master_encoder_forward.10} parent=65 // pred_check_branch
          %762 = sbr.rel (%p760) target = $region82
        $region81: #{master_encoder_forward.10} parent=65 // pred_region
          %s763 = smul.u32 2, %s20
        $region82: #{master_encoder_forward.10} parent=65 // pred_fallthru
          _
      $region66: #{master_encoder_forward.10} parent=5 // pred_fallthru
        _
      %p764 = scmp.le.s32.totalorder 2, %s9
      // Predicated region
      $region83: #{master_encoder_forward.10} parent=5 // pred_check
        %p765 = pneg %p764
      $region84: #{master_encoder_forward.10} parent=5 // pred_check_branch
        %767 = sbr.rel (%p765) target = $region86
      $region85: #{master_encoder_forward.10} parent=5 // pred_region
        %s768 = ssub.s32 %s9, 2
        // Predicated region
        $region87: #{master_encoder_forward.10} parent=85 // pred_check
          %p769 = pneg %p141
        $region88: #{master_encoder_forward.10} parent=85 // pred_check_branch
          %771 = sbr.rel (%p769) target = $region90
        $region89: #{master_encoder_forward.10} parent=85 // pred_region
          %s772 = smul.u32 2, %s23
          %p773 = scmp.lt.s32.totalorder %s22, 0
          %s774 = scalar_select %p773, %s22, 0
          %p775 = scmp.lt.s32.totalorder %s772, 3
          %s776 = scalar_select %p775, %s772, 3
          %s777 = smul.addr %s774, 4
          %s778 = sadd.s32 %s776, %s777
          %s779 = scalar_lea.vmem %s3, %s778
        $region90: #{master_encoder_forward.10} parent=85 // pred_fallthru
          _
      $region86: #{master_encoder_forward.10} parent=5 // pred_fallthru
        _
    $region6: #{master_encoder_forward.10} parent=1 // loop_footer
      %s13 = sadd.s32 1, %s9
    $region7: #{master_encoder_forward.10} parent=1 // loop_footer_branch
      %8 = sbr.rel target = $region3
    $region8: #{master_encoder_forward.10} parent=1 // loop_exit
      _

// kernel: master_encoder_forward.11
$region0: #{master_encoder_forward.11}
  #allocation0 [shape = 'u32[]', space=smem, size = 0x4, offset = 0x4, fixed_abs, tag = 'smem constant byte address 0x4 - core index']
  #allocation1 [shape = 'u32[144,128]{1,0:T(1,128)}', space=vmem, size = 0x12000, scoped, tag = 'internal scratch']
  #allocation2 [shape = 'f32[2,128]{1,0:T(2,128)}', space=vmem, size = 0x400, scoped, tag = 'scratch operand']
  %s0 = inlined_call_operand.vmem [shape: bf16[2,512], index: 0, kind: input, shape index: {}]
  %s1 = inlined_call_operand.vmem [shape: bf16[512,256], index: 1, kind: input, shape index: {}]
  %s2 = inlined_call_operand.vmem [shape: f32[1,256], index: 2, kind: input, shape index: {}]
  %s3 = inlined_call_operand.vmem [shape: f32[2,256], index: 3, kind: input, shape index: {}]
  %s4 = inlined_call_operand.vmem [shape: f32[2,256], index: 4, kind: output, shape index: {}]
  %s5 = sld [smem:[#allocation0]]
  $region98: #{master_encoder_forward.11} parent=0
    _
  %s7 = ssub.s32 1, %s5
  %s8 = scalar_select 0, %s7, %s5
  $region1: #{master_encoder_forward.11} parent=0
    #allocation3 [shape = 'u8[262144]{0}', space=vmem, size = 0x40000, scoped, tag = 'input window, operand 1']
    loop: start=0, step=1, limit=4
    $region2: #{master_encoder_forward.11} parent=1 // loop_pre_header
      _
    $region3: #{master_encoder_forward.11} parent=1 // loop_header
      %s10 = sphi 0, %s14
      %p11 = scmp.ge.s32.totalorder %s10, 4
      %s17 = sphi 0, %s36
      %s18 = sphi 0, %s32
      %s19 = sphi 0, %s28
      %s20 = sphi 0, %s17
      %s21 = sphi 0, %s18
      %s22 = sphi 0, %s19
      %s23 = sphi 0, %s20
      %s24 = sphi 0, %s21
      %s25 = sphi 0, %s22
      %s41 = sphi 0, %s43
      %s44 = sphi 0, %s41
      %s45 = sphi 0, %s44
      %s61 = sphi 0, %s45
      %s69 = sphi 0, %s71
      %s72 = sphi 0, %s69
      %s73 = sphi 0, %s72
      %s89 = sphi 0, %s73
      %s95 = sphi 0, %s97
      %s98 = sphi 0, %s95
      %s99 = sphi 0, %s98
      %s115 = sphi 0, %s99
      %s123 = sphi 0, %s125
      %s126 = sphi 0, %s123
      %s127 = sphi 0, %s126
      %s143 = sphi 0, %s127
      %s151 = sphi 0, %s153
      %s154 = sphi 0, %s151
      %s155 = sphi 0, %s154
      %s171 = sphi 0, %s155
    $region4: #{master_encoder_forward.11} parent=1 // loop_header_branch
      %13 = sbr.rel (%p11) target = $region8
    $region5: #{master_encoder_forward.11} parent=1 // loop_body
      %s15 = ssub.s32 %s10, 1
      %s16 = ssub.s32 %s10, 2
      %s26 = sadd.s32 1, %s19
      %p27 = scmp.ge.s32.totalorder %s26, 1
      %s28 = scalar_select %p27, 0, %s26
      %s29 = sadd.s32 1, %s18
      %s30 = scalar_select %p27, %s29, %s18
      %p31 = scmp.ge.s32.totalorder %s30, 2
      %s32 = scalar_select %p31, 0, %s30
      %s33 = sadd.s32 1, %s17
      %s34 = scalar_select %p31, %s33, %s17
      %p35 = scmp.ge.s32.totalorder %s34, 1
      %s36 = scalar_select %p35, 0, %s34
      %s37 = ssub.s32 %s17, %s36
      %s38 = ssub.s32 %s19, %s28
      %s39 = sor.u32 %s37, %s38
      %p40 = scmp.eq.s32.totalorder %s39, 0
      %s42 = sadd.s32 %s41, 1
      %s43 = scalar_select %p40, %s41, %s42
      %p46 = pneg %p40
      %p47 = scmp.eq.s32.totalorder %s10, 1
      %p48 = por %p46, %p47
      %p49 = scmp.ne.s32.totalorder %s41, %s44
      %p50 = scmp.eq.s32.totalorder %s10, 0
      %p51 = por %p49, %p50
      %p52 = scmp.ne.s32.totalorder %s41, %s44
      %p53 = scmp.eq.s32.totalorder %s15, 1
      %p54 = por %p52, %p53
      %p55 = scmp.ne.s32.totalorder %s44, %s45
      %p56 = scmp.eq.s32.totalorder %s15, 0
      %p57 = por %p55, %p56
      %p58 = scmp.ne.s32.totalorder %s44, %s45
      %p59 = scmp.eq.s32.totalorder %s16, 1
      %p60 = por %p58, %p59
      %p62 = scmp.ne.s32.totalorder %s45, %s61
      %p63 = scmp.eq.s32.totalorder %s16, 0
      %p64 = por %p62, %p63
      %s65 = ssub.s32 %s19, %s28
      %s66 = ssub.s32 %s18, %s32
      %s67 = sor.u32 %s65, %s66
      %p68 = scmp.eq.s32.totalorder %s67, 0
      %s70 = sadd.s32 %s69, 1
      %s71 = scalar_select %p68, %s69, %s70
      %p74 = pneg %p68
      %p75 = scmp.eq.s32.totalorder %s10, 1
      %p76 = por %p74, %p75
      %p77 = scmp.ne.s32.totalorder %s69, %s72
      %p78 = scmp.eq.s32.totalorder %s10, 0
      %p79 = por %p77, %p78
      %p80 = scmp.ne.s32.totalorder %s69, %s72
      %p81 = scmp.eq.s32.totalorder %s15, 1
      %p82 = por %p80, %p81
      %p83 = scmp.ne.s32.totalorder %s72, %s73
      %p84 = scmp.eq.s32.totalorder %s15, 0
      %p85 = por %p83, %p84
      %p86 = scmp.ne.s32.totalorder %s72, %s73
      %p87 = scmp.eq.s32.totalorder %s16, 1
      %p88 = por %p86, %p87
      %p90 = scmp.ne.s32.totalorder %s73, %s89
      %p91 = scmp.eq.s32.totalorder %s16, 0
      %p92 = por %p90, %p91
      %s93 = ssub.s32 %s18, %s32
      %p94 = scmp.eq.s32.totalorder %s93, 0
      %s96 = sadd.s32 %s95, 1
      %s97 = scalar_select %p94, %s95, %s96
      %p100 = pneg %p94
      %p101 = scmp.eq.s32.totalorder %s10, 1
      %p102 = por %p100, %p101
      %p103 = scmp.ne.s32.totalorder %s95, %s98
      %p104 = scmp.eq.s32.totalorder %s10, 0
      %p105 = por %p103, %p104
      %p106 = scmp.ne.s32.totalorder %s95, %s98
      %p107 = scmp.eq.s32.totalorder %s15, 1
      %p108 = por %p106, %p107
      %p109 = scmp.ne.s32.totalorder %s98, %s99
      %p110 = scmp.eq.s32.totalorder %s15, 0
      %p111 = por %p109, %p110
      %p112 = scmp.ne.s32.totalorder %s98, %s99
      %p113 = scmp.eq.s32.totalorder %s16, 1
      %p114 = por %p112, %p113
      %p116 = scmp.ne.s32.totalorder %s99, %s115
      %p117 = scmp.eq.s32.totalorder %s16, 0
      %p118 = por %p116, %p117
      %s119 = ssub.s32 %s17, %s36
      %s120 = ssub.s32 %s18, %s32
      %s121 = sor.u32 %s119, %s120
      %p122 = scmp.eq.s32.totalorder %s121, 0
      %s124 = sadd.s32 %s123, 1
      %s125 = scalar_select %p122, %s123, %s124
      %p128 = pneg %p122
      %p129 = scmp.eq.s32.totalorder %s10, 1
      %p130 = por %p128, %p129
      %p131 = scmp.ne.s32.totalorder %s123, %s126
      %p132 = scmp.eq.s32.totalorder %s10, 0
      %p133 = por %p131, %p132
      %p134 = scmp.ne.s32.totalorder %s123, %s126
      %p135 = scmp.eq.s32.totalorder %s15, 1
      %p136 = por %p134, %p135
      %p137 = scmp.ne.s32.totalorder %s126, %s127
      %p138 = scmp.eq.s32.totalorder %s15, 0
      %p139 = por %p137, %p138
      %p140 = scmp.ne.s32.totalorder %s126, %s127
      %p141 = scmp.eq.s32.totalorder %s16, 1
      %p142 = por %p140, %p141
      %p144 = scmp.ne.s32.totalorder %s127, %s143
      %p145 = scmp.eq.s32.totalorder %s16, 0
      %p146 = por %p144, %p145
      %s147 = ssub.s32 %s17, %s36
      %s148 = ssub.s32 %s18, %s32
      %s149 = sor.u32 %s147, %s148
      %p150 = scmp.eq.s32.totalorder %s149, 0
      %s152 = sadd.s32 %s151, 1
      %s153 = scalar_select %p150, %s151, %s152
      %p156 = pneg %p150
      %p157 = scmp.eq.s32.totalorder %s10, 1
      %p158 = por %p156, %p157
      %p159 = scmp.ne.s32.totalorder %s151, %s154
      %p160 = scmp.eq.s32.totalorder %s10, 0
      %p161 = por %p159, %p160
      %p162 = scmp.ne.s32.totalorder %s151, %s154
      %p163 = scmp.eq.s32.totalorder %s15, 1
      %p164 = por %p162, %p163
      %p165 = scmp.ne.s32.totalorder %s154, %s155
      %p166 = scmp.eq.s32.totalorder %s15, 0
      %p167 = por %p165, %p166
      %p168 = scmp.ne.s32.totalorder %s154, %s155
      %p169 = scmp.eq.s32.totalorder %s16, 1
      %p170 = por %p168, %p169
      %p172 = scmp.ne.s32.totalorder %s155, %s171
      %p173 = scmp.eq.s32.totalorder %s16, 0
      %p174 = por %p172, %p173
      %p175 = scmp.le.s32.totalorder 1, %s10
      %p176 = scmp.lt.s32.totalorder %s10, 3
      %p177 = pnand %p175, %p176
      %p178 = pneg %p177
      // Predicated region
      $region9: #{master_encoder_forward.11} parent=5 // pred_check
        _
      $region10: #{master_encoder_forward.11} parent=5 // pred_check_branch
        %180 = sbr.rel (%p177) target = $region12
      $region11: #{master_encoder_forward.11} parent=5 // pred_region
        %s181 = ssub.s32 %s10, 1
        // Predicated region
        $region13: #{master_encoder_forward.11} parent=11 // pred_check
          %p182 = pneg %p57
        $region14: #{master_encoder_forward.11} parent=11 // pred_check_branch
          %184 = sbr.rel (%p182) target = $region16
        $region15: #{master_encoder_forward.11} parent=11 // pred_region
          %s185 = smul.u32 4, %s22
          %p186 = scmp.lt.s32.totalorder %s20, 0
          %s187 = scalar_select %p186, %s20, 0
          %p188 = scmp.lt.s32.totalorder %s185, 3
          %s189 = scalar_select %p188, %s185, 3
          %s190 = smul.addr %s187, 4
          %s191 = sadd.s32 %s189, %s190
          %s192 = scalar_lea.vmem %s0, %s191
          %s193 = smul.u32 4, %s22
        $region16: #{master_encoder_forward.11} parent=11 // pred_fallthru
          _
      $region12: #{master_encoder_forward.11} parent=5 // pred_fallthru
        _
      %p194 = scmp.lt.s32.totalorder %s10, 2
      // Predicated region
      $region17: #{master_encoder_forward.11} parent=5 // pred_check
        %p195 = pneg %p194
      $region18: #{master_encoder_forward.11} parent=5 // pred_check_branch
        %197 = sbr.rel (%p195) target = $region20
      $region19: #{master_encoder_forward.11} parent=5 // pred_region
        // Predicated region
        $region21: #{master_encoder_forward.11} parent=19 // pred_check
          %p198 = pneg %p79
        $region22: #{master_encoder_forward.11} parent=19 // pred_check_branch
          %200 = sbr.rel (%p198) target = $region24
        $region23: #{master_encoder_forward.11} parent=19 // pred_region
          %s201 = sand.u32 %s69, 1
          %s202 = sand.u32 %s69, 1
          %s203 = smul.addr %s202, 256
          %s204 = scalar_lea.vmem [#allocation3], %s203
          %s205 = smul.u32 64, %s19
          %s206 = smul.addr %s205, 2
          %s207 = sadd.s32 %s18, %s206
          %s208 = smul.addr %s207, 4
          %s209 = scalar_lea.vmem %s1, %s208
          // Predicated region
          $region25: #{master_encoder_forward.11} parent=23 // pred_check
            _
          $region26: #{master_encoder_forward.11} parent=23 // pred_check_branch
            %211 = sbr.rel (0) target = $region28
          $region27: #{master_encoder_forward.11} parent=23 // pred_region
            // Predicated region
            $region29: #{master_encoder_forward.11} parent=27 // pred_check
              _
            $region30: #{master_encoder_forward.11} parent=27 // pred_check_branch
              %213 = sbr.rel target = $region32
            $region31: #{master_encoder_forward.11} parent=27 // pred_region
              // Predicated region
              $region44: #{master_encoder_forward.11} parent=31 // pred_check
                _
              $region45: #{master_encoder_forward.11} parent=31 // pred_check_branch
                %354 = sbr.rel (0) target = $region47
              $region46: #{master_encoder_forward.11} parent=31 // pred_region
                loop: start=0, step=1, limit=1
                $region48: #{master_encoder_forward.11} parent=46 // loop_pre_header
                  _
                $region49: #{master_encoder_forward.11} parent=46 // loop_header
                  %s356 = sphi 0, %s360
                  %p357 = scmp.ge.s32.totalorder %s356, 1
                  %s361 = sphi %s209, %s209
                  %s362 = sphi %s204, %s204
                $region50: #{master_encoder_forward.11} parent=46 // loop_header_branch
                  %359 = sbr.rel (%p357) target = $region54
                $region51: #{master_encoder_forward.11} parent=46 // loop_body
                  _
                $region52: #{master_encoder_forward.11} parent=46 // loop_footer
                  %s360 = sadd.s32 1, %s356
                $region53: #{master_encoder_forward.11} parent=46 // loop_footer_branch
                  %355 = sbr.rel target = $region49
                $region54: #{master_encoder_forward.11} parent=46 // loop_exit
                  _
                loop: start=0, step=1, limit=1
                $region55: #{master_encoder_forward.11} parent=46 // loop_pre_header
                  _
                $region56: #{master_encoder_forward.11} parent=46 // loop_header
                  %s365 = sphi 0, %s369
                  %p366 = scmp.ge.s32.totalorder %s365, 1
                  %s370 = sphi %s209, %s209
                  %s371 = sphi %s204, %s204
                $region57: #{master_encoder_forward.11} parent=46 // loop_header_branch
                  %368 = sbr.rel (%p366) target = $region61
                $region58: #{master_encoder_forward.11} parent=46 // loop_body
                  %v372 = vld [vmem:[%s370] sm:$0xf]
                  %373 = vst [vmem:[%s371] sm:$0xf] %v372
                  %v374 = vld [vmem:[%s370 + $0x8] sm:$0xf]
                  %375 = vst [vmem:[%s371 + $0x4] sm:$0xf] %v374
                  %v376 = vld [vmem:[%s370 + $0x10] sm:$0xf]
                  %377 = vst [vmem:[%s371 + $0x8] sm:$0xf] %v376
                  %v378 = vld [vmem:[%s370 + $0x18] sm:$0xf]
                  %379 = vst [vmem:[%s371 + $0xc] sm:$0xf] %v378
                  %v380 = vld [vmem:[%s370 + $0x20] sm:$0xf]
                  %381 = vst [vmem:[%s371 + $0x10] sm:$0xf] %v380
                  %v382 = vld [vmem:[%s370 + $0x28] sm:$0xf]
                  %383 = vst [vmem:[%s371 + $0x14] sm:$0xf] %v382
                  %v384 = vld [vmem:[%s370 + $0x30] sm:$0xf]
                  %385 = vst [vmem:[%s371 + $0x18] sm:$0xf] %v384
                  %v386 = vld [vmem:[%s370 + $0x38] sm:$0xf]
                  %387 = vst [vmem:[%s371 + $0x1c] sm:$0xf] %v386
                  %v388 = vld [vmem:[%s370 + $0x40] sm:$0xf]
                  %389 = vst [vmem:[%s371 + $0x20] sm:$0xf] %v388
                  %v390 = vld [vmem:[%s370 + $0x48] sm:$0xf]
                  %391 = vst [vmem:[%s371 + $0x24] sm:$0xf] %v390
                  %v392 = vld [vmem:[%s370 + $0x50] sm:$0xf]
                  %393 = vst [vmem:[%s371 + $0x28] sm:$0xf] %v392
                  %v394 = vld [vmem:[%s370 + $0x58] sm:$0xf]
                  %395 = vst [vmem:[%s371 + $0x2c] sm:$0xf] %v394
                  %v396 = vld [vmem:[%s370 + $0x60] sm:$0xf]
                  %397 = vst [vmem:[%s371 + $0x30] sm:$0xf] %v396
                  %v398 = vld [vmem:[%s370 + $0x68] sm:$0xf]
                  %399 = vst [vmem:[%s371 + $0x34] sm:$0xf] %v398
                  %v400 = vld [vmem:[%s370 + $0x70] sm:$0xf]
                  %401 = vst [vmem:[%s371 + $0x38] sm:$0xf] %v400
                  %v402 = vld [vmem:[%s370 + $0x78] sm:$0xf]
                  %403 = vst [vmem:[%s371 + $0x3c] sm:$0xf] %v402
                  %v404 = vld [vmem:[%s370 + $0x80] sm:$0xf]
                  %405 = vst [vmem:[%s371 + $0x40] sm:$0xf] %v404
                  %v406 = vld [vmem:[%s370 + $0x88] sm:$0xf]
                  %407 = vst [vmem:[%s371 + $0x44] sm:$0xf] %v406
                  %v408 = vld [vmem:[%s370 + $0x90] sm:$0xf]
                  %409 = vst [vmem:[%s371 + $0x48] sm:$0xf] %v408
                  %v410 = vld [vmem:[%s370 + $0x98] sm:$0xf]
                  %411 = vst [vmem:[%s371 + $0x4c] sm:$0xf] %v410
                  %v412 = vld [vmem:[%s370 + $0xa0] sm:$0xf]
                  %413 = vst [vmem:[%s371 + $0x50] sm:$0xf] %v412
                  %v414 = vld [vmem:[%s370 + $0xa8] sm:$0xf]
                  %415 = vst [vmem:[%s371 + $0x54] sm:$0xf] %v414
                  %v416 = vld [vmem:[%s370 + $0xb0] sm:$0xf]
                  %417 = vst [vmem:[%s371 + $0x58] sm:$0xf] %v416
                  %v418 = vld [vmem:[%s370 + $0xb8] sm:$0xf]
                  %419 = vst [vmem:[%s371 + $0x5c] sm:$0xf] %v418
                  %v420 = vld [vmem:[%s370 + $0xc0] sm:$0xf]
                  %421 = vst [vmem:[%s371 + $0x60] sm:$0xf] %v420
                  %v422 = vld [vmem:[%s370 + $0xc8] sm:$0xf]
                  %423 = vst [vmem:[%s371 + $0x64] sm:$0xf] %v422
                  %v424 = vld [vmem:[%s370 + $0xd0] sm:$0xf]
                  %425 = vst [vmem:[%s371 + $0x68] sm:$0xf] %v424
                  %v426 = vld [vmem:[%s370 + $0xd8] sm:$0xf]
                  %427 = vst [vmem:[%s371 + $0x6c] sm:$0xf] %v426
                  %v428 = vld [vmem:[%s370 + $0xe0] sm:$0xf]
                  %429 = vst [vmem:[%s371 + $0x70] sm:$0xf] %v428
                  %v430 = vld [vmem:[%s370 + $0xe8] sm:$0xf]
                  %431 = vst [vmem:[%s371 + $0x74] sm:$0xf] %v430
                  %v432 = vld [vmem:[%s370 + $0xf0] sm:$0xf]
                  %433 = vst [vmem:[%s371 + $0x78] sm:$0xf] %v432
                  %v434 = vld [vmem:[%s370 + $0xf8] sm:$0xf]
                  %435 = vst [vmem:[%s371 + $0x7c] sm:$0xf] %v434
                  %v436 = vld [vmem:[%s370 + $0x100] sm:$0xf]
                  %437 = vst [vmem:[%s371 + $0x80] sm:$0xf] %v436
                  %v438 = vld [vmem:[%s370 + $0x108] sm:$0xf]
                  %439 = vst [vmem:[%s371 + $0x84] sm:$0xf] %v438
                  %v440 = vld [vmem:[%s370 + $0x110] sm:$0xf]
                  %441 = vst [vmem:[%s371 + $0x88] sm:$0xf] %v440
                  %v442 = vld [vmem:[%s370 + $0x118] sm:$0xf]
                  %443 = vst [vmem:[%s371 + $0x8c] sm:$0xf] %v442
                  %v444 = vld [vmem:[%s370 + $0x120] sm:$0xf]
                  %445 = vst [vmem:[%s371 + $0x90] sm:$0xf] %v444
                  %v446 = vld [vmem:[%s370 + $0x128] sm:$0xf]
                  %447 = vst [vmem:[%s371 + $0x94] sm:$0xf] %v446
                  %v448 = vld [vmem:[%s370 + $0x130] sm:$0xf]
                  %449 = vst [vmem:[%s371 + $0x98] sm:$0xf] %v448
                  %v450 = vld [vmem:[%s370 + $0x138] sm:$0xf]
                  %451 = vst [vmem:[%s371 + $0x9c] sm:$0xf] %v450
                  %v452 = vld [vmem:[%s370 + $0x140] sm:$0xf]
                  %453 = vst [vmem:[%s371 + $0xa0] sm:$0xf] %v452
                  %v454 = vld [vmem:[%s370 + $0x148] sm:$0xf]
                  %455 = vst [vmem:[%s371 + $0xa4] sm:$0xf] %v454
                  %v456 = vld [vmem:[%s370 + $0x150] sm:$0xf]
                  %457 = vst [vmem:[%s371 + $0xa8] sm:$0xf] %v456
                  %v458 = vld [vmem:[%s370 + $0x158] sm:$0xf]
                  %459 = vst [vmem:[%s371 + $0xac] sm:$0xf] %v458
                  %v460 = vld [vmem:[%s370 + $0x160] sm:$0xf]
                  %461 = vst [vmem:[%s371 + $0xb0] sm:$0xf] %v460
                  %v462 = vld [vmem:[%s370 + $0x168] sm:$0xf]
                  %463 = vst [vmem:[%s371 + $0xb4] sm:$0xf] %v462
                  %v464 = vld [vmem:[%s370 + $0x170] sm:$0xf]
                  %465 = vst [vmem:[%s371 + $0xb8] sm:$0xf] %v464
                  %v466 = vld [vmem:[%s370 + $0x178] sm:$0xf]
                  %467 = vst [vmem:[%s371 + $0xbc] sm:$0xf] %v466
                  %v468 = vld [vmem:[%s370 + $0x180] sm:$0xf]
                  %469 = vst [vmem:[%s371 + $0xc0] sm:$0xf] %v468
                  %v470 = vld [vmem:[%s370 + $0x188] sm:$0xf]
                  %471 = vst [vmem:[%s371 + $0xc4] sm:$0xf] %v470
                  %v472 = vld [vmem:[%s370 + $0x190] sm:$0xf]
                  %473 = vst [vmem:[%s371 + $0xc8] sm:$0xf] %v472
                  %v474 = vld [vmem:[%s370 + $0x198] sm:$0xf]
                  %475 = vst [vmem:[%s371 + $0xcc] sm:$0xf] %v474
                  %v476 = vld [vmem:[%s370 + $0x1a0] sm:$0xf]
                  %477 = vst [vmem:[%s371 + $0xd0] sm:$0xf] %v476
                  %v478 = vld [vmem:[%s370 + $0x1a8] sm:$0xf]
                  %479 = vst [vmem:[%s371 + $0xd4] sm:$0xf] %v478
                  %v480 = vld [vmem:[%s370 + $0x1b0] sm:$0xf]
                  %481 = vst [vmem:[%s371 + $0xd8] sm:$0xf] %v480
                  %v482 = vld [vmem:[%s370 + $0x1b8] sm:$0xf]
                  %483 = vst [vmem:[%s371 + $0xdc] sm:$0xf] %v482
                  %v484 = vld [vmem:[%s370 + $0x1c0] sm:$0xf]
                  %485 = vst [vmem:[%s371 + $0xe0] sm:$0xf] %v484
                  %v486 = vld [vmem:[%s370 + $0x1c8] sm:$0xf]
                  %487 = vst [vmem:[%s371 + $0xe4] sm:$0xf] %v486
                  %v488 = vld [vmem:[%s370 + $0x1d0] sm:$0xf]
                  %489 = vst [vmem:[%s371 + $0xe8] sm:$0xf] %v488
                  %v490 = vld [vmem:[%s370 + $0x1d8] sm:$0xf]
                  %491 = vst [vmem:[%s371 + $0xec] sm:$0xf] %v490
                  %v492 = vld [vmem:[%s370 + $0x1e0] sm:$0xf]
                  %493 = vst [vmem:[%s371 + $0xf0] sm:$0xf] %v492
                  %v494 = vld [vmem:[%s370 + $0x1e8] sm:$0xf]
                  %495 = vst [vmem:[%s371 + $0xf4] sm:$0xf] %v494
                  %v496 = vld [vmem:[%s370 + $0x1f0] sm:$0xf]
                  %497 = vst [vmem:[%s371 + $0xf8] sm:$0xf] %v496
                  %v498 = vld [vmem:[%s370 + $0x1f8] sm:$0xf]
                  %499 = vst [vmem:[%s371 + $0xfc] sm:$0xf] %v498
                $region59: #{master_encoder_forward.11} parent=46 // loop_footer
                  %s369 = sadd.s32 1, %s365
                $region60: #{master_encoder_forward.11} parent=46 // loop_footer_branch
                  %364 = sbr.rel target = $region56
                $region61: #{master_encoder_forward.11} parent=46 // loop_exit
                  _
              $region47: #{master_encoder_forward.11} parent=31 // pred_fallthru
                _
            $region32: #{master_encoder_forward.11} parent=27 // pred_fallthru
              _
            // Predicated region
            $region33: #{master_encoder_forward.11} parent=27 // pred_check
              _
            $region34: #{master_encoder_forward.11} parent=27 // pred_check_branch
              %215 = sbr.rel (0) target = $region36
            $region35: #{master_encoder_forward.11} parent=27 // pred_region
              loop: start=0, step=1, limit=1
              $region37: #{master_encoder_forward.11} parent=35 // loop_pre_header
                _
              $region38: #{master_encoder_forward.11} parent=35 // loop_header
                %s218 = sphi 0, %s222
                %p219 = scmp.ge.s32.totalorder %s218, 1
                %s223 = sphi %s209, %s209
                %s224 = sphi %s204, %s204
              $region39: #{master_encoder_forward.11} parent=35 // loop_header_branch
                %221 = sbr.rel (%p219) target = $region43
              $region40: #{master_encoder_forward.11} parent=35 // loop_body
                %v225 = vld [vmem:[%s223] sm:$0xf]
                %226 = vst [vmem:[%s224] sm:$0xf] %v225
                %v227 = vld [vmem:[%s223 + $0x8] sm:$0xf]
                %228 = vst [vmem:[%s224 + $0x4] sm:$0xf] %v227
                %v229 = vld [vmem:[%s223 + $0x10] sm:$0xf]
                %230 = vst [vmem:[%s224 + $0x8] sm:$0xf] %v229
                %v231 = vld [vmem:[%s223 + $0x18] sm:$0xf]
                %232 = vst [vmem:[%s224 + $0xc] sm:$0xf] %v231
                %v233 = vld [vmem:[%s223 + $0x20] sm:$0xf]
                %234 = vst [vmem:[%s224 + $0x10] sm:$0xf] %v233
                %v235 = vld [vmem:[%s223 + $0x28] sm:$0xf]
                %236 = vst [vmem:[%s224 + $0x14] sm:$0xf] %v235
                %v237 = vld [vmem:[%s223 + $0x30] sm:$0xf]
                %238 = vst [vmem:[%s224 + $0x18] sm:$0xf] %v237
                %v239 = vld [vmem:[%s223 + $0x38] sm:$0xf]
                %240 = vst [vmem:[%s224 + $0x1c] sm:$0xf] %v239
                %v241 = vld [vmem:[%s223 + $0x40] sm:$0xf]
                %242 = vst [vmem:[%s224 + $0x20] sm:$0xf] %v241
                %v243 = vld [vmem:[%s223 + $0x48] sm:$0xf]
                %244 = vst [vmem:[%s224 + $0x24] sm:$0xf] %v243
                %v245 = vld [vmem:[%s223 + $0x50] sm:$0xf]
                %246 = vst [vmem:[%s224 + $0x28] sm:$0xf] %v245
                %v247 = vld [vmem:[%s223 + $0x58] sm:$0xf]
                %248 = vst [vmem:[%s224 + $0x2c] sm:$0xf] %v247
                %v249 = vld [vmem:[%s223 + $0x60] sm:$0xf]
                %250 = vst [vmem:[%s224 + $0x30] sm:$0xf] %v249
                %v251 = vld [vmem:[%s223 + $0x68] sm:$0xf]
                %252 = vst [vmem:[%s224 + $0x34] sm:$0xf] %v251
                %v253 = vld [vmem:[%s223 + $0x70] sm:$0xf]
                %254 = vst [vmem:[%s224 + $0x38] sm:$0xf] %v253
                %v255 = vld [vmem:[%s223 + $0x78] sm:$0xf]
                %256 = vst [vmem:[%s224 + $0x3c] sm:$0xf] %v255
                %v257 = vld [vmem:[%s223 + $0x80] sm:$0xf]
                %258 = vst [vmem:[%s224 + $0x40] sm:$0xf] %v257
                %v259 = vld [vmem:[%s223 + $0x88] sm:$0xf]
                %260 = vst [vmem:[%s224 + $0x44] sm:$0xf] %v259
                %v261 = vld [vmem:[%s223 + $0x90] sm:$0xf]
                %262 = vst [vmem:[%s224 + $0x48] sm:$0xf] %v261
                %v263 = vld [vmem:[%s223 + $0x98] sm:$0xf]
                %264 = vst [vmem:[%s224 + $0x4c] sm:$0xf] %v263
                %v265 = vld [vmem:[%s223 + $0xa0] sm:$0xf]
                %266 = vst [vmem:[%s224 + $0x50] sm:$0xf] %v265
                %v267 = vld [vmem:[%s223 + $0xa8] sm:$0xf]
                %268 = vst [vmem:[%s224 + $0x54] sm:$0xf] %v267
                %v269 = vld [vmem:[%s223 + $0xb0] sm:$0xf]
                %270 = vst [vmem:[%s224 + $0x58] sm:$0xf] %v269
                %v271 = vld [vmem:[%s223 + $0xb8] sm:$0xf]
                %272 = vst [vmem:[%s224 + $0x5c] sm:$0xf] %v271
                %v273 = vld [vmem:[%s223 + $0xc0] sm:$0xf]
                %274 = vst [vmem:[%s224 + $0x60] sm:$0xf] %v273
                %v275 = vld [vmem:[%s223 + $0xc8] sm:$0xf]
                %276 = vst [vmem:[%s224 + $0x64] sm:$0xf] %v275
                %v277 = vld [vmem:[%s223 + $0xd0] sm:$0xf]
                %278 = vst [vmem:[%s224 + $0x68] sm:$0xf] %v277
                %v279 = vld [vmem:[%s223 + $0xd8] sm:$0xf]
                %280 = vst [vmem:[%s224 + $0x6c] sm:$0xf] %v279
                %v281 = vld [vmem:[%s223 + $0xe0] sm:$0xf]
                %282 = vst [vmem:[%s224 + $0x70] sm:$0xf] %v281
                %v283 = vld [vmem:[%s223 + $0xe8] sm:$0xf]
                %284 = vst [vmem:[%s224 + $0x74] sm:$0xf] %v283
                %v285 = vld [vmem:[%s223 + $0xf0] sm:$0xf]
                %286 = vst [vmem:[%s224 + $0x78] sm:$0xf] %v285
                %v287 = vld [vmem:[%s223 + $0xf8] sm:$0xf]
                %288 = vst [vmem:[%s224 + $0x7c] sm:$0xf] %v287
                %v289 = vld [vmem:[%s223 + $0x100] sm:$0xf]
                %290 = vst [vmem:[%s224 + $0x80] sm:$0xf] %v289
                %v291 = vld [vmem:[%s223 + $0x108] sm:$0xf]
                %292 = vst [vmem:[%s224 + $0x84] sm:$0xf] %v291
                %v293 = vld [vmem:[%s223 + $0x110] sm:$0xf]
                %294 = vst [vmem:[%s224 + $0x88] sm:$0xf] %v293
                %v295 = vld [vmem:[%s223 + $0x118] sm:$0xf]
                %296 = vst [vmem:[%s224 + $0x8c] sm:$0xf] %v295
                %v297 = vld [vmem:[%s223 + $0x120] sm:$0xf]
                %298 = vst [vmem:[%s224 + $0x90] sm:$0xf] %v297
                %v299 = vld [vmem:[%s223 + $0x128] sm:$0xf]
                %300 = vst [vmem:[%s224 + $0x94] sm:$0xf] %v299
                %v301 = vld [vmem:[%s223 + $0x130] sm:$0xf]
                %302 = vst [vmem:[%s224 + $0x98] sm:$0xf] %v301
                %v303 = vld [vmem:[%s223 + $0x138] sm:$0xf]
                %304 = vst [vmem:[%s224 + $0x9c] sm:$0xf] %v303
                %v305 = vld [vmem:[%s223 + $0x140] sm:$0xf]
                %306 = vst [vmem:[%s224 + $0xa0] sm:$0xf] %v305
                %v307 = vld [vmem:[%s223 + $0x148] sm:$0xf]
                %308 = vst [vmem:[%s224 + $0xa4] sm:$0xf] %v307
                %v309 = vld [vmem:[%s223 + $0x150] sm:$0xf]
                %310 = vst [vmem:[%s224 + $0xa8] sm:$0xf] %v309
                %v311 = vld [vmem:[%s223 + $0x158] sm:$0xf]
                %312 = vst [vmem:[%s224 + $0xac] sm:$0xf] %v311
                %v313 = vld [vmem:[%s223 + $0x160] sm:$0xf]
                %314 = vst [vmem:[%s224 + $0xb0] sm:$0xf] %v313
                %v315 = vld [vmem:[%s223 + $0x168] sm:$0xf]
                %316 = vst [vmem:[%s224 + $0xb4] sm:$0xf] %v315
                %v317 = vld [vmem:[%s223 + $0x170] sm:$0xf]
                %318 = vst [vmem:[%s224 + $0xb8] sm:$0xf] %v317
                %v319 = vld [vmem:[%s223 + $0x178] sm:$0xf]
                %320 = vst [vmem:[%s224 + $0xbc] sm:$0xf] %v319
                %v321 = vld [vmem:[%s223 + $0x180] sm:$0xf]
                %322 = vst [vmem:[%s224 + $0xc0] sm:$0xf] %v321
                %v323 = vld [vmem:[%s223 + $0x188] sm:$0xf]
                %324 = vst [vmem:[%s224 + $0xc4] sm:$0xf] %v323
                %v325 = vld [vmem:[%s223 + $0x190] sm:$0xf]
                %326 = vst [vmem:[%s224 + $0xc8] sm:$0xf] %v325
                %v327 = vld [vmem:[%s223 + $0x198] sm:$0xf]
                %328 = vst [vmem:[%s224 + $0xcc] sm:$0xf] %v327
                %v329 = vld [vmem:[%s223 + $0x1a0] sm:$0xf]
                %330 = vst [vmem:[%s224 + $0xd0] sm:$0xf] %v329
                %v331 = vld [vmem:[%s223 + $0x1a8] sm:$0xf]
                %332 = vst [vmem:[%s224 + $0xd4] sm:$0xf] %v331
                %v333 = vld [vmem:[%s223 + $0x1b0] sm:$0xf]
                %334 = vst [vmem:[%s224 + $0xd8] sm:$0xf] %v333
                %v335 = vld [vmem:[%s223 + $0x1b8] sm:$0xf]
                %336 = vst [vmem:[%s224 + $0xdc] sm:$0xf] %v335
                %v337 = vld [vmem:[%s223 + $0x1c0] sm:$0xf]
                %338 = vst [vmem:[%s224 + $0xe0] sm:$0xf] %v337
                %v339 = vld [vmem:[%s223 + $0x1c8] sm:$0xf]
                %340 = vst [vmem:[%s224 + $0xe4] sm:$0xf] %v339
                %v341 = vld [vmem:[%s223 + $0x1d0] sm:$0xf]
                %342 = vst [vmem:[%s224 + $0xe8] sm:$0xf] %v341
                %v343 = vld [vmem:[%s223 + $0x1d8] sm:$0xf]
                %344 = vst [vmem:[%s224 + $0xec] sm:$0xf] %v343
                %v345 = vld [vmem:[%s223 + $0x1e0] sm:$0xf]
                %346 = vst [vmem:[%s224 + $0xf0] sm:$0xf] %v345
                %v347 = vld [vmem:[%s223 + $0x1e8] sm:$0xf]
                %348 = vst [vmem:[%s224 + $0xf4] sm:$0xf] %v347
                %v349 = vld [vmem:[%s223 + $0x1f0] sm:$0xf]
                %350 = vst [vmem:[%s224 + $0xf8] sm:$0xf] %v349
                %v351 = vld [vmem:[%s223 + $0x1f8] sm:$0xf]
                %352 = vst [vmem:[%s224 + $0xfc] sm:$0xf] %v351
              $region41: #{master_encoder_forward.11} parent=35 // loop_footer
                %s222 = sadd.s32 1, %s218
              $region42: #{master_encoder_forward.11} parent=35 // loop_footer_branch
                %217 = sbr.rel target = $region38
              $region43: #{master_encoder_forward.11} parent=35 // loop_exit
                _
            $region36: #{master_encoder_forward.11} parent=27 // pred_fallthru
              _
          $region28: #{master_encoder_forward.11} parent=23 // pred_fallthru
            _
          %500 = vnop
        $region24: #{master_encoder_forward.11} parent=19 // pred_fallthru
          _
        // Predicated region
        $region62: #{master_encoder_forward.11} parent=19 // pred_check
          %p501 = pneg %p105
        $region63: #{master_encoder_forward.11} parent=19 // pred_check_branch
          %503 = sbr.rel (%p501) target = $region65
        $region64: #{master_encoder_forward.11} parent=19 // pred_region
          %p504 = scmp.lt.s32.totalorder %s18, 1
          %s505 = scalar_select %p504, %s18, 1
          %s506 = scalar_lea.vmem %s2, %s505
        $region65: #{master_encoder_forward.11} parent=19 // pred_fallthru
          _
        // Predicated region
        $region66: #{master_encoder_forward.11} parent=19 // pred_check
          %p507 = pneg %p133
        $region67: #{master_encoder_forward.11} parent=19 // pred_check_branch
          %509 = sbr.rel (%p507) target = $region69
        $region68: #{master_encoder_forward.11} parent=19 // pred_region
          %p510 = scmp.lt.s32.totalorder %s17, 0
          %s511 = scalar_select %p510, %s17, 0
          %p512 = scmp.lt.s32.totalorder %s18, 1
          %s513 = scalar_select %p512, %s18, 1
          %s514 = smul.addr %s511, 2
          %s515 = sadd.s32 %s513, %s514
          %s516 = smul.addr %s515, 2
          %s517 = scalar_lea.vmem %s3, %s516
        $region69: #{master_encoder_forward.11} parent=19 // pred_fallthru
          _
      $region20: #{master_encoder_forward.11} parent=5 // pred_fallthru
        _
      %p518 = scmp.le.s32.totalorder 1, %s10
      %p519 = scmp.lt.s32.totalorder %s10, 3
      %p520 = pnand %p518, %p519
      %p521 = pneg %p520
      // Predicated region
      $region70: #{master_encoder_forward.11} parent=5 // pred_check
        _
      $region71: #{master_encoder_forward.11} parent=5 // pred_check_branch
        %523 = sbr.rel (%p520) target = $region73
      $region72: #{master_encoder_forward.11} parent=5 // pred_region
        %s524 = ssub.s32 %s10, 1
        %s525 = sand.u32 %s72, 1
        %s526 = sand.u32 %s72, 1
        %s527 = smul.addr %s526, 256
        %s528 = scalar_lea.vmem [#allocation3], %s527
        // Predicated region
        $region74: #{master_encoder_forward.11} parent=72 // pred_check
          %p529 = pneg %p85
        $region75: #{master_encoder_forward.11} parent=72 // pred_check_branch
          %531 = sbr.rel (%p529) target = $region77
        $region76: #{master_encoder_forward.11} parent=72 // pred_region
          _
        $region77: #{master_encoder_forward.11} parent=72 // pred_fallthru
          _
        %s532 = smul.u32 4, %s22
        %p533 = scmp.lt.s32.totalorder %s20, 0
        %s534 = scalar_select %p533, %s20, 0
        %p535 = scmp.lt.s32.totalorder %s532, 3
        %s536 = scalar_select %p535, %s532, 3
        %s537 = smul.addr %s534, 4
        %s538 = sadd.s32 %s536, %s537
        %s539 = scalar_lea.vmem %s0, %s538
        %p540 = pneg %p57
        %p541 = pneg %p54
        %s542 = sand.u32 %s72, 1
        %s543 = sand.u32 %s72, 1
        %s544 = smul.addr %s543, 256
        %s545 = scalar_lea.vmem [#allocation3], %s544
        %p546 = pneg %p85
        %p547 = pneg %p82
        %p548 = scmp.lt.s32.totalorder %s21, 1
        %s549 = scalar_select %p548, %s21, 1
        %s550 = scalar_lea.vmem %s2, %s549
        %p551 = pneg %p111
        %p552 = pneg %p108
        %p553 = scmp.lt.s32.totalorder %s20, 0
        %s554 = scalar_select %p553, %s20, 0
        %p555 = scmp.lt.s32.totalorder %s21, 1
        %s556 = scalar_select %p555, %s21, 1
        %s557 = smul.addr %s554, 2
        %s558 = sadd.s32 %s556, %s557
        %s559 = smul.addr %s558, 2
        %s560 = scalar_lea.vmem %s3, %s559
        %p561 = pneg %p139
        %p562 = pneg %p136
        %p563 = pneg %p167
        %p564 = pneg %p164
        %p565 = scmp.lt.s32.totalorder %s20, 0
        %s566 = scalar_select %p565, %s20, 0
        %p567 = scmp.lt.s32.totalorder %s21, 1
        %s568 = scalar_select %p567, %s21, 1
        %s569 = smul.addr %s566, 2
        %s570 = sadd.s32 %s568, %s569
        %s571 = smul.addr %s570, 2
        %s572 = scalar_lea.vmem %s4, %s571
        %s573 = smul.u32 4, %s22
        %p574 = scmp.lt.s32.totalorder %s20, 0
        %s575 = scalar_select %p574, %s20, 0
        %p576 = scmp.lt.s32.totalorder %s573, 3
        %s577 = scalar_select %p576, %s573, 3
        %s578 = smul.addr %s575, 4
        %s579 = sadd.s32 %s577, %s578
        %s580 = scalar_lea.vmem %s0, %s579
        %s581 = smul.u32 4, %s22
        %s582 = smul.u32 64, %s22
        %p583 = scmp.lt.s32.totalorder %s21, 1
        %s584 = scalar_select %p583, %s21, 1
        %s585 = scalar_lea.vmem %s2, %s584
        %p586 = scmp.lt.s32.totalorder %s20, 0
        %s587 = scalar_select %p586, %s20, 0
        %p588 = scmp.lt.s32.totalorder %s21, 1
        %s589 = scalar_select %p588, %s21, 1
        %s590 = smul.addr %s587, 2
        %s591 = sadd.s32 %s589, %s590
        %s592 = smul.addr %s591, 2
        %s593 = scalar_lea.vmem %s3, %s592
        %p594 = scmp.lt.s32.totalorder %s20, 0
        %s595 = scalar_select %p594, %s20, 0
        %p596 = scmp.lt.s32.totalorder %s21, 1
        %s597 = scalar_select %p596, %s21, 1
        %s598 = smul.addr %s595, 2
        %s599 = sadd.s32 %s597, %s598
        %s600 = smul.addr %s599, 2
        %s601 = scalar_lea.vmem %s4, %s600
        %p603 = scmp.eq.s32.totalorder %s22, 0
        // Predicated region
        $region78: #{master_encoder_forward.11} parent=72 // pred_check
          %p604 = pneg %p603
        $region79: #{master_encoder_forward.11} parent=72 // pred_check_branch
          %606 = sbr.rel (%p604) target = $region81
        $region80: #{master_encoder_forward.11} parent=72 // pred_region
          %607 = vst [vmem:[#allocation2] sm:$0x3] 0.0
        $region81: #{master_encoder_forward.11} parent=72 // pred_fallthru
          _
        %v608 = vld [vmem:[#allocation2] sm:$0x3]
        %v609 = vld [vmem:[%s580] sm:$0xf]
        %v610 = vld [vmem:[%s528] sm:$0xf]
        %v611 = vld [vmem:[%s528 + $0x4] sm:$0xf]
        %v612 = vld [vmem:[%s528 + $0x8] sm:$0xf]
        %v613 = vld [vmem:[%s528 + $0xc] sm:$0xf]
        %v614 = vld [vmem:[%s528 + $0x10] sm:$0xf]
        %v615 = vld [vmem:[%s528 + $0x14] sm:$0xf]
        %v616 = vld [vmem:[%s528 + $0x18] sm:$0xf]
        %v617 = vld [vmem:[%s528 + $0x1c] sm:$0xf]
        %v618 = vld [vmem:[%s528 + $0x20] sm:$0xf]
        %v619 = vld [vmem:[%s528 + $0x24] sm:$0xf]
        %v620 = vld [vmem:[%s528 + $0x28] sm:$0xf]
        %v621 = vld [vmem:[%s528 + $0x2c] sm:$0xf]
        %v622 = vld [vmem:[%s528 + $0x30] sm:$0xf]
        %v623 = vld [vmem:[%s528 + $0x34] sm:$0xf]
        %v624 = vld [vmem:[%s528 + $0x38] sm:$0xf]
        %v625 = vld [vmem:[%s528 + $0x3c] sm:$0xf]
        %v626 = vld [vmem:[%s528 + $0x40] sm:$0xf]
        %v627 = vld [vmem:[%s528 + $0x44] sm:$0xf]
        %v628 = vld [vmem:[%s528 + $0x48] sm:$0xf]
        %v629 = vld [vmem:[%s528 + $0x4c] sm:$0xf]
        %v630 = vld [vmem:[%s528 + $0x50] sm:$0xf]
        %v631 = vld [vmem:[%s528 + $0x54] sm:$0xf]
        %v632 = vld [vmem:[%s528 + $0x58] sm:$0xf]
        %v633 = vld [vmem:[%s528 + $0x5c] sm:$0xf]
        %v634 = vld [vmem:[%s528 + $0x60] sm:$0xf]
        %v635 = vld [vmem:[%s528 + $0x64] sm:$0xf]
        %v636 = vld [vmem:[%s528 + $0x68] sm:$0xf]
        %v637 = vld [vmem:[%s528 + $0x6c] sm:$0xf]
        %v638 = vld [vmem:[%s528 + $0x70] sm:$0xf]
        %v639 = vld [vmem:[%s528 + $0x74] sm:$0xf]
        %v640 = vld [vmem:[%s528 + $0x78] sm:$0xf]
        %v641 = vld [vmem:[%s528 + $0x7c] sm:$0xf]
        %v642 = vld [vmem:[%s528 + $0x80] sm:$0xf]
        %v643 = vld [vmem:[%s528 + $0x84] sm:$0xf]
        %v644 = vld [vmem:[%s528 + $0x88] sm:$0xf]
        %v645 = vld [vmem:[%s528 + $0x8c] sm:$0xf]
        %v646 = vld [vmem:[%s528 + $0x90] sm:$0xf]
        %v647 = vld [vmem:[%s528 + $0x94] sm:$0xf]
        %v648 = vld [vmem:[%s528 + $0x98] sm:$0xf]
        %v649 = vld [vmem:[%s528 + $0x9c] sm:$0xf]
        %v650 = vld [vmem:[%s528 + $0xa0] sm:$0xf]
        %v651 = vld [vmem:[%s528 + $0xa4] sm:$0xf]
        %v652 = vld [vmem:[%s528 + $0xa8] sm:$0xf]
        %v653 = vld [vmem:[%s528 + $0xac] sm:$0xf]
        %v654 = vld [vmem:[%s528 + $0xb0] sm:$0xf]
        %v655 = vld [vmem:[%s528 + $0xb4] sm:$0xf]
        %v656 = vld [vmem:[%s528 + $0xb8] sm:$0xf]
        %v657 = vld [vmem:[%s528 + $0xbc] sm:$0xf]
        %v658 = vld [vmem:[%s528 + $0xc0] sm:$0xf]
        %v659 = vld [vmem:[%s528 + $0xc4] sm:$0xf]
        %v660 = vld [vmem:[%s528 + $0xc8] sm:$0xf]
        %v661 = vld [vmem:[%s528 + $0xcc] sm:$0xf]
        %v662 = vld [vmem:[%s528 + $0xd0] sm:$0xf]
        %v663 = vld [vmem:[%s528 + $0xd4] sm:$0xf]
        %v664 = vld [vmem:[%s528 + $0xd8] sm:$0xf]
        %v665 = vld [vmem:[%s528 + $0xdc] sm:$0xf]
        %v666 = vld [vmem:[%s528 + $0xe0] sm:$0xf]
        %v667 = vld [vmem:[%s528 + $0xe4] sm:$0xf]
        %v668 = vld [vmem:[%s528 + $0xe8] sm:$0xf]
        %v669 = vld [vmem:[%s528 + $0xec] sm:$0xf]
        %v670 = vld [vmem:[%s528 + $0xf0] sm:$0xf]
        %v671 = vld [vmem:[%s528 + $0xf4] sm:$0xf]
        %v672 = vld [vmem:[%s528 + $0xf8] sm:$0xf]
        %v673 = vld [vmem:[%s528 + $0xfc] sm:$0xf]
        %v676 = vunpack.c.l.s4 1966171168
        %v677 = vunpack.c.0.s8 %v676
        %v678 = vlaneseq
        %v679 = vshrl.u32 %v678, 7
        %v680 = vsub.s32 %v677, %v679
        %v681 = vrot.slane %v609, %v680
        %v682 = vcombine.high %v681, %v681
        %v684 = vunpack.c.l.s4 1966171168
        %v685 = vunpack.c.0.s8 %v684
        %v686 = vlaneseq
        %v687 = vshrl.u32 %v686, 7
        %v688 = vsub.s32 %v685, %v687
        %v689 = vrot.slane %v681, %v688
        %v691 = vunpack.c.l.s4 1966171168
        %v692 = vunpack.c.0.s8 %v691
        %v693 = vlaneseq
        %v694 = vshrl.u32 %v693, 7
        %v695 = vsub.s32 %v692, %v694
        %v696 = vrot.slane %v682, %v695
        %v697 = vcombine.high %v689, %v689
        %v698 = vcombine.high %v696, %v696
        %v767 = vunpack.c.l.b16 %v610
        %v768 = vunpack.c.l.b16 %v611
        %v769 = vunpack.c.l.b16 %v612
        %v770 = vunpack.c.l.b16 %v613
        %v771 = vunpack.c.l.b16 %v614
        %v772 = vunpack.c.l.b16 %v615
        %v773 = vunpack.c.l.b16 %v616
        %v774 = vunpack.c.l.b16 %v617
        %v775 = vunpack.c.l.b16 %v618
        %v776 = vunpack.c.l.b16 %v619
        %v777 = vunpack.c.l.b16 %v620
        %v778 = vunpack.c.l.b16 %v621
        %v779 = vunpack.c.l.b16 %v622
        %v780 = vunpack.c.l.b16 %v623
        %v781 = vunpack.c.l.b16 %v624
        %v782 = vunpack.c.l.b16 %v625
        %v783 = vunpack.c.l.b16 %v626
        %v784 = vunpack.c.l.b16 %v627
        %v785 = vunpack.c.l.b16 %v628
        %v786 = vunpack.c.l.b16 %v629
        %v787 = vunpack.c.l.b16 %v630
        %v788 = vunpack.c.l.b16 %v631
        %v789 = vunpack.c.l.b16 %v632
        %v790 = vunpack.c.l.b16 %v633
        %v791 = vunpack.c.l.b16 %v634
        %v792 = vunpack.c.l.b16 %v635
        %v793 = vunpack.c.l.b16 %v636
        %v794 = vunpack.c.l.b16 %v637
        %v795 = vunpack.c.l.b16 %v638
        %v796 = vunpack.c.l.b16 %v639
        %v797 = vunpack.c.l.b16 %v640
        %v798 = vunpack.c.l.b16 %v641
        %v799 = vunpack.c.l.b16 %v642
        %v800 = vunpack.c.l.b16 %v643
        %v801 = vunpack.c.l.b16 %v644
        %v802 = vunpack.c.l.b16 %v645
        %v803 = vunpack.c.l.b16 %v646
        %v804 = vunpack.c.l.b16 %v647
        %v805 = vunpack.c.l.b16 %v648
        %v806 = vunpack.c.l.b16 %v649
        %v807 = vunpack.c.l.b16 %v650
        %v808 = vunpack.c.l.b16 %v651
        %v809 = vunpack.c.l.b16 %v652
        %v810 = vunpack.c.l.b16 %v653
        %v811 = vunpack.c.l.b16 %v654
        %v812 = vunpack.c.l.b16 %v655
        %v813 = vunpack.c.l.b16 %v656
        %v814 = vunpack.c.l.b16 %v657
        %v815 = vunpack.c.l.b16 %v658
        %v816 = vunpack.c.l.b16 %v659
        %v817 = vunpack.c.l.b16 %v660
        %v818 = vunpack.c.l.b16 %v661
        %v819 = vunpack.c.l.b16 %v662
        %v820 = vunpack.c.l.b16 %v663
        %v821 = vunpack.c.l.b16 %v664
        %v822 = vunpack.c.l.b16 %v665
        %v823 = vunpack.c.l.b16 %v666
        %v824 = vunpack.c.l.b16 %v667
        %v825 = vunpack.c.l.b16 %v668
        %v826 = vunpack.c.l.b16 %v669
        %v827 = vunpack.c.l.b16 %v670
        %v828 = vunpack.c.l.b16 %v671
        %v829 = vunpack.c.l.b16 %v672
        %v830 = vunpack.c.l.b16 %v673
        %v831 = vpack.c.b16 %v768, %v767
        %v832 = vpack.c.b16 %v770, %v769
        %v833 = vpack.c.b16 %v772, %v771
        %v834 = vpack.c.b16 %v774, %v773
        %v835 = vpack.c.b16 %v776, %v775
        %v836 = vpack.c.b16 %v778, %v777
        %v837 = vpack.c.b16 %v780, %v779
        %v838 = vpack.c.b16 %v782, %v781
        %v839 = vpack.c.b16 %v784, %v783
        %v840 = vpack.c.b16 %v786, %v785
        %v841 = vpack.c.b16 %v788, %v787
        %v842 = vpack.c.b16 %v790, %v789
        %v843 = vpack.c.b16 %v792, %v791
        %v844 = vpack.c.b16 %v794, %v793
        %v845 = vpack.c.b16 %v796, %v795
        %v846 = vpack.c.b16 %v798, %v797
        %v847 = vpack.c.b16 %v800, %v799
        %v848 = vpack.c.b16 %v802, %v801
        %v849 = vpack.c.b16 %v804, %v803
        %v850 = vpack.c.b16 %v806, %v805
        %v851 = vpack.c.b16 %v808, %v807
        %v852 = vpack.c.b16 %v810, %v809
        %v853 = vpack.c.b16 %v812, %v811
        %v854 = vpack.c.b16 %v814, %v813
        %v855 = vpack.c.b16 %v816, %v815
        %v856 = vpack.c.b16 %v818, %v817
        %v857 = vpack.c.b16 %v820, %v819
        %v858 = vpack.c.b16 %v822, %v821
        %v859 = vpack.c.b16 %v824, %v823
        %v860 = vpack.c.b16 %v826, %v825
        %v861 = vpack.c.b16 %v828, %v827
        %v862 = vpack.c.b16 %v830, %v829
        %895 = vmatprep.subr.bf16.mxu0 0
        %896 = vmatpush1.bf16.msra.mxu0 %v831
        %897 = vmatprep.subr.bf16.mxu0 0
        %898 = vmatpush1.bf16.msra.mxu0 %v832
        %899 = vmatprep.subr.bf16.mxu0 0
        %900 = vmatpush1.bf16.msra.mxu0 %v833
        %901 = vmatprep.subr.bf16.mxu0 0
        %902 = vmatpush1.bf16.msra.mxu0 %v834
        %903 = vmatprep.subr.bf16.mxu0 0
        %904 = vmatpush1.bf16.msra.mxu0 %v835
        %905 = vmatprep.subr.bf16.mxu0 0
        %906 = vmatpush1.bf16.msra.mxu0 %v836
        %907 = vmatprep.subr.bf16.mxu0 0
        %908 = vmatpush1.bf16.msra.mxu0 %v837
        %909 = vmatprep.subr.bf16.mxu0 0
        %910 = vmatpush1.bf16.msra.mxu0 %v838
        %911 = vmatprep.subr.bf16.mxu0 0
        %912 = vmatpush1.bf16.msra.mxu0 %v839
        %913 = vmatprep.subr.bf16.mxu0 0
        %914 = vmatpush1.bf16.msra.mxu0 %v840
        %915 = vmatprep.subr.bf16.mxu0 0
        %916 = vmatpush1.bf16.msra.mxu0 %v841
        %917 = vmatprep.subr.bf16.mxu0 0
        %918 = vmatpush1.bf16.msra.mxu0 %v842
        %919 = vmatprep.subr.bf16.mxu0 0
        %920 = vmatpush1.bf16.msra.mxu0 %v843
        %921 = vmatprep.subr.bf16.mxu0 0
        %922 = vmatpush1.bf16.msra.mxu0 %v844
        %923 = vmatprep.subr.bf16.mxu0 0
        %924 = vmatpush1.bf16.msra.mxu0 %v845
        %925 = vmatprep.subr.bf16.mxu0 0
        %926 = vmatpush1.bf16.msra.mxu0 %v846
        %927 = vmatprep.mubr.bf16.mxu0 %v696
        %928 = vmatmul.mubr.bf16.gmra.mrb[0].mxu0 %v689
        %v929 = vpop.f32.mrb[0].mxu0
        %v930 = vadd.f32 0.0, %v929
        %v931 = vpop.f32.mrb[0].mxu0
        %v932 = vpop.f32.mrb[0].mxu0
        %v933 = vpop.f32.mrb[0].mxu0
        %934 = vdwg.mxu0
        %935 = vmatprep.subr.bf16.mxu0 0
        %936 = vmatpush1.bf16.msra.mxu0 %v847
        %937 = vmatprep.subr.bf16.mxu0 0
        %938 = vmatpush1.bf16.msra.mxu0 %v848
        %939 = vmatprep.subr.bf16.mxu0 0
        %940 = vmatpush1.bf16.msra.mxu0 %v849
        %941 = vmatprep.subr.bf16.mxu0 0
        %942 = vmatpush1.bf16.msra.mxu0 %v850
        %943 = vmatprep.subr.bf16.mxu0 0
        %944 = vmatpush1.bf16.msra.mxu0 %v851
        %945 = vmatprep.subr.bf16.mxu0 0
        %946 = vmatpush1.bf16.msra.mxu0 %v852
        %947 = vmatprep.subr.bf16.mxu0 0
        %948 = vmatpush1.bf16.msra.mxu0 %v853
        %949 = vmatprep.subr.bf16.mxu0 0
        %950 = vmatpush1.bf16.msra.mxu0 %v854
        %951 = vmatprep.subr.bf16.mxu0 0
        %952 = vmatpush1.bf16.msra.mxu0 %v855
        %953 = vmatprep.subr.bf16.mxu0 0
        %954 = vmatpush1.bf16.msra.mxu0 %v856
        %955 = vmatprep.subr.bf16.mxu0 0
        %956 = vmatpush1.bf16.msra.mxu0 %v857
        %957 = vmatprep.subr.bf16.mxu0 0
        %958 = vmatpush1.bf16.msra.mxu0 %v858
        %959 = vmatprep.subr.bf16.mxu0 0
        %960 = vmatpush1.bf16.msra.mxu0 %v859
        %961 = vmatprep.subr.bf16.mxu0 0
        %962 = vmatpush1.bf16.msra.mxu0 %v860
        %963 = vmatprep.subr.bf16.mxu0 0
        %964 = vmatpush1.bf16.msra.mxu0 %v861
        %965 = vmatprep.subr.bf16.mxu0 0
        %966 = vmatpush1.bf16.msra.mxu0 %v862
        %967 = vmatprep.mubr.bf16.mxu0 %v698
        %968 = vmatmul.mubr.bf16.gmra.mrb[0].mxu0 %v697
        %v969 = vpop.f32.mrb[0].mxu0
        %v970 = vadd.f32 %v930, %v969
        %v971 = vpop.f32.mrb[0].mxu0
        %v972 = vpop.f32.mrb[0].mxu0
        %v973 = vpop.f32.mrb[0].mxu0
        %974 = vdwg.mxu0
        %v975 = vadd.f32 %v608, %v970
        %976 = vst [vmem:[#allocation2] sm:$0x3] %v975
        // Predicated region
        $region82: #{master_encoder_forward.11} parent=72 // pred_check
          %p977 = pneg %p603
        $region83: #{master_encoder_forward.11} parent=72 // pred_check_branch
          %979 = sbr.rel (%p977) target = $region85
        $region84: #{master_encoder_forward.11} parent=72 // pred_region
          %v980 = vld [vmem:[#allocation2] sm:$0x3]
          %v981 = vld [vmem:[%s585] sm:$0x1]
          %v983 = vlaneseq
          %v984 = vshrl.u32 %v983, 7
          %v985 = vsub.s32 0, %v984
          %v986 = vrot.slane %v981, %v985
          %v988 = vadd.f32 %v980, %v986
          %v989 = vld [vmem:[%s593] sm:$0x3]
          %v990 = vadd.f32 %v988, %v989
          %991 = vst [vmem:[%s601] sm:$0x3] %v990
        $region85: #{master_encoder_forward.11} parent=72 // pred_fallthru
          _
        %p992 = scmp.lt.s32.totalorder %s20, 0
        %s993 = scalar_select %p992, %s20, 0
        %p994 = scmp.lt.s32.totalorder %s21, 1
        %s995 = scalar_select %p994, %s21, 1
        %s996 = smul.addr %s993, 2
        %s997 = sadd.s32 %s995, %s996
        %s998 = smul.addr %s997, 2
        %s999 = scalar_lea.vmem %s4, %s998
        // Predicated region
        $region86: #{master_encoder_forward.11} parent=72 // pred_check
          %p1000 = pneg %p164
        $region87: #{master_encoder_forward.11} parent=72 // pred_check_branch
          %1002 = sbr.rel (%p1000) target = $region89
        $region88: #{master_encoder_forward.11} parent=72 // pred_region
          _
        $region89: #{master_encoder_forward.11} parent=72 // pred_fallthru
          _
      $region73: #{master_encoder_forward.11} parent=5 // pred_fallthru
        _
      %p1003 = scmp.le.s32.totalorder 2, %s10
      // Predicated region
      $region90: #{master_encoder_forward.11} parent=5 // pred_check
        %p1004 = pneg %p1003
      $region91: #{master_encoder_forward.11} parent=5 // pred_check_branch
        %1006 = sbr.rel (%p1004) target = $region93
      $region92: #{master_encoder_forward.11} parent=5 // pred_region
        %s1007 = ssub.s32 %s10, 2
        // Predicated region
        $region94: #{master_encoder_forward.11} parent=92 // pred_check
          %p1008 = pneg %p170
        $region95: #{master_encoder_forward.11} parent=92 // pred_check_branch
          %1010 = sbr.rel (%p1008) target = $region97
        $region96: #{master_encoder_forward.11} parent=92 // pred_region
          %p1011 = scmp.lt.s32.totalorder %s23, 0
          %s1012 = scalar_select %p1011, %s23, 0
          %p1013 = scmp.lt.s32.totalorder %s24, 1
          %s1014 = scalar_select %p1013, %s24, 1
          %s1015 = smul.addr %s1012, 2
          %s1016 = sadd.s32 %s1014, %s1015
          %s1017 = smul.addr %s1016, 2
          %s1018 = scalar_lea.vmem %s4, %s1017
        $region97: #{master_encoder_forward.11} parent=92 // pred_fallthru
          _
      $region93: #{master_encoder_forward.11} parent=5 // pred_fallthru
        _
    $region6: #{master_encoder_forward.11} parent=1 // loop_footer
      %s14 = sadd.s32 1, %s10
    $region7: #{master_encoder_forward.11} parent=1 // loop_footer_branch
      %9 = sbr.rel target = $region3
    $region8: #{master_encoder_forward.11} parent=1 // loop_exit
      _

// kernel: master_encoder_forward.12
$region0: #{master_encoder_forward.12}
  #allocation0 [shape = 'u32[]', space=smem, size = 0x4, offset = 0x4, fixed_abs, tag = 'smem constant byte address 0x4 - core index']
  #allocation1 [shape = 'u32[144,128]{1,0:T(1,128)}', space=vmem, size = 0x12000, scoped, tag = 'internal scratch']
  #allocation2 [shape = 'f32[2,256]{1,0:T(2,128)}', space=vmem, size = 0x800, scoped, tag = 'scratch operand']
  %s0 = inlined_call_operand.vmem [shape: f32[2,8,32], index: 0, kind: input, shape index: {}]
  %s1 = inlined_call_operand.vmem [shape: f32[1,32], index: 1, kind: input, shape index: {}]
  %s2 = inlined_call_operand.vmem [shape: f32[1,32], index: 2, kind: input, shape index: {}]
  %s3 = inlined_call_operand.vmem [shape: bf16[256,768], index: 3, kind: input, shape index: {}]
  %s4 = inlined_call_operand.vmem [shape: f32[1,768], index: 4, kind: input, shape index: {}]
  %s5 = inlined_call_operand.vmem [shape: bf16[2,768], index: 5, kind: output, shape index: {}]
  %s6 = sld [smem:[#allocation0]]
  $region99: #{master_encoder_forward.12} parent=0
    _
  %s8 = ssub.s32 1, %s6
  %s9 = scalar_select 0, %s8, %s6
  $region1: #{master_encoder_forward.12} parent=0
    #allocation3 [shape = 'u8[262144]{0}', space=vmem, size = 0x40000, scoped, tag = 'input window, operand 3']
    loop: start=0, step=1, limit=5
    $region2: #{master_encoder_forward.12} parent=1 // loop_pre_header
      _
    $region3: #{master_encoder_forward.12} parent=1 // loop_header
      %s11 = sphi 0, %s15
      %p12 = scmp.ge.s32.totalorder %s11, 5
      %s18 = sphi 0, %s37
      %s19 = sphi 0, %s33
      %s20 = sphi 0, %s29
      %s21 = sphi 0, %s18
      %s22 = sphi 0, %s19
      %s23 = sphi 0, %s20
      %s24 = sphi 0, %s21
      %s25 = sphi 0, %s22
      %s26 = sphi 0, %s23
      %s42 = sphi 0, %s44
      %s45 = sphi 0, %s42
      %s46 = sphi 0, %s45
      %s62 = sphi 0, %s46
      %s66 = sphi 0, %s66
      %s68 = sphi 0, %s66
      %s69 = sphi 0, %s68
      %s83 = sphi 0, %s69
      %s87 = sphi 0, %s87
      %s89 = sphi 0, %s87
      %s90 = sphi 0, %s89
      %s104 = sphi 0, %s90
      %s112 = sphi 0, %s114
      %s115 = sphi 0, %s112
      %s116 = sphi 0, %s115
      %s132 = sphi 0, %s116
      %s138 = sphi 0, %s140
      %s141 = sphi 0, %s138
      %s142 = sphi 0, %s141
      %s158 = sphi 0, %s142
      %s166 = sphi 0, %s168
      %s169 = sphi 0, %s166
      %s170 = sphi 0, %s169
      %s186 = sphi 0, %s170
    $region4: #{master_encoder_forward.12} parent=1 // loop_header_branch
      %14 = sbr.rel (%p12) target = $region8
    $region5: #{master_encoder_forward.12} parent=1 // loop_body
      %s16 = ssub.s32 %s11, 1
      %s17 = ssub.s32 %s11, 2
      %s27 = sadd.s32 1, %s20
      %p28 = scmp.ge.s32.totalorder %s27, 1
      %s29 = scalar_select %p28, 0, %s27
      %s30 = sadd.s32 1, %s19
      %s31 = scalar_select %p28, %s30, %s19
      %p32 = scmp.ge.s32.totalorder %s31, 3
      %s33 = scalar_select %p32, 0, %s31
      %s34 = sadd.s32 1, %s18
      %s35 = scalar_select %p32, %s34, %s18
      %p36 = scmp.ge.s32.totalorder %s35, 1
      %s37 = scalar_select %p36, 0, %s35
      %s38 = ssub.s32 %s18, %s37
      %s39 = ssub.s32 %s20, %s29
      %s40 = sor.u32 %s38, %s39
      %p41 = scmp.eq.s32.totalorder %s40, 0
      %s43 = sadd.s32 %s42, 1
      %s44 = scalar_select %p41, %s42, %s43
      %p47 = pneg %p41
      %p48 = scmp.eq.s32.totalorder %s11, 2
      %p49 = por %p47, %p48
      %p50 = scmp.ne.s32.totalorder %s42, %s45
      %p51 = scmp.eq.s32.totalorder %s11, 0
      %p52 = por %p50, %p51
      %p53 = scmp.ne.s32.totalorder %s42, %s45
      %p54 = scmp.eq.s32.totalorder %s16, 2
      %p55 = por %p53, %p54
      %p56 = scmp.ne.s32.totalorder %s45, %s46
      %p57 = scmp.eq.s32.totalorder %s16, 0
      %p58 = por %p56, %p57
      %p59 = scmp.ne.s32.totalorder %s45, %s46
      %p60 = scmp.eq.s32.totalorder %s17, 2
      %p61 = por %p59, %p60
      %p63 = scmp.ne.s32.totalorder %s46, %s62
      %p64 = scmp.eq.s32.totalorder %s17, 0
      %p65 = por %p63, %p64
      %s67 = sadd.s32 %s66, 1
      %p70 = scmp.eq.s32.totalorder %s11, 2
      %p71 = scmp.ne.s32.totalorder %s66, %s68
      %p72 = scmp.eq.s32.totalorder %s11, 0
      %p73 = por %p71, %p72
      %p74 = scmp.ne.s32.totalorder %s66, %s68
      %p75 = scmp.eq.s32.totalorder %s16, 2
      %p76 = por %p74, %p75
      %p77 = scmp.ne.s32.totalorder %s68, %s69
      %p78 = scmp.eq.s32.totalorder %s16, 0
      %p79 = por %p77, %p78
      %p80 = scmp.ne.s32.totalorder %s68, %s69
      %p81 = scmp.eq.s32.totalorder %s17, 2
      %p82 = por %p80, %p81
      %p84 = scmp.ne.s32.totalorder %s69, %s83
      %p85 = scmp.eq.s32.totalorder %s17, 0
      %p86 = por %p84, %p85
      %s88 = sadd.s32 %s87, 1
      %p91 = scmp.eq.s32.totalorder %s11, 2
      %p92 = scmp.ne.s32.totalorder %s87, %s89
      %p93 = scmp.eq.s32.totalorder %s11, 0
      %p94 = por %p92, %p93
      %p95 = scmp.ne.s32.totalorder %s87, %s89
      %p96 = scmp.eq.s32.totalorder %s16, 2
      %p97 = por %p95, %p96
      %p98 = scmp.ne.s32.totalorder %s89, %s90
      %p99 = scmp.eq.s32.totalorder %s16, 0
      %p100 = por %p98, %p99
      %p101 = scmp.ne.s32.totalorder %s89, %s90
      %p102 = scmp.eq.s32.totalorder %s17, 2
      %p103 = por %p101, %p102
      %p105 = scmp.ne.s32.totalorder %s90, %s104
      %p106 = scmp.eq.s32.totalorder %s17, 0
      %p107 = por %p105, %p106
      %s108 = ssub.s32 %s20, %s29
      %s109 = ssub.s32 %s19, %s33
      %s110 = sor.u32 %s108, %s109
      %p111 = scmp.eq.s32.totalorder %s110, 0
      %s113 = sadd.s32 %s112, 1
      %s114 = scalar_select %p111, %s112, %s113
      %p117 = pneg %p111
      %p118 = scmp.eq.s32.totalorder %s11, 2
      %p119 = por %p117, %p118
      %p120 = scmp.ne.s32.totalorder %s112, %s115
      %p121 = scmp.eq.s32.totalorder %s11, 0
      %p122 = por %p120, %p121
      %p123 = scmp.ne.s32.totalorder %s112, %s115
      %p124 = scmp.eq.s32.totalorder %s16, 2
      %p125 = por %p123, %p124
      %p126 = scmp.ne.s32.totalorder %s115, %s116
      %p127 = scmp.eq.s32.totalorder %s16, 0
      %p128 = por %p126, %p127
      %p129 = scmp.ne.s32.totalorder %s115, %s116
      %p130 = scmp.eq.s32.totalorder %s17, 2
      %p131 = por %p129, %p130
      %p133 = scmp.ne.s32.totalorder %s116, %s132
      %p134 = scmp.eq.s32.totalorder %s17, 0
      %p135 = por %p133, %p134
      %s136 = ssub.s32 %s19, %s33
      %p137 = scmp.eq.s32.totalorder %s136, 0
      %s139 = sadd.s32 %s138, 1
      %s140 = scalar_select %p137, %s138, %s139
      %p143 = pneg %p137
      %p144 = scmp.eq.s32.totalorder %s11, 2
      %p145 = por %p143, %p144
      %p146 = scmp.ne.s32.totalorder %s138, %s141
      %p147 = scmp.eq.s32.totalorder %s11, 0
      %p148 = por %p146, %p147
      %p149 = scmp.ne.s32.totalorder %s138, %s141
      %p150 = scmp.eq.s32.totalorder %s16, 2
      %p151 = por %p149, %p150
      %p152 = scmp.ne.s32.totalorder %s141, %s142
      %p153 = scmp.eq.s32.totalorder %s16, 0
      %p154 = por %p152, %p153
      %p155 = scmp.ne.s32.totalorder %s141, %s142
      %p156 = scmp.eq.s32.totalorder %s17, 2
      %p157 = por %p155, %p156
      %p159 = scmp.ne.s32.totalorder %s142, %s158
      %p160 = scmp.eq.s32.totalorder %s17, 0
      %p161 = por %p159, %p160
      %s162 = ssub.s32 %s18, %s37
      %s163 = ssub.s32 %s19, %s33
      %s164 = sor.u32 %s162, %s163
      %p165 = scmp.eq.s32.totalorder %s164, 0
      %s167 = sadd.s32 %s166, 1
      %s168 = scalar_select %p165, %s166, %s167
      %p171 = pneg %p165
      %p172 = scmp.eq.s32.totalorder %s11, 2
      %p173 = por %p171, %p172
      %p174 = scmp.ne.s32.totalorder %s166, %s169
      %p175 = scmp.eq.s32.totalorder %s11, 0
      %p176 = por %p174, %p175
      %p177 = scmp.ne.s32.totalorder %s166, %s169
      %p178 = scmp.eq.s32.totalorder %s16, 2
      %p179 = por %p177, %p178
      %p180 = scmp.ne.s32.totalorder %s169, %s170
      %p181 = scmp.eq.s32.totalorder %s16, 0
      %p182 = por %p180, %p181
      %p183 = scmp.ne.s32.totalorder %s169, %s170
      %p184 = scmp.eq.s32.totalorder %s17, 2
      %p185 = por %p183, %p184
      %p187 = scmp.ne.s32.totalorder %s170, %s186
      %p188 = scmp.eq.s32.totalorder %s17, 0
      %p189 = por %p187, %p188
      %p190 = scmp.le.s32.totalorder 1, %s11
      %p191 = scmp.lt.s32.totalorder %s11, 4
      %p192 = pnand %p190, %p191
      %p193 = pneg %p192
      // Predicated region
      $region9: #{master_encoder_forward.12} parent=5 // pred_check
        _
      $region10: #{master_encoder_forward.12} parent=5 // pred_check_branch
        %195 = sbr.rel (%p192) target = $region12
      $region11: #{master_encoder_forward.12} parent=5 // pred_region
        %s196 = ssub.s32 %s11, 1
        // Predicated region
        $region13: #{master_encoder_forward.12} parent=11 // pred_check
          %p197 = pneg %p58
        $region14: #{master_encoder_forward.12} parent=11 // pred_check_branch
          %199 = sbr.rel (%p197) target = $region16
        $region15: #{master_encoder_forward.12} parent=11 // pred_region
          %s200 = smul.u32 2, %s21
          %p201 = scmp.lt.s32.totalorder %s200, 1
          %s202 = scalar_select %p201, %s200, 1
          %p203 = scmp.lt.s32.totalorder %s23, 0
          %s204 = scalar_select %p203, %s23, 0
          %s205 = sadd.s32 %s204, %s202
          %s206 = smul.addr %s205, 8
          %s207 = scalar_lea.vmem %s0, %s206
          %s208 = smul.u32 2, %s21
        $region16: #{master_encoder_forward.12} parent=11 // pred_fallthru
          _
        // Predicated region
        $region17: #{master_encoder_forward.12} parent=11 // pred_check
          %p209 = pneg %p79
        $region18: #{master_encoder_forward.12} parent=11 // pred_check_branch
          %211 = sbr.rel (%p209) target = $region20
        $region19: #{master_encoder_forward.12} parent=11 // pred_region
          _
        $region20: #{master_encoder_forward.12} parent=11 // pred_fallthru
          _
        // Predicated region
        $region21: #{master_encoder_forward.12} parent=11 // pred_check
          %p212 = pneg %p100
        $region22: #{master_encoder_forward.12} parent=11 // pred_check_branch
          %214 = sbr.rel (%p212) target = $region24
        $region23: #{master_encoder_forward.12} parent=11 // pred_region
          _
        $region24: #{master_encoder_forward.12} parent=11 // pred_fallthru
          _
      $region12: #{master_encoder_forward.12} parent=5 // pred_fallthru
        _
      %p215 = scmp.lt.s32.totalorder %s11, 3
      // Predicated region
      $region25: #{master_encoder_forward.12} parent=5 // pred_check
        %p216 = pneg %p215
      $region26: #{master_encoder_forward.12} parent=5 // pred_check_branch
        %218 = sbr.rel (%p216) target = $region28
      $region27: #{master_encoder_forward.12} parent=5 // pred_region
        // Predicated region
        $region29: #{master_encoder_forward.12} parent=27 // pred_check
          %p219 = pneg %p122
        $region30: #{master_encoder_forward.12} parent=27 // pred_check_branch
          %221 = sbr.rel (%p219) target = $region32
        $region31: #{master_encoder_forward.12} parent=27 // pred_region
          %s222 = sand.u32 %s112, 1
          %s223 = sand.u32 %s112, 1
          %s224 = smul.addr %s223, 256
          %s225 = scalar_lea.vmem [#allocation3], %s224
          %s226 = smul.u32 32, %s20
          %s227 = smul.u32 2, %s19
          %s228 = smul.addr %s226, 6
          %s229 = sadd.s32 %s227, %s228
          %s230 = smul.addr %s229, 4
          %s231 = scalar_lea.vmem %s3, %s230
          // Predicated region
          $region33: #{master_encoder_forward.12} parent=31 // pred_check
            _
          $region34: #{master_encoder_forward.12} parent=31 // pred_check_branch
            %233 = sbr.rel (0) target = $region36
          $region35: #{master_encoder_forward.12} parent=31 // pred_region
            // Predicated region
            $region37: #{master_encoder_forward.12} parent=35 // pred_check
              _
            $region38: #{master_encoder_forward.12} parent=35 // pred_check_branch
              %235 = sbr.rel (0) target = $region40
            $region39: #{master_encoder_forward.12} parent=35 // pred_region
              // Predicated region
              $region52: #{master_encoder_forward.12} parent=39 // pred_check
                _
              $region53: #{master_encoder_forward.12} parent=39 // pred_check_branch
                %312 = sbr.rel (0) target = $region55
              $region54: #{master_encoder_forward.12} parent=39 // pred_region
                loop: start=0, step=1, limit=1
                $region56: #{master_encoder_forward.12} parent=54 // loop_pre_header
                  _
                $region57: #{master_encoder_forward.12} parent=54 // loop_header
                  %s314 = sphi 0, %s318
                  %p315 = scmp.ge.s32.totalorder %s314, 1
                  %s319 = sphi %s231, %s231
                  %s320 = sphi %s225, %s225
                $region58: #{master_encoder_forward.12} parent=54 // loop_header_branch
                  %317 = sbr.rel (%p315) target = $region62
                $region59: #{master_encoder_forward.12} parent=54 // loop_body
                  %v321 = vld [vmem:[%s319] sm:$0xff]
                  %322 = vst [vmem:[%s320] sm:$0xff] %v321
                  %v323 = vld [vmem:[%s319 + $0x18] sm:$0xff]
                  %324 = vst [vmem:[%s320 + $0x8] sm:$0xff] %v323
                  %v325 = vld [vmem:[%s319 + $0x30] sm:$0xff]
                  %326 = vst [vmem:[%s320 + $0x10] sm:$0xff] %v325
                  %v327 = vld [vmem:[%s319 + $0x48] sm:$0xff]
                  %328 = vst [vmem:[%s320 + $0x18] sm:$0xff] %v327
                  %v329 = vld [vmem:[%s319 + $0x60] sm:$0xff]
                  %330 = vst [vmem:[%s320 + $0x20] sm:$0xff] %v329
                  %v331 = vld [vmem:[%s319 + $0x78] sm:$0xff]
                  %332 = vst [vmem:[%s320 + $0x28] sm:$0xff] %v331
                  %v333 = vld [vmem:[%s319 + $0x90] sm:$0xff]
                  %334 = vst [vmem:[%s320 + $0x30] sm:$0xff] %v333
                  %v335 = vld [vmem:[%s319 + $0xa8] sm:$0xff]
                  %336 = vst [vmem:[%s320 + $0x38] sm:$0xff] %v335
                  %v337 = vld [vmem:[%s319 + $0xc0] sm:$0xff]
                  %338 = vst [vmem:[%s320 + $0x40] sm:$0xff] %v337
                  %v339 = vld [vmem:[%s319 + $0xd8] sm:$0xff]
                  %340 = vst [vmem:[%s320 + $0x48] sm:$0xff] %v339
                  %v341 = vld [vmem:[%s319 + $0xf0] sm:$0xff]
                  %342 = vst [vmem:[%s320 + $0x50] sm:$0xff] %v341
                  %v343 = vld [vmem:[%s319 + $0x108] sm:$0xff]
                  %344 = vst [vmem:[%s320 + $0x58] sm:$0xff] %v343
                  %v345 = vld [vmem:[%s319 + $0x120] sm:$0xff]
                  %346 = vst [vmem:[%s320 + $0x60] sm:$0xff] %v345
                  %v347 = vld [vmem:[%s319 + $0x138] sm:$0xff]
                  %348 = vst [vmem:[%s320 + $0x68] sm:$0xff] %v347
                  %v349 = vld [vmem:[%s319 + $0x150] sm:$0xff]
                  %350 = vst [vmem:[%s320 + $0x70] sm:$0xff] %v349
                  %v351 = vld [vmem:[%s319 + $0x168] sm:$0xff]
                  %352 = vst [vmem:[%s320 + $0x78] sm:$0xff] %v351
                  %v353 = vld [vmem:[%s319 + $0x180] sm:$0xff]
                  %354 = vst [vmem:[%s320 + $0x80] sm:$0xff] %v353
                  %v355 = vld [vmem:[%s319 + $0x198] sm:$0xff]
                  %356 = vst [vmem:[%s320 + $0x88] sm:$0xff] %v355
                  %v357 = vld [vmem:[%s319 + $0x1b0] sm:$0xff]
                  %358 = vst [vmem:[%s320 + $0x90] sm:$0xff] %v357
                  %v359 = vld [vmem:[%s319 + $0x1c8] sm:$0xff]
                  %360 = vst [vmem:[%s320 + $0x98] sm:$0xff] %v359
                  %v361 = vld [vmem:[%s319 + $0x1e0] sm:$0xff]
                  %362 = vst [vmem:[%s320 + $0xa0] sm:$0xff] %v361
                  %v363 = vld [vmem:[%s319 + $0x1f8] sm:$0xff]
                  %364 = vst [vmem:[%s320 + $0xa8] sm:$0xff] %v363
                  %v365 = vld [vmem:[%s319 + $0x210] sm:$0xff]
                  %366 = vst [vmem:[%s320 + $0xb0] sm:$0xff] %v365
                  %v367 = vld [vmem:[%s319 + $0x228] sm:$0xff]
                  %368 = vst [vmem:[%s320 + $0xb8] sm:$0xff] %v367
                  %v369 = vld [vmem:[%s319 + $0x240] sm:$0xff]
                  %370 = vst [vmem:[%s320 + $0xc0] sm:$0xff] %v369
                  %v371 = vld [vmem:[%s319 + $0x258] sm:$0xff]
                  %372 = vst [vmem:[%s320 + $0xc8] sm:$0xff] %v371
                  %v373 = vld [vmem:[%s319 + $0x270] sm:$0xff]
                  %374 = vst [vmem:[%s320 + $0xd0] sm:$0xff] %v373
                  %v375 = vld [vmem:[%s319 + $0x288] sm:$0xff]
                  %376 = vst [vmem:[%s320 + $0xd8] sm:$0xff] %v375
                  %v377 = vld [vmem:[%s319 + $0x2a0] sm:$0xff]
                  %378 = vst [vmem:[%s320 + $0xe0] sm:$0xff] %v377
                  %v379 = vld [vmem:[%s319 + $0x2b8] sm:$0xff]
                  %380 = vst [vmem:[%s320 + $0xe8] sm:$0xff] %v379
                  %v381 = vld [vmem:[%s319 + $0x2d0] sm:$0xff]
                  %382 = vst [vmem:[%s320 + $0xf0] sm:$0xff] %v381
                  %v383 = vld [vmem:[%s319 + $0x2e8] sm:$0xff]
                  %384 = vst [vmem:[%s320 + $0xf8] sm:$0xff] %v383
                $region60: #{master_encoder_forward.12} parent=54 // loop_footer
                  %s318 = sadd.s32 1, %s314
                $region61: #{master_encoder_forward.12} parent=54 // loop_footer_branch
                  %313 = sbr.rel target = $region57
                $region62: #{master_encoder_forward.12} parent=54 // loop_exit
                  _
              $region55: #{master_encoder_forward.12} parent=39 // pred_fallthru
                _
              // Predicated region
              $region63: #{master_encoder_forward.12} parent=39 // pred_check
                _
              $region64: #{master_encoder_forward.12} parent=39 // pred_check_branch
                %386 = sbr.rel target = $region66
              $region65: #{master_encoder_forward.12} parent=39 // pred_region
                _
              $region66: #{master_encoder_forward.12} parent=39 // pred_fallthru
                _
            $region40: #{master_encoder_forward.12} parent=35 // pred_fallthru
              _
            // Predicated region
            $region41: #{master_encoder_forward.12} parent=35 // pred_check
              _
            $region42: #{master_encoder_forward.12} parent=35 // pred_check_branch
              %237 = sbr.rel target = $region44
            $region43: #{master_encoder_forward.12} parent=35 // pred_region
              loop: start=0, step=1, limit=1
              $region45: #{master_encoder_forward.12} parent=43 // loop_pre_header
                _
              $region46: #{master_encoder_forward.12} parent=43 // loop_header
                %s240 = sphi 0, %s244
                %p241 = scmp.ge.s32.totalorder %s240, 1
                %s245 = sphi %s231, %s231
                %s246 = sphi %s225, %s225
              $region47: #{master_encoder_forward.12} parent=43 // loop_header_branch
                %243 = sbr.rel (%p241) target = $region51
              $region48: #{master_encoder_forward.12} parent=43 // loop_body
                %v247 = vld [vmem:[%s245] sm:$0xff]
                %248 = vst [vmem:[%s246] sm:$0xff] %v247
                %v249 = vld [vmem:[%s245 + $0x18] sm:$0xff]
                %250 = vst [vmem:[%s246 + $0x8] sm:$0xff] %v249
                %v251 = vld [vmem:[%s245 + $0x30] sm:$0xff]
                %252 = vst [vmem:[%s246 + $0x10] sm:$0xff] %v251
                %v253 = vld [vmem:[%s245 + $0x48] sm:$0xff]
                %254 = vst [vmem:[%s246 + $0x18] sm:$0xff] %v253
                %v255 = vld [vmem:[%s245 + $0x60] sm:$0xff]
                %256 = vst [vmem:[%s246 + $0x20] sm:$0xff] %v255
                %v257 = vld [vmem:[%s245 + $0x78] sm:$0xff]
                %258 = vst [vmem:[%s246 + $0x28] sm:$0xff] %v257
                %v259 = vld [vmem:[%s245 + $0x90] sm:$0xff]
                %260 = vst [vmem:[%s246 + $0x30] sm:$0xff] %v259
                %v261 = vld [vmem:[%s245 + $0xa8] sm:$0xff]
                %262 = vst [vmem:[%s246 + $0x38] sm:$0xff] %v261
                %v263 = vld [vmem:[%s245 + $0xc0] sm:$0xff]
                %264 = vst [vmem:[%s246 + $0x40] sm:$0xff] %v263
                %v265 = vld [vmem:[%s245 + $0xd8] sm:$0xff]
                %266 = vst [vmem:[%s246 + $0x48] sm:$0xff] %v265
                %v267 = vld [vmem:[%s245 + $0xf0] sm:$0xff]
                %268 = vst [vmem:[%s246 + $0x50] sm:$0xff] %v267
                %v269 = vld [vmem:[%s245 + $0x108] sm:$0xff]
                %270 = vst [vmem:[%s246 + $0x58] sm:$0xff] %v269
                %v271 = vld [vmem:[%s245 + $0x120] sm:$0xff]
                %272 = vst [vmem:[%s246 + $0x60] sm:$0xff] %v271
                %v273 = vld [vmem:[%s245 + $0x138] sm:$0xff]
                %274 = vst [vmem:[%s246 + $0x68] sm:$0xff] %v273
                %v275 = vld [vmem:[%s245 + $0x150] sm:$0xff]
                %276 = vst [vmem:[%s246 + $0x70] sm:$0xff] %v275
                %v277 = vld [vmem:[%s245 + $0x168] sm:$0xff]
                %278 = vst [vmem:[%s246 + $0x78] sm:$0xff] %v277
                %v279 = vld [vmem:[%s245 + $0x180] sm:$0xff]
                %280 = vst [vmem:[%s246 + $0x80] sm:$0xff] %v279
                %v281 = vld [vmem:[%s245 + $0x198] sm:$0xff]
                %282 = vst [vmem:[%s246 + $0x88] sm:$0xff] %v281
                %v283 = vld [vmem:[%s245 + $0x1b0] sm:$0xff]
                %284 = vst [vmem:[%s246 + $0x90] sm:$0xff] %v283
                %v285 = vld [vmem:[%s245 + $0x1c8] sm:$0xff]
                %286 = vst [vmem:[%s246 + $0x98] sm:$0xff] %v285
                %v287 = vld [vmem:[%s245 + $0x1e0] sm:$0xff]
                %288 = vst [vmem:[%s246 + $0xa0] sm:$0xff] %v287
                %v289 = vld [vmem:[%s245 + $0x1f8] sm:$0xff]
                %290 = vst [vmem:[%s246 + $0xa8] sm:$0xff] %v289
                %v291 = vld [vmem:[%s245 + $0x210] sm:$0xff]
                %292 = vst [vmem:[%s246 + $0xb0] sm:$0xff] %v291
                %v293 = vld [vmem:[%s245 + $0x228] sm:$0xff]
                %294 = vst [vmem:[%s246 + $0xb8] sm:$0xff] %v293
                %v295 = vld [vmem:[%s245 + $0x240] sm:$0xff]
                %296 = vst [vmem:[%s246 + $0xc0] sm:$0xff] %v295
                %v297 = vld [vmem:[%s245 + $0x258] sm:$0xff]
                %298 = vst [vmem:[%s246 + $0xc8] sm:$0xff] %v297
                %v299 = vld [vmem:[%s245 + $0x270] sm:$0xff]
                %300 = vst [vmem:[%s246 + $0xd0] sm:$0xff] %v299
                %v301 = vld [vmem:[%s245 + $0x288] sm:$0xff]
                %302 = vst [vmem:[%s246 + $0xd8] sm:$0xff] %v301
                %v303 = vld [vmem:[%s245 + $0x2a0] sm:$0xff]
                %304 = vst [vmem:[%s246 + $0xe0] sm:$0xff] %v303
                %v305 = vld [vmem:[%s245 + $0x2b8] sm:$0xff]
                %306 = vst [vmem:[%s246 + $0xe8] sm:$0xff] %v305
                %v307 = vld [vmem:[%s245 + $0x2d0] sm:$0xff]
                %308 = vst [vmem:[%s246 + $0xf0] sm:$0xff] %v307
                %v309 = vld [vmem:[%s245 + $0x2e8] sm:$0xff]
                %310 = vst [vmem:[%s246 + $0xf8] sm:$0xff] %v309
              $region49: #{master_encoder_forward.12} parent=43 // loop_footer
                %s244 = sadd.s32 1, %s240
              $region50: #{master_encoder_forward.12} parent=43 // loop_footer_branch
                %239 = sbr.rel target = $region46
              $region51: #{master_encoder_forward.12} parent=43 // loop_exit
                _
            $region44: #{master_encoder_forward.12} parent=35 // pred_fallthru
              _
          $region36: #{master_encoder_forward.12} parent=31 // pred_fallthru
            _
          %387 = vnop
        $region32: #{master_encoder_forward.12} parent=27 // pred_fallthru
          _
        // Predicated region
        $region67: #{master_encoder_forward.12} parent=27 // pred_check
          %p388 = pneg %p148
        $region68: #{master_encoder_forward.12} parent=27 // pred_check_branch
          %390 = sbr.rel (%p388) target = $region70
        $region69: #{master_encoder_forward.12} parent=27 // pred_region
          %s391 = smul.u32 2, %s19
          %p392 = scmp.lt.s32.totalorder %s391, 5
          %s393 = scalar_select %p392, %s391, 5
          %s394 = scalar_lea.vmem %s4, %s393
          %s395 = smul.u32 2, %s19
        $region70: #{master_encoder_forward.12} parent=27 // pred_fallthru
          _
      $region28: #{master_encoder_forward.12} parent=5 // pred_fallthru
        _
      %p396 = scmp.le.s32.totalorder 1, %s11
      %p397 = scmp.lt.s32.totalorder %s11, 4
      %p398 = pnand %p396, %p397
      %p399 = pneg %p398
      // Predicated region
      $region71: #{master_encoder_forward.12} parent=5 // pred_check
        _
      $region72: #{master_encoder_forward.12} parent=5 // pred_check_branch
        %401 = sbr.rel (%p398) target = $region74
      $region73: #{master_encoder_forward.12} parent=5 // pred_region
        %s402 = ssub.s32 %s11, 1
        %s403 = sand.u32 %s115, 1
        %s404 = sand.u32 %s115, 1
        %s405 = smul.addr %s404, 256
        %s406 = scalar_lea.vmem [#allocation3], %s405
        // Predicated region
        $region75: #{master_encoder_forward.12} parent=73 // pred_check
          %p407 = pneg %p128
        $region76: #{master_encoder_forward.12} parent=73 // pred_check_branch
          %409 = sbr.rel (%p407) target = $region78
        $region77: #{master_encoder_forward.12} parent=73 // pred_region
          _
        $region78: #{master_encoder_forward.12} parent=73 // pred_fallthru
          _
        %s410 = smul.u32 2, %s21
        %p411 = scmp.lt.s32.totalorder %s410, 1
        %s412 = scalar_select %p411, %s410, 1
        %p413 = scmp.lt.s32.totalorder %s23, 0
        %s414 = scalar_select %p413, %s23, 0
        %s415 = sadd.s32 %s414, %s412
        %s416 = smul.addr %s415, 8
        %s417 = scalar_lea.vmem %s0, %s416
        %p418 = pneg %p58
        %p419 = pneg %p55
        %p420 = pneg %p79
        %p421 = pneg %p76
        %p422 = pneg %p100
        %p423 = pneg %p97
        %s424 = sand.u32 %s115, 1
        %s425 = sand.u32 %s115, 1
        %s426 = smul.addr %s425, 256
        %s427 = scalar_lea.vmem [#allocation3], %s426
        %p428 = pneg %p128
        %p429 = pneg %p125
        %s430 = smul.u32 2, %s22
        %p431 = scmp.lt.s32.totalorder %s430, 5
        %s432 = scalar_select %p431, %s430, 5
        %s433 = scalar_lea.vmem %s4, %s432
        %p434 = pneg %p154
        %p435 = pneg %p151
        %p436 = pneg %p182
        %p437 = pneg %p179
        %s438 = smul.u32 2, %s22
        %p439 = scmp.lt.s32.totalorder %s21, 0
        %s440 = scalar_select %p439, %s21, 0
        %p441 = scmp.lt.s32.totalorder %s438, 5
        %s442 = scalar_select %p441, %s438, 5
        %s443 = smul.addr %s440, 6
        %s444 = sadd.s32 %s442, %s443
        %s445 = scalar_lea.vmem %s5, %s444
        %s446 = smul.u32 2, %s21
        %p447 = scmp.lt.s32.totalorder %s446, 1
        %s448 = scalar_select %p447, %s446, 1
        %p449 = scmp.lt.s32.totalorder %s23, 0
        %s450 = scalar_select %p449, %s23, 0
        %s451 = sadd.s32 %s450, %s448
        %s452 = smul.addr %s451, 8
        %s453 = scalar_lea.vmem %s0, %s452
        %s454 = smul.u32 2, %s21
        %s455 = smul.u32 32, %s23
        %s456 = smul.u32 2, %s22
        %s457 = smul.u32 2, %s22
        %p458 = scmp.lt.s32.totalorder %s457, 5
        %s459 = scalar_select %p458, %s457, 5
        %s460 = scalar_lea.vmem %s4, %s459
        %s461 = smul.u32 2, %s22
        %s462 = smul.u32 2, %s22
        %p463 = scmp.lt.s32.totalorder %s21, 0
        %s464 = scalar_select %p463, %s21, 0
        %p465 = scmp.lt.s32.totalorder %s462, 5
        %s466 = scalar_select %p465, %s462, 5
        %s467 = smul.addr %s464, 6
        %s468 = sadd.s32 %s466, %s467
        %s469 = scalar_lea.vmem %s5, %s468
        %s470 = smul.u32 2, %s22
        %p471 = scmp.eq.s32.totalorder %s23, 0
        // Predicated region
        $region79: #{master_encoder_forward.12} parent=73 // pred_check
          %p472 = pneg %p471
        $region80: #{master_encoder_forward.12} parent=73 // pred_check_branch
          %474 = sbr.rel (%p472) target = $region82
        $region81: #{master_encoder_forward.12} parent=73 // pred_region
          %475 = vst [vmem:[#allocation2] sm:$0xf] 0.0
        $region82: #{master_encoder_forward.12} parent=73 // pred_fallthru
          _
        %v476 = vld [vmem:[%s453] sm:$0xff]
        %v477 = vld [vmem:[%s453 + $0x8] sm:$0xff]
        %vm478 = vcmask 261120
        %v479 = vsel %vm478, %v476, 0.0
        %480 = vadd.xlane.f32.xlu0 %v479
        %v481 = vpop.xlane.xlu0 %480
        %v482 = vsel %vm478, %v477, 0.0
        %483 = vadd.xlane.f32.xlu0 %v482
        %v484 = vpop.xlane.xlu0 %483
        %v485 = vrcp.pop 32.0
        %v486 = vmul.f32 %v481, %v485
        %v487 = vmul.f32 %v484, %v485
        %v488 = vmul.f32 %v476, %v476
        %v489 = vmul.f32 %v477, %v477
        %v490 = vsel %vm478, %v488, 0.0
        %491 = vadd.xlane.f32.xlu0 %v490
        %v492 = vpop.xlane.xlu0 %491
        %v493 = vsel %vm478, %v489, 0.0
        %494 = vadd.xlane.f32.xlu0 %v493
        %v495 = vpop.xlane.xlu0 %494
        %v496 = vmul.f32 %v492, %v485
        %v497 = vmul.f32 %v495, %v485
        %v498 = vmul.f32 %v486, %v486
        %v499 = vmul.f32 %v487, %v487
        %v500 = vsub.f32 %v496, %v498
        %v501 = vsub.f32 %v497, %v499
        %v502 = vadd.f32 %v500, 1e-05
        %v503 = vadd.f32 %v501, 1e-05
        %v504 = vrsqrt.pop %v502
        %v505 = vrsqrt.pop %v503
        %v506 = vsub.f32 %v476, %v486
        %v507 = vsub.f32 %v477, %v487
        %v508 = vmul.f32 %v506, %v504
        %v509 = vmul.f32 %v507, %v505
        %v510 = vld [vmem:[%s1] sm:$0x1]
        %v512 = vlaneseq
        %v513 = vshrl.u32 %v512, 7
        %v514 = vsub.s32 0, %v513
        %v515 = vrot.slane %v510, %v514
        %v517 = vmul.f32 %v508, %v515
        %v518 = vmul.f32 %v509, %v515
        %v519 = vld [vmem:[%s2] sm:$0x1]
        %v521 = vlaneseq
        %v522 = vshrl.u32 %v521, 7
        %v523 = vsub.s32 0, %v522
        %v524 = vrot.slane %v519, %v523
        %v526 = vadd.f32 %v517, %v524
        %v527 = vadd.f32 %v518, %v524
        %v528 = vcombine.high %v526, 0.0
        %v530 = vunpack.c.l.s4 1983009808
        %v531 = vunpack.c.0.s8 %v530
        %v532 = vlaneseq
        %v533 = vshrl.u32 %v532, 7
        %v534 = vsub.s32 %v531, %v533
        %v535 = vrot.slane %v526, %v534
        %v537 = vunpack.c.l.s4 1983009808
        %v538 = vunpack.c.0.s8 %v537
        %v539 = vlaneseq
        %v540 = vshrl.u32 %v539, 7
        %v541 = vsub.s32 %v538, %v540
        %v542 = vrot.slane %v528, %v541
        %v543 = vcombine.high %v527, 0.0
        %v545 = vunpack.c.l.s4 1983009808
        %v546 = vunpack.c.0.s8 %v545
        %v547 = vlaneseq
        %v548 = vshrl.u32 %v547, 7
        %v549 = vsub.s32 %v546, %v548
        %v550 = vrot.slane %v527, %v549
        %v552 = vunpack.c.l.s4 1983009808
        %v553 = vunpack.c.0.s8 %v552
        %v554 = vlaneseq
        %v555 = vshrl.u32 %v554, 7
        %v556 = vsub.s32 %v553, %v555
        %v557 = vrot.slane %v543, %v556
        %v558 = vcombine.low %v535, %v550
        %v559 = vcombine.high %v535, %v550
        %v561 = vunpack.c.l.s4 1934713408
        %v562 = vunpack.c.0.s8 %v561
        %v563 = vlaneseq
        %v564 = vshrl.u32 %v563, 7
        %v565 = vsub.s32 %v562, %v564
        %v566 = vrot.slane %v558, %v565
        %v568 = vunpack.c.l.s4 1934713408
        %v569 = vunpack.c.0.s8 %v568
        %v570 = vlaneseq
        %v571 = vshrl.u32 %v570, 7
        %v572 = vsub.s32 %v569, %v571
        %v573 = vrot.slane %v559, %v572
        %v574 = vcombine.low %v542, %v557
        %v575 = vcombine.high %v542, %v557
        %v577 = vunpack.c.l.s4 1934713408
        %v578 = vunpack.c.0.s8 %v577
        %v579 = vlaneseq
        %v580 = vshrl.u32 %v579, 7
        %v581 = vsub.s32 %v578, %v580
        %v582 = vrot.slane %v574, %v581
        %v584 = vunpack.c.l.s4 1934713408
        %v585 = vunpack.c.0.s8 %v584
        %v586 = vlaneseq
        %v587 = vshrl.u32 %v586, 7
        %v588 = vsub.s32 %v585, %v587
        %v589 = vrot.slane %v575, %v588
        %v590 = vcombine.high %v566, 0.0
        %v591 = vcombine.high %v573, 0.0
        %v592 = vcombine.high %v582, 0.0
        %v593 = vcombine.high %v589, 0.0
        %595 = vrot.lane.b32.xlu0 %v590, 32
        %v596 = vpop.permute.xlu0 %595
        %599 = vrot.lane.b32.xlu0 %v573, 64
        %v600 = vpop.permute.xlu0 %599
        %603 = vrot.lane.b32.xlu0 %v591, 96
        %v604 = vpop.permute.xlu0 %603
        %607 = vrot.lane.b32.xlu0 %v592, 32
        %v608 = vpop.permute.xlu0 %607
        %611 = vrot.lane.b32.xlu0 %v589, 64
        %v612 = vpop.permute.xlu0 %611
        %615 = vrot.lane.b32.xlu0 %v593, 96
        %v616 = vpop.permute.xlu0 %615
        %v618 = vsel %vm478, %v566, %v596
        %vm619 = vcmask 523264
        %v620 = vsel %vm619, %v618, %v600
        %vm621 = vcmask 785408
        %v622 = vsel %vm621, %v620, %v604
        %v623 = vsel %vm478, %v582, %v608
        %v624 = vsel %vm619, %v623, %v612
        %v625 = vsel %vm621, %v624, %v616
        %v626 = vpack.c.bf16 %v622, %v622
        %v627 = vpack.c.bf16 %v625, %v625
        %v628 = vld [vmem:[#allocation2] sm:$0xf]
        %v629 = vld [vmem:[%s406] sm:$0xff]
        %v630 = vld [vmem:[%s406 + $0x8] sm:$0xff]
        %v631 = vld [vmem:[%s406 + $0x10] sm:$0xff]
        %v632 = vld [vmem:[%s406 + $0x18] sm:$0xff]
        %v633 = vld [vmem:[%s406 + $0x20] sm:$0xff]
        %v634 = vld [vmem:[%s406 + $0x28] sm:$0xff]
        %v635 = vld [vmem:[%s406 + $0x30] sm:$0xff]
        %v636 = vld [vmem:[%s406 + $0x38] sm:$0xff]
        %v637 = vld [vmem:[%s406 + $0x40] sm:$0xff]
        %v638 = vld [vmem:[%s406 + $0x48] sm:$0xff]
        %v639 = vld [vmem:[%s406 + $0x50] sm:$0xff]
        %v640 = vld [vmem:[%s406 + $0x58] sm:$0xff]
        %v641 = vld [vmem:[%s406 + $0x60] sm:$0xff]
        %v642 = vld [vmem:[%s406 + $0x68] sm:$0xff]
        %v643 = vld [vmem:[%s406 + $0x70] sm:$0xff]
        %v644 = vld [vmem:[%s406 + $0x78] sm:$0xff]
        %v645 = vld [vmem:[%s406 + $0x80] sm:$0xff]
        %v646 = vld [vmem:[%s406 + $0x88] sm:$0xff]
        %v647 = vld [vmem:[%s406 + $0x90] sm:$0xff]
        %v648 = vld [vmem:[%s406 + $0x98] sm:$0xff]
        %v649 = vld [vmem:[%s406 + $0xa0] sm:$0xff]
        %v650 = vld [vmem:[%s406 + $0xa8] sm:$0xff]
        %v651 = vld [vmem:[%s406 + $0xb0] sm:$0xff]
        %v652 = vld [vmem:[%s406 + $0xb8] sm:$0xff]
        %v653 = vld [vmem:[%s406 + $0xc0] sm:$0xff]
        %v654 = vld [vmem:[%s406 + $0xc8] sm:$0xff]
        %v655 = vld [vmem:[%s406 + $0xd0] sm:$0xff]
        %v656 = vld [vmem:[%s406 + $0xd8] sm:$0xff]
        %v657 = vld [vmem:[%s406 + $0xe0] sm:$0xff]
        %v658 = vld [vmem:[%s406 + $0xe8] sm:$0xff]
        %v659 = vld [vmem:[%s406 + $0xf0] sm:$0xff]
        %v660 = vld [vmem:[%s406 + $0xf8] sm:$0xff]
        %v693 = vunpack.c.l.b16 %v629
        %v694 = vunpack.c.h.b16 %v629
        %v695 = vunpack.c.l.b16 %v630
        %v696 = vunpack.c.h.b16 %v630
        %v697 = vunpack.c.l.b16 %v631
        %v698 = vunpack.c.h.b16 %v631
        %v699 = vunpack.c.l.b16 %v632
        %v700 = vunpack.c.h.b16 %v632
        %v701 = vunpack.c.l.b16 %v633
        %v702 = vunpack.c.h.b16 %v633
        %v703 = vunpack.c.l.b16 %v634
        %v704 = vunpack.c.h.b16 %v634
        %v705 = vunpack.c.l.b16 %v635
        %v706 = vunpack.c.h.b16 %v635
        %v707 = vunpack.c.l.b16 %v636
        %v708 = vunpack.c.h.b16 %v636
        %v709 = vunpack.c.l.b16 %v637
        %v710 = vunpack.c.h.b16 %v637
        %v711 = vunpack.c.l.b16 %v638
        %v712 = vunpack.c.h.b16 %v638
        %v713 = vunpack.c.l.b16 %v639
        %v714 = vunpack.c.h.b16 %v639
        %v715 = vunpack.c.l.b16 %v640
        %v716 = vunpack.c.h.b16 %v640
        %v717 = vunpack.c.l.b16 %v641
        %v718 = vunpack.c.h.b16 %v641
        %v719 = vunpack.c.l.b16 %v642
        %v720 = vunpack.c.h.b16 %v642
        %v721 = vunpack.c.l.b16 %v643
        %v722 = vunpack.c.h.b16 %v643
        %v723 = vunpack.c.l.b16 %v644
        %v724 = vunpack.c.h.b16 %v644
        %v725 = vunpack.c.l.b16 %v645
        %v726 = vunpack.c.h.b16 %v645
        %v727 = vunpack.c.l.b16 %v646
        %v728 = vunpack.c.h.b16 %v646
        %v729 = vunpack.c.l.b16 %v647
        %v730 = vunpack.c.h.b16 %v647
        %v731 = vunpack.c.l.b16 %v648
        %v732 = vunpack.c.h.b16 %v648
        %v733 = vunpack.c.l.b16 %v649
        %v734 = vunpack.c.h.b16 %v649
        %v735 = vunpack.c.l.b16 %v650
        %v736 = vunpack.c.h.b16 %v650
        %v737 = vunpack.c.l.b16 %v651
        %v738 = vunpack.c.h.b16 %v651
        %v739 = vunpack.c.l.b16 %v652
        %v740 = vunpack.c.h.b16 %v652
        %v741 = vunpack.c.l.b16 %v653
        %v742 = vunpack.c.h.b16 %v653
        %v743 = vunpack.c.l.b16 %v654
        %v744 = vunpack.c.h.b16 %v654
        %v745 = vunpack.c.l.b16 %v655
        %v746 = vunpack.c.h.b16 %v655
        %v747 = vunpack.c.l.b16 %v656
        %v748 = vunpack.c.h.b16 %v656
        %v749 = vunpack.c.l.b16 %v657
        %v750 = vunpack.c.h.b16 %v657
        %v751 = vunpack.c.l.b16 %v658
        %v752 = vunpack.c.h.b16 %v658
        %v753 = vunpack.c.l.b16 %v659
        %v754 = vunpack.c.h.b16 %v659
        %v755 = vunpack.c.l.b16 %v660
        %v756 = vunpack.c.h.b16 %v660
        %v757 = vpack.c.b16 %v695, %v693
        %v758 = vpack.c.b16 %v696, %v694
        %v759 = vpack.c.b16 %v699, %v697
        %v760 = vpack.c.b16 %v700, %v698
        %v761 = vpack.c.b16 %v703, %v701
        %v762 = vpack.c.b16 %v704, %v702
        %v763 = vpack.c.b16 %v707, %v705
        %v764 = vpack.c.b16 %v708, %v706
        %v765 = vpack.c.b16 %v711, %v709
        %v766 = vpack.c.b16 %v712, %v710
        %v767 = vpack.c.b16 %v715, %v713
        %v768 = vpack.c.b16 %v716, %v714
        %v769 = vpack.c.b16 %v719, %v717
        %v770 = vpack.c.b16 %v720, %v718
        %v771 = vpack.c.b16 %v723, %v721
        %v772 = vpack.c.b16 %v724, %v722
        %v773 = vpack.c.b16 %v727, %v725
        %v774 = vpack.c.b16 %v728, %v726
        %v775 = vpack.c.b16 %v731, %v729
        %v776 = vpack.c.b16 %v732, %v730
        %v777 = vpack.c.b16 %v735, %v733
        %v778 = vpack.c.b16 %v736, %v734
        %v779 = vpack.c.b16 %v739, %v737
        %v780 = vpack.c.b16 %v740, %v738
        %v781 = vpack.c.b16 %v743, %v741
        %v782 = vpack.c.b16 %v744, %v742
        %v783 = vpack.c.b16 %v747, %v745
        %v784 = vpack.c.b16 %v748, %v746
        %v785 = vpack.c.b16 %v751, %v749
        %v786 = vpack.c.b16 %v752, %v750
        %v787 = vpack.c.b16 %v755, %v753
        %v788 = vpack.c.b16 %v756, %v754
        %821 = vmatprep.subr.bf16.mxu0 %v758
        %822 = vmatpush1.bf16.msra.mxu0 %v757
        %823 = vmatprep.subr.bf16.mxu0 %v760
        %824 = vmatpush1.bf16.msra.mxu0 %v759
        %825 = vmatprep.subr.bf16.mxu0 %v762
        %826 = vmatpush1.bf16.msra.mxu0 %v761
        %827 = vmatprep.subr.bf16.mxu0 %v764
        %828 = vmatpush1.bf16.msra.mxu0 %v763
        %829 = vmatprep.subr.bf16.mxu0 %v766
        %830 = vmatpush1.bf16.msra.mxu0 %v765
        %831 = vmatprep.subr.bf16.mxu0 %v768
        %832 = vmatpush1.bf16.msra.mxu0 %v767
        %833 = vmatprep.subr.bf16.mxu0 %v770
        %834 = vmatpush1.bf16.msra.mxu0 %v769
        %835 = vmatprep.subr.bf16.mxu0 %v772
        %836 = vmatpush1.bf16.msra.mxu0 %v771
        %837 = vmatprep.subr.bf16.mxu0 %v774
        %838 = vmatpush1.bf16.msra.mxu0 %v773
        %839 = vmatprep.subr.bf16.mxu0 %v776
        %840 = vmatpush1.bf16.msra.mxu0 %v775
        %841 = vmatprep.subr.bf16.mxu0 %v778
        %842 = vmatpush1.bf16.msra.mxu0 %v777
        %843 = vmatprep.subr.bf16.mxu0 %v780
        %844 = vmatpush1.bf16.msra.mxu0 %v779
        %845 = vmatprep.subr.bf16.mxu0 %v782
        %846 = vmatpush1.bf16.msra.mxu0 %v781
        %847 = vmatprep.subr.bf16.mxu0 %v784
        %848 = vmatpush1.bf16.msra.mxu0 %v783
        %849 = vmatprep.subr.bf16.mxu0 %v786
        %850 = vmatpush1.bf16.msra.mxu0 %v785
        %851 = vmatprep.subr.bf16.mxu0 %v788
        %852 = vmatpush1.bf16.msra.mxu0 %v787
        %853 = vmatprep.mubr.bf16.mxu0 %v627
        %854 = vmatmul.mubr.bf16.gmra.mrb[0].mxu0 %v626
        %v855 = vpop.f32.mrb[0].mxu0
        %v856 = vadd.f32 0.0, %v855
        %v857 = vpop.f32.mrb[0].mxu0
        %v858 = vadd.f32 0.0, %v857
        %v859 = vpop.f32.mrb[0].mxu0
        %v860 = vpop.f32.mrb[0].mxu0
        %861 = vdwg.mxu0
        %v864 = vcombine.low %v856, %v858
        %v866 = vunpack.c.l.s4 1983009808
        %v867 = vunpack.c.0.s8 %v866
        %v868 = vlaneseq
        %v869 = vshrl.u32 %v868, 7
        %v870 = vsub.s32 %v867, %v869
        %v871 = vrot.slane %v864, %v870
        %v873 = vadd.f32 %v628, %v871
        %874 = vst [vmem:[#allocation2] sm:$0xf] %v873
        // Predicated region
        $region83: #{master_encoder_forward.12} parent=73 // pred_check
          %p875 = pneg %p471
        $region84: #{master_encoder_forward.12} parent=73 // pred_check_branch
          %877 = sbr.rel (%p875) target = $region86
        $region85: #{master_encoder_forward.12} parent=73 // pred_region
          %v878 = vld [vmem:[#allocation2] sm:$0xf]
          %v879 = vld [vmem:[%s460] sm:$0x3]
          %v881 = vlaneseq
          %v882 = vshrl.u32 %v881, 7
          %v883 = vsub.s32 0, %v882
          %v884 = vrot.slane %v879, %v883
          %v885 = vlaneseq
          %v886 = vshrl.u32 %v885, 7
          %v887 = vsub.s32 1, %v886
          %v888 = vrot.slane %v879, %v887
          %v889 = vcombine.low %v884, %v888
          %v891 = vunpack.c.l.s4 1983009808
          %v892 = vunpack.c.0.s8 %v891
          %v893 = vlaneseq
          %v894 = vshrl.u32 %v893, 7
          %v895 = vsub.s32 %v892, %v894
          %v896 = vrot.slane %v889, %v895
          %v898 = vadd.f32 %v878, %v896
          %v901 = vunpack.c.l.s4 1983009808
          %v902 = vunpack.c.0.s8 %v901
          %v903 = vlaneseq
          %v904 = vshrl.u32 %v903, 7
          %v905 = vsub.s32 %v902, %v904
          %v906 = vrot.slane %v898, %v905
          %v907 = vcombine.high %v906, %v906
          %v910 = vpack.c.bf16 %v906, %v906
          %v911 = vpack.c.bf16 %v907, %v907
          %v914 = vcombine.low %v910, %v911
          %v916 = vunpack.c.l.s4 1966171168
          %v917 = vunpack.c.0.s8 %v916
          %v918 = vlaneseq
          %v919 = vshrl.u32 %v918, 7
          %v920 = vsub.s32 %v917, %v919
          %v921 = vrot.slane %v914, %v920
          %v923 = vunpack.c.l.s4 1966171168
          %v924 = vunpack.c.0.s8 %v923
          %v925 = vlaneseq
          %v926 = vshrl.u32 %v925, 7
          %v927 = vsub.s32 %v924, %v926
          %v928 = vrot.slane %v921, %v927
          %930 = vst [vmem:[%s469] sm:$0x3] %v928
        $region86: #{master_encoder_forward.12} parent=73 // pred_fallthru
          _
        %s931 = smul.u32 2, %s22
        %p932 = scmp.lt.s32.totalorder %s21, 0
        %s933 = scalar_select %p932, %s21, 0
        %p934 = scmp.lt.s32.totalorder %s931, 5
        %s935 = scalar_select %p934, %s931, 5
        %s936 = smul.addr %s933, 6
        %s937 = sadd.s32 %s935, %s936
        %s938 = scalar_lea.vmem %s5, %s937
        // Predicated region
        $region87: #{master_encoder_forward.12} parent=73 // pred_check
          %p939 = pneg %p179
        $region88: #{master_encoder_forward.12} parent=73 // pred_check_branch
          %941 = sbr.rel (%p939) target = $region90
        $region89: #{master_encoder_forward.12} parent=73 // pred_region
          %s942 = smul.u32 2, %s22
        $region90: #{master_encoder_forward.12} parent=73 // pred_fallthru
          _
      $region74: #{master_encoder_forward.12} parent=5 // pred_fallthru
        _
      %p943 = scmp.le.s32.totalorder 2, %s11
      // Predicated region
      $region91: #{master_encoder_forward.12} parent=5 // pred_check
        %p944 = pneg %p943
      $region92: #{master_encoder_forward.12} parent=5 // pred_check_branch
        %946 = sbr.rel (%p944) target = $region94
      $region93: #{master_encoder_forward.12} parent=5 // pred_region
        %s947 = ssub.s32 %s11, 2
        // Predicated region
        $region95: #{master_encoder_forward.12} parent=93 // pred_check
          %p948 = pneg %p185
        $region96: #{master_encoder_forward.12} parent=93 // pred_check_branch
          %950 = sbr.rel (%p948) target = $region98
        $region97: #{master_encoder_forward.12} parent=93 // pred_region
          %s951 = smul.u32 2, %s25
          %p952 = scmp.lt.s32.totalorder %s24, 0
          %s953 = scalar_select %p952, %s24, 0
          %p954 = scmp.lt.s32.totalorder %s951, 5
          %s955 = scalar_select %p954, %s951, 5
          %s956 = smul.addr %s953, 6
          %s957 = sadd.s32 %s955, %s956
          %s958 = scalar_lea.vmem %s5, %s957
        $region98: #{master_encoder_forward.12} parent=93 // pred_fallthru
          _
      $region94: #{master_encoder_forward.12} parent=5 // pred_fallthru
        _
    $region6: #{master_encoder_forward.12} parent=1 // loop_footer
      %s15 = sadd.s32 1, %s11
    $region7: #{master_encoder_forward.12} parent=1 // loop_footer_branch
      %10 = sbr.rel target = $region3
    $region8: #{master_encoder_forward.12} parent=1 // loop_exit
      _

</llo_original>
